<compile_context>
chip_gen: v7x
topology: tpu7x:2x2x1
jax: 0.10.0
libtpu: 0.0.40
codegen_flags: <defaults>
</compile_context>

<pallas_src>
import functools

import jax
import jax.numpy as jnp
from jax.experimental import pallas as pl
from jax.experimental.pallas import tpu as pltpu


def _round_up(x, m):
    return ((x + m - 1) // m) * m


def mtl_kernel(x_ref, mask_ref, wtap_ref, bconv_ref, whead_ref, bhead_ref,
               out_ref, h_ref, *, img_h, img_w):
    """One batch element per grid step.

    x_ref    : (1, P + 2*(W+1), C_pad)  flat NHWC image, zero-padded along flat-P axis
    mask_ref : (9, P, 1)                per-tap validity masks (= conv zero padding)
    wtap_ref : (9, C_pad, F_pad)        conv weight, one (C, F) slab per 3x3 tap
    bconv_ref: (1, F_pad)
    whead_ref: (F_pad, NH_pad)          fused [crop | disease] head weight
    bhead_ref: (1, NH_pad)
    out_ref  : (1, 1, NH_pad)
    h_ref    : (P, F_pad) f32 scratch   pre-pool conv activations
    """
    P = img_h * img_w
    p0 = img_w + 1                      # offset of pixel 0 inside the padded flat image

    # 3x3 conv (pad=1) as 9 shifted (P, C) @ (C, F) matmuls accumulated in VMEM (f32).
    for t in range(9):
        oi, oj = t // 3 - 1, t % 3 - 1
        delta = oi * img_w + oj
        xt = x_ref[0, pl.ds(p0 + delta, P), :]          # (P, C_pad) shifted image
        xt = xt * mask_ref[t]                           # zero out-of-image neighbors
        contrib = jnp.dot(xt, wtap_ref[t], preferred_element_type=jnp.float32)
        if t == 0:
            h_ref[...] = contrib
        else:
            h_ref[...] += contrib

    h = jnp.maximum(h_ref[...] + bconv_ref[...], 0.0)          # bias + ReLU
    feat = jnp.sum(h, axis=0, keepdims=True) * (1.0 / P)       # global average pool
    out_ref[0] = (jnp.dot(feat, whead_ref[...],
                          preferred_element_type=jnp.float32)
                  + bhead_ref[...])                             # fused crop|disease heads


def init_params(key, in_channels, n_features, num_crops, num_diseases):
    k1, k2, k3, k4, k5, k6 = jax.random.split(key, 6)
    # backbone conv: PyTorch layout (F, C, 3, 3)
    wconv = 0.1 * jax.random.normal(k1, (n_features, in_channels, 3, 3), jnp.float32)
    bconv = 0.1 * jax.random.normal(k2, (1, n_features), jnp.float32)
    # heads: PyTorch Linear weight is (out, in); store transposed (in, out)
    wcrop = 0.1 * jax.random.normal(k3, (n_features, num_crops), jnp.float32)
    bcrop = 0.1 * jax.random.normal(k4, (1, num_crops), jnp.float32)
    wdis = 0.1 * jax.random.normal(k5, (n_features, num_diseases), jnp.float32)
    bdis = 0.1 * jax.random.normal(k6, (1, num_diseases), jnp.float32)
    return dict(wconv=wconv, bconv=bconv, wcrop=wcrop, bcrop=bcrop,
                wdis=wdis, bdis=bdis)


def multitask_forward(x, params):
    B, C, H, W = x.shape
    P = H * W
    F = params['wconv'].shape[0]
    nc = params['wcrop'].shape[1]
    nd = params['wdis'].shape[1]
    NH = nc + nd

    C_pad = _round_up(C, 8)
    F_pad = _round_up(F, 128)
    NH_pad = _round_up(NH, 128)
    pad_p = W + 1
    P_in = P + 2 * pad_p

    # --- host-side prep (all zero padding is mathematically a no-op) ---
    # flat NHWC image, zero-padded along the flat spatial axis and channels
    x_flat = jnp.transpose(x, (0, 2, 3, 1)).reshape(B, P, C)
    x_flat = jnp.pad(x_flat, ((0, 0), (pad_p, pad_p), (0, C_pad - C)))

    # per-tap validity masks (exactly the conv's zero padding at the image border)
    ii, jj = jnp.meshgrid(jnp.arange(H), jnp.arange(W), indexing='ij')
    ii = ii.reshape(-1)
    jj = jj.reshape(-1)
    masks = []
    for t in range(9):
        oi, oj = t // 3 - 1, t % 3 - 1
        masks.append((ii + oi >= 0) & (ii + oi < H) & (jj + oj >= 0) & (jj + oj < W))
    masks = jnp.stack(masks, axis=0).astype(jnp.float32)[:, :, None]      # (9, P, 1)

    # conv weight (F, C, 3, 3) -> (9, C_pad, F_pad): one (C, F) slab per tap
    wtaps = jnp.transpose(params['wconv'], (2, 3, 1, 0)).reshape(9, C, F)
    wtaps = jnp.pad(wtaps, ((0, 0), (0, C_pad - C), (0, F_pad - F)))
    bconv = jnp.pad(params['bconv'], ((0, 0), (0, F_pad - F)))

    # fuse the two Linear heads into one lane-dense slab
    whead = jnp.concatenate([params['wcrop'], params['wdis']], axis=1)    # (F, NH)
    whead = jnp.pad(whead, ((0, F_pad - F), (0, NH_pad - NH)))
    bhead = jnp.concatenate([params['bcrop'], params['bdis']], axis=1)    # (1, NH)
    bhead = jnp.pad(bhead, ((0, 0), (0, NH_pad - NH)))

    kernel = functools.partial(mtl_kernel, img_h=H, img_w=W)

    out = pl.pallas_call(
        kernel,
        out_shape=jax.ShapeDtypeStruct((B, 1, NH_pad), jnp.float32),
        grid_spec=pltpu.PrefetchScalarGridSpec(
            num_scalar_prefetch=0,
            grid=(B,),
            in_specs=[
                pl.BlockSpec((1, P_in, C_pad), lambda b: (b, 0, 0)),     # flat image
                pl.BlockSpec((9, P, 1), lambda b: (0, 0, 0)),            # tap masks
                pl.BlockSpec((9, C_pad, F_pad), lambda b: (0, 0, 0)),    # conv taps
                pl.BlockSpec((1, F_pad), lambda b: (0, 0)),              # conv bias
                pl.BlockSpec((F_pad, NH_pad), lambda b: (0, 0)),         # fused head W
                pl.BlockSpec((1, NH_pad), lambda b: (0, 0)),             # fused head b
            ],
            out_specs=pl.BlockSpec((1, 1, NH_pad), lambda b: (b, 0, 0)),
            scratch_shapes=[pltpu.VMEM((P, F_pad), jnp.float32)],        # conv activations
        ),
        compiler_params=pltpu.CompilerParams(
            dimension_semantics=("parallel",),
            vmem_limit_bytes=32 * 1024 * 1024,
        ),
    )(x_flat, masks, wtaps, bconv, whead, bhead)

    out = out[:, 0, :]                                                   # (B, NH_pad)
    return out[:, :nc], out[:, nc:NH]


def im2col_3x3(x):
    """x: (B, C, H, W) NCHW -> (B, H*W, C*9), same (pad=1, stride=1) conv patches."""
    B, C, H, W = x.shape
    xp = jnp.pad(x, ((0, 0), (0, 0), (1, 1), (1, 1)))
    cols = []
    for di in range(3):
        for dj in range(3):
            cols.append(xp[:, :, di:di + H, dj:dj + W])                  # (B, C, H, W)
    patches = jnp.stack(cols, axis=2)                                    # (B, C, 9, H, W)
    return patches.transpose(0, 3, 4, 1, 2).reshape(B, H * W, C * 9)


def multitask_forward_ref(x, params):
    """Pure-JAX f32 reference for correctness check."""
    B, C, H, W = x.shape
    F = params['wconv'].shape[0]
    wconv_kf = params['wconv'].reshape(F, C * 9).T                       # (K, F)
    patches = im2col_3x3(x)                                              # (B, P, K)
    h = jnp.maximum(
        jnp.einsum('bpk,kf->bpf', patches, wconv_kf) + params['bconv'][None], 0.0)
    feat = jnp.mean(h, axis=1)
    crop = feat @ params['wcrop'] + params['bcrop']
    dis = feat @ params['wdis'] + params['bdis']
    return crop, dis


if __name__ == "__main__":
    B, C, H, W = 2, 4, 16, 16
    n_features, num_crops, num_diseases = 32, 8, 16

    key = jax.random.PRNGKey(0)
    kx, kp = jax.random.split(key)
    x = jax.random.normal(kx, (B, C, H, W), jnp.float32)
    params = init_params(kp, C, n_features, num_crops, num_diseases)

    crop_out, dis_out = multitask_forward(x, params)
    jax.block_until_ready((crop_out, dis_out))

    crop_ref, dis_ref = multitask_forward_ref(x, params)
    assert crop_out.shape == (B, num_crops) and dis_out.shape == (B, num_diseases)
    assert jnp.allclose(crop_out, crop_ref, atol=2e-2, rtol=2e-2)
    assert jnp.allclose(dis_out, dis_ref, atol=2e-2, rtol=2e-2)

    print("KERNEL_OK")
</pallas_src>

<mosaic_0001>
module attributes {stable_mosaic.version = 11 : i64} {
  func.func @mtl_kernel(%arg0: i32, %arg1: memref<1x290x8xf32, #tpu.memory_space<vmem>>, %arg2: memref<9x256x1xf32, #tpu.memory_space<vmem>>, %arg3: memref<9x8x128xf32, #tpu.memory_space<vmem>>, %arg4: memref<1x128xf32, #tpu.memory_space<vmem>>, %arg5: memref<128x128xf32, #tpu.memory_space<vmem>>, %arg6: memref<1x128xf32, #tpu.memory_space<vmem>>, %arg7: memref<1x1x128xf32, #tpu.memory_space<vmem>>, %arg8: memref<256x128xf32, #tpu.memory_space<vmem>>) attributes {dimension_semantics = [#tpu.dimension_semantics<parallel>], iteration_bounds = array<i64: 2>, scalar_prefetch = 0 : i64, scratch_operands = 1 : i64, tpu.core_type = #tpu.core_type<tc>, window_params = [{transform_indices = @transform_0, window_bounds = array<i64: 1, 290, 8>}, {pipeline_mode = #tpu.pipeline_mode<synchronous>, transform_indices = @transform_1, window_bounds = array<i64: 9, 256, 1>}, {pipeline_mode = #tpu.pipeline_mode<synchronous>, transform_indices = @transform_2, window_bounds = array<i64: 9, 8, 128>}, {pipeline_mode = #tpu.pipeline_mode<synchronous>, transform_indices = @transform_3, window_bounds = array<i64: 1, 128>}, {pipeline_mode = #tpu.pipeline_mode<synchronous>, transform_indices = @transform_4, window_bounds = array<i64: 128, 128>}, {pipeline_mode = #tpu.pipeline_mode<synchronous>, transform_indices = @transform_5, window_bounds = array<i64: 1, 128>}, {transform_indices = @transform_6, window_bounds = array<i64: 1, 1, 128>}]} {
    %c0 = arith.constant 0 : index
    %c0_0 = arith.constant 0 : index
    %c0_1 = arith.constant 0 : index
    %0 = vector.load %arg1[%c0, %c0_0, %c0_1] : memref<1x290x8xf32, #tpu.memory_space<vmem>>, vector<1x256x8xf32>
    %1 = vector.shape_cast %0 : vector<1x256x8xf32> to vector<256x8xf32>
    %c0_2 = arith.constant 0 : index
    %c0_3 = arith.constant 0 : index
    %c0_4 = arith.constant 0 : index
    %2 = vector.load %arg2[%c0_2, %c0_3, %c0_4] : memref<9x256x1xf32, #tpu.memory_space<vmem>>, vector<1x256x1xf32>
    %3 = vector.shape_cast %2 : vector<1x256x1xf32> to vector<256x1xf32>
    %4 = vector.broadcast %3 : vector<256x1xf32> to vector<256x8xf32>
    %5 = arith.mulf %1, %4 : vector<256x8xf32>
    %c0_5 = arith.constant 0 : index
    %c0_6 = arith.constant 0 : index
    %c0_7 = arith.constant 0 : index
    %6 = vector.load %arg3[%c0_5, %c0_6, %c0_7] : memref<9x8x128xf32, #tpu.memory_space<vmem>>, vector<1x8x128xf32>
    %7 = vector.shape_cast %6 : vector<1x8x128xf32> to vector<8x128xf32>
    %cst = arith.constant dense<0.000000e+00> : vector<256x128xf32>
    %8 = tpu.matmul %5, %7, %cst {dimension_numbers = #tpu.dot_dimension_numbers<[1], [0], [0], [1], [0, 0, 1, 1], [], []>} : vector<256x8xf32>, vector<8x128xf32>, vector<256x128xf32> -> vector<256x128xf32>
    %c0_8 = arith.constant 0 : index
    %c0_9 = arith.constant 0 : index
    %9 = vector.load %arg8[%c0_8, %c0_9] : memref<256x128xf32, #tpu.memory_space<vmem>>, vector<256x128xf32>
    tpu.vector_store %arg8[%c0_8, %c0_9], %8 {strides = array<i32>} : memref<256x128xf32, #tpu.memory_space<vmem>>, vector<256x128xf32>,
    %c0_10 = arith.constant 0 : index
    %c1 = arith.constant 1 : index
    %c0_11 = arith.constant 0 : index
    %10 = vector.load %arg1[%c0_10, %c1, %c0_11] : memref<1x290x8xf32, #tpu.memory_space<vmem>>, vector<1x256x8xf32>
    %11 = vector.shape_cast %10 : vector<1x256x8xf32> to vector<256x8xf32>
    %c1_12 = arith.constant 1 : index
    %c0_13 = arith.constant 0 : index
    %c0_14 = arith.constant 0 : index
    %12 = vector.load %arg2[%c1_12, %c0_13, %c0_14] : memref<9x256x1xf32, #tpu.memory_space<vmem>>, vector<1x256x1xf32>
    %13 = vector.shape_cast %12 : vector<1x256x1xf32> to vector<256x1xf32>
    %14 = vector.broadcast %13 : vector<256x1xf32> to vector<256x8xf32>
    %15 = arith.mulf %11, %14 : vector<256x8xf32>
    %c1_15 = arith.constant 1 : index
    %c0_16 = arith.constant 0 : index
    %c0_17 = arith.constant 0 : index
    %16 = vector.load %arg3[%c1_15, %c0_16, %c0_17] : memref<9x8x128xf32, #tpu.memory_space<vmem>>, vector<1x8x128xf32>
    %17 = vector.shape_cast %16 : vector<1x8x128xf32> to vector<8x128xf32>
    %cst_18 = arith.constant dense<0.000000e+00> : vector<256x128xf32>
    %18 = tpu.matmul %15, %17, %cst_18 {dimension_numbers = #tpu.dot_dimension_numbers<[1], [0], [0], [1], [0, 0, 1, 1], [], []>} : vector<256x8xf32>, vector<8x128xf32>, vector<256x128xf32> -> vector<256x128xf32>
    %c0_19 = arith.constant 0 : index
    %c0_20 = arith.constant 0 : index
    %19 = vector.load %arg8[%c0_19, %c0_20] : memref<256x128xf32, #tpu.memory_space<vmem>>, vector<256x128xf32>
    %20 = arith.addf %19, %18 : vector<256x128xf32>
    %c0_21 = arith.constant 0 : index
    %c0_22 = arith.constant 0 : index
    %21 = vector.load %arg8[%c0_21, %c0_22] : memref<256x128xf32, #tpu.memory_space<vmem>>, vector<256x128xf32>
    tpu.vector_store %arg8[%c0_21, %c0_22], %20 {strides = array<i32>} : memref<256x128xf32, #tpu.memory_space<vmem>>, vector<256x128xf32>,
    %c0_23 = arith.constant 0 : index
    %c2 = arith.constant 2 : index
    %c0_24 = arith.constant 0 : index
    %22 = vector.load %arg1[%c0_23, %c2, %c0_24] : memref<1x290x8xf32, #tpu.memory_space<vmem>>, vector<1x256x8xf32>
    %23 = vector.shape_cast %22 : vector<1x256x8xf32> to vector<256x8xf32>
    %c2_25 = arith.constant 2 : index
    %c0_26 = arith.constant 0 : index
    %c0_27 = arith.constant 0 : index
    %24 = vector.load %arg2[%c2_25, %c0_26, %c0_27] : memref<9x256x1xf32, #tpu.memory_space<vmem>>, vector<1x256x1xf32>
    %25 = vector.shape_cast %24 : vector<1x256x1xf32> to vector<256x1xf32>
    %26 = vector.broadcast %25 : vector<256x1xf32> to vector<256x8xf32>
    %27 = arith.mulf %23, %26 : vector<256x8xf32>
    %c2_28 = arith.constant 2 : index
    %c0_29 = arith.constant 0 : index
    %c0_30 = arith.constant 0 : index
    %28 = vector.load %arg3[%c2_28, %c0_29, %c0_30] : memref<9x8x128xf32, #tpu.memory_space<vmem>>, vector<1x8x128xf32>
    %29 = vector.shape_cast %28 : vector<1x8x128xf32> to vector<8x128xf32>
    %cst_31 = arith.constant dense<0.000000e+00> : vector<256x128xf32>
    %30 = tpu.matmul %27, %29, %cst_31 {dimension_numbers = #tpu.dot_dimension_numbers<[1], [0], [0], [1], [0, 0, 1, 1], [], []>} : vector<256x8xf32>, vector<8x128xf32>, vector<256x128xf32> -> vector<256x128xf32>
    %c0_32 = arith.constant 0 : index
    %c0_33 = arith.constant 0 : index
    %31 = vector.load %arg8[%c0_32, %c0_33] : memref<256x128xf32, #tpu.memory_space<vmem>>, vector<256x128xf32>
    %32 = arith.addf %31, %30 : vector<256x128xf32>
    %c0_34 = arith.constant 0 : index
    %c0_35 = arith.constant 0 : index
    %33 = vector.load %arg8[%c0_34, %c0_35] : memref<256x128xf32, #tpu.memory_space<vmem>>, vector<256x128xf32>
    tpu.vector_store %arg8[%c0_34, %c0_35], %32 {strides = array<i32>} : memref<256x128xf32, #tpu.memory_space<vmem>>, vector<256x128xf32>,
    %c0_36 = arith.constant 0 : index
    %c16 = arith.constant 16 : index
    %c0_37 = arith.constant 0 : index
    %34 = vector.load %arg1[%c0_36, %c16, %c0_37] : memref<1x290x8xf32, #tpu.memory_space<vmem>>, vector<1x256x8xf32>
    %35 = vector.shape_cast %34 : vector<1x256x8xf32> to vector<256x8xf32>
    %c3 = arith.constant 3 : index
    %c0_38 = arith.constant 0 : index
    %c0_39 = arith.constant 0 : index
    %36 = vector.load %arg2[%c3, %c0_38, %c0_39] : memref<9x256x1xf32, #tpu.memory_space<vmem>>, vector<1x256x1xf32>
    %37 = vector.shape_cast %36 : vector<1x256x1xf32> to vector<256x1xf32>
    %38 = vector.broadcast %37 : vector<256x1xf32> to vector<256x8xf32>
    %39 = arith.mulf %35, %38 : vector<256x8xf32>
    %c3_40 = arith.constant 3 : index
    %c0_41 = arith.constant 0 : index
    %c0_42 = arith.constant 0 : index
    %40 = vector.load %arg3[%c3_40, %c0_41, %c0_42] : memref<9x8x128xf32, #tpu.memory_space<vmem>>, vector<1x8x128xf32>
    %41 = vector.shape_cast %40 : vector<1x8x128xf32> to vector<8x128xf32>
    %cst_43 = arith.constant dense<0.000000e+00> : vector<256x128xf32>
    %42 = tpu.matmul %39, %41, %cst_43 {dimension_numbers = #tpu.dot_dimension_numbers<[1], [0], [0], [1], [0, 0, 1, 1], [], []>} : vector<256x8xf32>, vector<8x128xf32>, vector<256x128xf32> -> vector<256x128xf32>
    %c0_44 = arith.constant 0 : index
    %c0_45 = arith.constant 0 : index
    %43 = vector.load %arg8[%c0_44, %c0_45] : memref<256x128xf32, #tpu.memory_space<vmem>>, vector<256x128xf32>
    %44 = arith.addf %43, %42 : vector<256x128xf32>
    %c0_46 = arith.constant 0 : index
    %c0_47 = arith.constant 0 : index
    %45 = vector.load %arg8[%c0_46, %c0_47] : memref<256x128xf32, #tpu.memory_space<vmem>>, vector<256x128xf32>
    tpu.vector_store %arg8[%c0_46, %c0_47], %44 {strides = array<i32>} : memref<256x128xf32, #tpu.memory_space<vmem>>, vector<256x128xf32>,
    %c0_48 = arith.constant 0 : index
    %c17 = arith.constant 17 : index
    %c0_49 = arith.constant 0 : index
    %46 = vector.load %arg1[%c0_48, %c17, %c0_49] : memref<1x290x8xf32, #tpu.memory_space<vmem>>, vector<1x256x8xf32>
    %47 = vector.shape_cast %46 : vector<1x256x8xf32> to vector<256x8xf32>
    %c4 = arith.constant 4 : index
    %c0_50 = arith.constant 0 : index
    %c0_51 = arith.constant 0 : index
    %48 = vector.load %arg2[%c4, %c0_50, %c0_51] : memref<9x256x1xf32, #tpu.memory_space<vmem>>, vector<1x256x1xf32>
    %49 = vector.shape_cast %48 : vector<1x256x1xf32> to vector<256x1xf32>
    %50 = vector.broadcast %49 : vector<256x1xf32> to vector<256x8xf32>
    %51 = arith.mulf %47, %50 : vector<256x8xf32>
    %c4_52 = arith.constant 4 : index
    %c0_53 = arith.constant 0 : index
    %c0_54 = arith.constant 0 : index
    %52 = vector.load %arg3[%c4_52, %c0_53, %c0_54] : memref<9x8x128xf32, #tpu.memory_space<vmem>>, vector<1x8x128xf32>
    %53 = vector.shape_cast %52 : vector<1x8x128xf32> to vector<8x128xf32>
    %cst_55 = arith.constant dense<0.000000e+00> : vector<256x128xf32>
    %54 = tpu.matmul %51, %53, %cst_55 {dimension_numbers = #tpu.dot_dimension_numbers<[1], [0], [0], [1], [0, 0, 1, 1], [], []>} : vector<256x8xf32>, vector<8x128xf32>, vector<256x128xf32> -> vector<256x128xf32>
    %c0_56 = arith.constant 0 : index
    %c0_57 = arith.constant 0 : index
    %55 = vector.load %arg8[%c0_56, %c0_57] : memref<256x128xf32, #tpu.memory_space<vmem>>, vector<256x128xf32>
    %56 = arith.addf %55, %54 : vector<256x128xf32>
    %c0_58 = arith.constant 0 : index
    %c0_59 = arith.constant 0 : index
    %57 = vector.load %arg8[%c0_58, %c0_59] : memref<256x128xf32, #tpu.memory_space<vmem>>, vector<256x128xf32>
    tpu.vector_store %arg8[%c0_58, %c0_59], %56 {strides = array<i32>} : memref<256x128xf32, #tpu.memory_space<vmem>>, vector<256x128xf32>,
    %c0_60 = arith.constant 0 : index
    %c18 = arith.constant 18 : index
    %c0_61 = arith.constant 0 : index
    %58 = vector.load %arg1[%c0_60, %c18, %c0_61] : memref<1x290x8xf32, #tpu.memory_space<vmem>>, vector<1x256x8xf32>
    %59 = vector.shape_cast %58 : vector<1x256x8xf32> to vector<256x8xf32>
    %c5 = arith.constant 5 : index
    %c0_62 = arith.constant 0 : index
    %c0_63 = arith.constant 0 : index
    %60 = vector.load %arg2[%c5, %c0_62, %c0_63] : memref<9x256x1xf32, #tpu.memory_space<vmem>>, vector<1x256x1xf32>
    %61 = vector.shape_cast %60 : vector<1x256x1xf32> to vector<256x1xf32>
    %62 = vector.broadcast %61 : vector<256x1xf32> to vector<256x8xf32>
    %63 = arith.mulf %59, %62 : vector<256x8xf32>
    %c5_64 = arith.constant 5 : index
    %c0_65 = arith.constant 0 : index
    %c0_66 = arith.constant 0 : index
    %64 = vector.load %arg3[%c5_64, %c0_65, %c0_66] : memref<9x8x128xf32, #tpu.memory_space<vmem>>, vector<1x8x128xf32>
    %65 = vector.shape_cast %64 : vector<1x8x128xf32> to vector<8x128xf32>
    %cst_67 = arith.constant dense<0.000000e+00> : vector<256x128xf32>
    %66 = tpu.matmul %63, %65, %cst_67 {dimension_numbers = #tpu.dot_dimension_numbers<[1], [0], [0], [1], [0, 0, 1, 1], [], []>} : vector<256x8xf32>, vector<8x128xf32>, vector<256x128xf32> -> vector<256x128xf32>
    %c0_68 = arith.constant 0 : index
    %c0_69 = arith.constant 0 : index
    %67 = vector.load %arg8[%c0_68, %c0_69] : memref<256x128xf32, #tpu.memory_space<vmem>>, vector<256x128xf32>
    %68 = arith.addf %67, %66 : vector<256x128xf32>
    %c0_70 = arith.constant 0 : index
    %c0_71 = arith.constant 0 : index
    %69 = vector.load %arg8[%c0_70, %c0_71] : memref<256x128xf32, #tpu.memory_space<vmem>>, vector<256x128xf32>
    tpu.vector_store %arg8[%c0_70, %c0_71], %68 {strides = array<i32>} : memref<256x128xf32, #tpu.memory_space<vmem>>, vector<256x128xf32>,
    %c0_72 = arith.constant 0 : index
    %c32 = arith.constant 32 : index
    %c0_73 = arith.constant 0 : index
    %70 = vector.load %arg1[%c0_72, %c32, %c0_73] : memref<1x290x8xf32, #tpu.memory_space<vmem>>, vector<1x256x8xf32>
    %71 = vector.shape_cast %70 : vector<1x256x8xf32> to vector<256x8xf32>
    %c6 = arith.constant 6 : index
    %c0_74 = arith.constant 0 : index
    %c0_75 = arith.constant 0 : index
    %72 = vector.load %arg2[%c6, %c0_74, %c0_75] : memref<9x256x1xf32, #tpu.memory_space<vmem>>, vector<1x256x1xf32>
    %73 = vector.shape_cast %72 : vector<1x256x1xf32> to vector<256x1xf32>
    %74 = vector.broadcast %73 : vector<256x1xf32> to vector<256x8xf32>
    %75 = arith.mulf %71, %74 : vector<256x8xf32>
    %c6_76 = arith.constant 6 : index
    %c0_77 = arith.constant 0 : index
    %c0_78 = arith.constant 0 : index
    %76 = vector.load %arg3[%c6_76, %c0_77, %c0_78] : memref<9x8x128xf32, #tpu.memory_space<vmem>>, vector<1x8x128xf32>
    %77 = vector.shape_cast %76 : vector<1x8x128xf32> to vector<8x128xf32>
    %cst_79 = arith.constant dense<0.000000e+00> : vector<256x128xf32>
    %78 = tpu.matmul %75, %77, %cst_79 {dimension_numbers = #tpu.dot_dimension_numbers<[1], [0], [0], [1], [0, 0, 1, 1], [], []>} : vector<256x8xf32>, vector<8x128xf32>, vector<256x128xf32> -> vector<256x128xf32>
    %c0_80 = arith.constant 0 : index
    %c0_81 = arith.constant 0 : index
    %79 = vector.load %arg8[%c0_80, %c0_81] : memref<256x128xf32, #tpu.memory_space<vmem>>, vector<256x128xf32>
    %80 = arith.addf %79, %78 : vector<256x128xf32>
    %c0_82 = arith.constant 0 : index
    %c0_83 = arith.constant 0 : index
    %81 = vector.load %arg8[%c0_82, %c0_83] : memref<256x128xf32, #tpu.memory_space<vmem>>, vector<256x128xf32>
    tpu.vector_store %arg8[%c0_82, %c0_83], %80 {strides = array<i32>} : memref<256x128xf32, #tpu.memory_space<vmem>>, vector<256x128xf32>,
    %c0_84 = arith.constant 0 : index
    %c33 = arith.constant 33 : index
    %c0_85 = arith.constant 0 : index
    %82 = vector.load %arg1[%c0_84, %c33, %c0_85] : memref<1x290x8xf32, #tpu.memory_space<vmem>>, vector<1x256x8xf32>
    %83 = vector.shape_cast %82 : vector<1x256x8xf32> to vector<256x8xf32>
    %c7 = arith.constant 7 : index
    %c0_86 = arith.constant 0 : index
    %c0_87 = arith.constant 0 : index
    %84 = vector.load %arg2[%c7, %c0_86, %c0_87] : memref<9x256x1xf32, #tpu.memory_space<vmem>>, vector<1x256x1xf32>
    %85 = vector.shape_cast %84 : vector<1x256x1xf32> to vector<256x1xf32>
    %86 = vector.broadcast %85 : vector<256x1xf32> to vector<256x8xf32>
    %87 = arith.mulf %83, %86 : vector<256x8xf32>
    %c7_88 = arith.constant 7 : index
    %c0_89 = arith.constant 0 : index
    %c0_90 = arith.constant 0 : index
    %88 = vector.load %arg3[%c7_88, %c0_89, %c0_90] : memref<9x8x128xf32, #tpu.memory_space<vmem>>, vector<1x8x128xf32>
    %89 = vector.shape_cast %88 : vector<1x8x128xf32> to vector<8x128xf32>
    %cst_91 = arith.constant dense<0.000000e+00> : vector<256x128xf32>
    %90 = tpu.matmul %87, %89, %cst_91 {dimension_numbers = #tpu.dot_dimension_numbers<[1], [0], [0], [1], [0, 0, 1, 1], [], []>} : vector<256x8xf32>, vector<8x128xf32>, vector<256x128xf32> -> vector<256x128xf32>
    %c0_92 = arith.constant 0 : index
    %c0_93 = arith.constant 0 : index
    %91 = vector.load %arg8[%c0_92, %c0_93] : memref<256x128xf32, #tpu.memory_space<vmem>>, vector<256x128xf32>
    %92 = arith.addf %91, %90 : vector<256x128xf32>
    %c0_94 = arith.constant 0 : index
    %c0_95 = arith.constant 0 : index
    %93 = vector.load %arg8[%c0_94, %c0_95] : memref<256x128xf32, #tpu.memory_space<vmem>>, vector<256x128xf32>
    tpu.vector_store %arg8[%c0_94, %c0_95], %92 {strides = array<i32>} : memref<256x128xf32, #tpu.memory_space<vmem>>, vector<256x128xf32>,
    %c0_96 = arith.constant 0 : index
    %c34 = arith.constant 34 : index
    %c0_97 = arith.constant 0 : index
    %94 = vector.load %arg1[%c0_96, %c34, %c0_97] : memref<1x290x8xf32, #tpu.memory_space<vmem>>, vector<1x256x8xf32>
    %95 = vector.shape_cast %94 : vector<1x256x8xf32> to vector<256x8xf32>
    %c8 = arith.constant 8 : index
    %c0_98 = arith.constant 0 : index
    %c0_99 = arith.constant 0 : index
    %96 = vector.load %arg2[%c8, %c0_98, %c0_99] : memref<9x256x1xf32, #tpu.memory_space<vmem>>, vector<1x256x1xf32>
    %97 = vector.shape_cast %96 : vector<1x256x1xf32> to vector<256x1xf32>
    %98 = vector.broadcast %97 : vector<256x1xf32> to vector<256x8xf32>
    %99 = arith.mulf %95, %98 : vector<256x8xf32>
    %c8_100 = arith.constant 8 : index
    %c0_101 = arith.constant 0 : index
    %c0_102 = arith.constant 0 : index
    %100 = vector.load %arg3[%c8_100, %c0_101, %c0_102] : memref<9x8x128xf32, #tpu.memory_space<vmem>>, vector<1x8x128xf32>
    %101 = vector.shape_cast %100 : vector<1x8x128xf32> to vector<8x128xf32>
    %cst_103 = arith.constant dense<0.000000e+00> : vector<256x128xf32>
    %102 = tpu.matmul %99, %101, %cst_103 {dimension_numbers = #tpu.dot_dimension_numbers<[1], [0], [0], [1], [0, 0, 1, 1], [], []>} : vector<256x8xf32>, vector<8x128xf32>, vector<256x128xf32> -> vector<256x128xf32>
    %c0_104 = arith.constant 0 : index
    %c0_105 = arith.constant 0 : index
    %103 = vector.load %arg8[%c0_104, %c0_105] : memref<256x128xf32, #tpu.memory_space<vmem>>, vector<256x128xf32>
    %104 = arith.addf %103, %102 : vector<256x128xf32>
    %c0_106 = arith.constant 0 : index
    %c0_107 = arith.constant 0 : index
    %105 = vector.load %arg8[%c0_106, %c0_107] : memref<256x128xf32, #tpu.memory_space<vmem>>, vector<256x128xf32>
    tpu.vector_store %arg8[%c0_106, %c0_107], %104 {strides = array<i32>} : memref<256x128xf32, #tpu.memory_space<vmem>>, vector<256x128xf32>,
    %c0_108 = arith.constant 0 : index
    %c0_109 = arith.constant 0 : index
    %106 = vector.load %arg8[%c0_108, %c0_109] : memref<256x128xf32, #tpu.memory_space<vmem>>, vector<256x128xf32>
    %c0_110 = arith.constant 0 : index
    %c0_111 = arith.constant 0 : index
    %107 = vector.load %arg4[%c0_110, %c0_111] : memref<1x128xf32, #tpu.memory_space<vmem>>, vector<1x128xf32>
    %108 = vector.broadcast %107 : vector<1x128xf32> to vector<256x128xf32>
    %109 = arith.addf %106, %108 : vector<256x128xf32>
    %cst_112 = arith.constant 0.000000e+00 : f32
    %110 = vector.broadcast %cst_112 : f32 to vector<256x128xf32>
    %111 = arith.maximumf %109, %110 : vector<256x128xf32>
    %cst_113 = arith.constant dense<0.000000e+00> : vector<128xf32>
    %112 = vector.multi_reduction <add>, %111, %cst_113 [0] : vector<256x128xf32> to vector<128xf32>
    %113 = vector.shape_cast %112 : vector<128xf32> to vector<1x128xf32>
    %cst_114 = arith.constant 3.906250e-03 : f32
    %114 = vector.broadcast %cst_114 : f32 to vector<1x128xf32>
    %115 = arith.mulf %113, %114 : vector<1x128xf32>
    %c0_115 = arith.constant 0 : index
    %c0_116 = arith.constant 0 : index
    %116 = vector.load %arg5[%c0_115, %c0_116] : memref<128x128xf32, #tpu.memory_space<vmem>>, vector<128x128xf32>
    %cst_117 = arith.constant dense<0.000000e+00> : vector<1x128xf32>
    %117 = tpu.matmul %115, %116, %cst_117 {dimension_numbers = #tpu.dot_dimension_numbers<[1], [0], [0], [1], [0, 0, 1, 1], [], []>} : vector<1x128xf32>, vector<128x128xf32>, vector<1x128xf32> -> vector<1x128xf32>
    %c0_118 = arith.constant 0 : index
    %c0_119 = arith.constant 0 : index
    %118 = vector.load %arg6[%c0_118, %c0_119] : memref<1x128xf32, #tpu.memory_space<vmem>>, vector<1x128xf32>
    %119 = arith.addf %117, %118 : vector<1x128xf32>
    %c0_120 = arith.constant 0 : index
    %c0_121 = arith.constant 0 : index
    %c0_122 = arith.constant 0 : index
    %120 = vector.load %arg7[%c0_120, %c0_121, %c0_122] : memref<1x1x128xf32, #tpu.memory_space<vmem>>, vector<1x1x128xf32>
    %121 = vector.shape_cast %120 : vector<1x1x128xf32> to vector<1x128xf32>
    %122 = vector.shape_cast %119 : vector<1x128xf32> to vector<1x1x128xf32>
    tpu.vector_store %arg7[%c0_120, %c0_121, %c0_122], %122 {strides = array<i32>} : memref<1x1x128xf32, #tpu.memory_space<vmem>>, vector<1x1x128xf32>,
    return
  }
  func.func @transform_0(%arg0: i32) -> (i32, i32, i32) {
    %c0_i32 = arith.constant 0 : i32
    %c0_i32_0 = arith.constant 0 : i32
    %c0_i32_1 = arith.constant 0 : i32
    return %arg0, %c0_i32, %c0_i32_0 : i32, i32, i32
  }
  func.func @transform_1(%arg0: i32) -> (i32, i32, i32) {
    %c0_i32 = arith.constant 0 : i32
    %c0_i32_0 = arith.constant 0 : i32
    %c0_i32_1 = arith.constant 0 : i32
    %c0_i32_2 = arith.constant 0 : i32
    return %c0_i32, %c0_i32_0, %c0_i32_1 : i32, i32, i32
  }
  func.func @transform_2(%arg0: i32) -> (i32, i32, i32) {
    %c0_i32 = arith.constant 0 : i32
    %c0_i32_0 = arith.constant 0 : i32
    %c0_i32_1 = arith.constant 0 : i32
    %c0_i32_2 = arith.constant 0 : i32
    return %c0_i32, %c0_i32_0, %c0_i32_1 : i32, i32, i32
  }
  func.func @transform_3(%arg0: i32) -> (i32, i32) {
    %c0_i32 = arith.constant 0 : i32
    %c0_i32_0 = arith.constant 0 : i32
    %c0_i32_1 = arith.constant 0 : i32
    return %c0_i32, %c0_i32_0 : i32, i32
  }
  func.func @transform_4(%arg0: i32) -> (i32, i32) {
    %c0_i32 = arith.constant 0 : i32
    %c0_i32_0 = arith.constant 0 : i32
    %c0_i32_1 = arith.constant 0 : i32
    return %c0_i32, %c0_i32_0 : i32, i32
  }
  func.func @transform_5(%arg0: i32) -> (i32, i32) {
    %c0_i32 = arith.constant 0 : i32
    %c0_i32_0 = arith.constant 0 : i32
    %c0_i32_1 = arith.constant 0 : i32
    return %c0_i32, %c0_i32_0 : i32, i32
  }
  func.func @transform_6(%arg0: i32) -> (i32, i32, i32) {
    %c0_i32 = arith.constant 0 : i32
    %c0_i32_0 = arith.constant 0 : i32
    %c0_i32_1 = arith.constant 0 : i32
    return %arg0, %c0_i32, %c0_i32_0 : i32, i32, i32
  }
}

</mosaic_0001>

<llo_original>
// kernel: tpu_custom_call.1
$region0: #{tpu_custom_call.1}
  #allocation0 [shape = 'u32[]', space=smem, size = 0x4, offset = 0x4, fixed_abs, tag = 'smem constant byte address 0x4 - core index']
  #allocation1 [shape = 'u32[144,128]{1,0:T(1,128)}', space=vmem, size = 0x12000, scoped, tag = 'internal scratch']
  #allocation2 [shape = 'f32[256,128]{1,0:T(8,128)}', space=vmem, size = 0x20000, scoped, tag = 'scratch operand']
  %s0 = inlined_call_operand.vmem [shape: f32[2,290,8], index: 0, kind: input, shape index: {}]
  %s1 = inlined_call_operand.vmem [shape: f32[9,256,1], index: 1, kind: input, shape index: {}]
  %s2 = inlined_call_operand.vmem [shape: f32[9,8,128], index: 2, kind: input, shape index: {}]
  %s3 = inlined_call_operand.vmem [shape: f32[1,128], index: 3, kind: input, shape index: {}]
  %s4 = inlined_call_operand.vmem [shape: f32[128,128], index: 4, kind: input, shape index: {}]
  %s5 = inlined_call_operand.vmem [shape: f32[1,128], index: 5, kind: input, shape index: {}]
  %s6 = inlined_call_operand.hbm [shape: f32[2,1,128], index: 6, kind: output, shape index: {}]
  %s7 = sld [smem:[#allocation0]]
  $region57: #{tpu_custom_call.1} parent=0
    _
  %s9 = ssub.s32 1, %s7
  %s10 = scalar_select 0, %s9, %s7
  $region1: #{tpu_custom_call.1} parent=0
    #allocation3 [shape = 'u8[1024]{0}', space=vmem, size = 0x400, scoped, tag = 'output window, operand 0']
    #allocation4 [shape = 's32[2]{0}', space=sflag, size = 0x8, scoped, tag = 'scoped memory for tpu_custom_call.1']
    %11 = vsyncpa [#allocation4], 0
    %s12 = scalar_lea.sflag [#allocation4], 1
    %13 = vsyncpa %s12, 0
    loop: start=0, step=1, limit=4
    $region2: #{tpu_custom_call.1} parent=1 // loop_pre_header
      _
    $region3: #{tpu_custom_call.1} parent=1 // loop_header
      %s15 = sphi 0, %s19
      %p16 = scmp.ge.s32.totalorder %s15, 4
      %s25 = sphi 0, %s27
      %s28 = sphi 0, %s25
      %s29 = sphi 0, %s28
      %s45 = sphi 0, %s29
      %s49 = sphi 0, %s49
      %s51 = sphi 0, %s49
      %s52 = sphi 0, %s51
      %s66 = sphi 0, %s52
      %s70 = sphi 0, %s70
      %s72 = sphi 0, %s70
      %s73 = sphi 0, %s72
      %s87 = sphi 0, %s73
      %s91 = sphi 0, %s91
      %s93 = sphi 0, %s91
      %s94 = sphi 0, %s93
      %s108 = sphi 0, %s94
      %s112 = sphi 0, %s112
      %s114 = sphi 0, %s112
      %s115 = sphi 0, %s114
      %s129 = sphi 0, %s115
      %s133 = sphi 0, %s133
      %s135 = sphi 0, %s133
      %s136 = sphi 0, %s135
      %s150 = sphi 0, %s136
      %s156 = sphi 0, %s158
      %s159 = sphi 0, %s156
      %s160 = sphi 0, %s159
      %s176 = sphi 0, %s160
    $region4: #{tpu_custom_call.1} parent=1 // loop_header_branch
      %18 = sbr.rel (%p16) target = $region8
    $region5: #{tpu_custom_call.1} parent=1 // loop_body
      %s20 = ssub.s32 %s15, 1
      %s21 = ssub.s32 %s15, 2
      %s22 = sadd.s32 %s15, 1
      %s23 = ssub.s32 %s15, %s22
      %p24 = scmp.eq.s32.totalorder %s23, 0
      %s26 = sadd.s32 %s25, 1
      %s27 = scalar_select %p24, %s25, %s26
      %p30 = pneg %p24
      %p31 = scmp.eq.s32.totalorder %s15, 1
      %p32 = por %p30, %p31
      %p33 = scmp.ne.s32.totalorder %s25, %s28
      %p34 = scmp.eq.s32.totalorder %s15, 0
      %p35 = por %p33, %p34
      %p36 = scmp.ne.s32.totalorder %s25, %s28
      %p37 = scmp.eq.s32.totalorder %s20, 1
      %p38 = por %p36, %p37
      %p39 = scmp.ne.s32.totalorder %s28, %s29
      %p40 = scmp.eq.s32.totalorder %s20, 0
      %p41 = por %p39, %p40
      %p42 = scmp.ne.s32.totalorder %s28, %s29
      %p43 = scmp.eq.s32.totalorder %s21, 1
      %p44 = por %p42, %p43
      %p46 = scmp.ne.s32.totalorder %s29, %s45
      %p47 = scmp.eq.s32.totalorder %s21, 0
      %p48 = por %p46, %p47
      %s50 = sadd.s32 %s49, 1
      %p53 = scmp.eq.s32.totalorder %s15, 1
      %p54 = scmp.ne.s32.totalorder %s49, %s51
      %p55 = scmp.eq.s32.totalorder %s15, 0
      %p56 = por %p54, %p55
      %p57 = scmp.ne.s32.totalorder %s49, %s51
      %p58 = scmp.eq.s32.totalorder %s20, 1
      %p59 = por %p57, %p58
      %p60 = scmp.ne.s32.totalorder %s51, %s52
      %p61 = scmp.eq.s32.totalorder %s20, 0
      %p62 = por %p60, %p61
      %p63 = scmp.ne.s32.totalorder %s51, %s52
      %p64 = scmp.eq.s32.totalorder %s21, 1
      %p65 = por %p63, %p64
      %p67 = scmp.ne.s32.totalorder %s52, %s66
      %p68 = scmp.eq.s32.totalorder %s21, 0
      %p69 = por %p67, %p68
      %s71 = sadd.s32 %s70, 1
      %p74 = scmp.eq.s32.totalorder %s15, 1
      %p75 = scmp.ne.s32.totalorder %s70, %s72
      %p76 = scmp.eq.s32.totalorder %s15, 0
      %p77 = por %p75, %p76
      %p78 = scmp.ne.s32.totalorder %s70, %s72
      %p79 = scmp.eq.s32.totalorder %s20, 1
      %p80 = por %p78, %p79
      %p81 = scmp.ne.s32.totalorder %s72, %s73
      %p82 = scmp.eq.s32.totalorder %s20, 0
      %p83 = por %p81, %p82
      %p84 = scmp.ne.s32.totalorder %s72, %s73
      %p85 = scmp.eq.s32.totalorder %s21, 1
      %p86 = por %p84, %p85
      %p88 = scmp.ne.s32.totalorder %s73, %s87
      %p89 = scmp.eq.s32.totalorder %s21, 0
      %p90 = por %p88, %p89
      %s92 = sadd.s32 %s91, 1
      %p95 = scmp.eq.s32.totalorder %s15, 1
      %p96 = scmp.ne.s32.totalorder %s91, %s93
      %p97 = scmp.eq.s32.totalorder %s15, 0
      %p98 = por %p96, %p97
      %p99 = scmp.ne.s32.totalorder %s91, %s93
      %p100 = scmp.eq.s32.totalorder %s20, 1
      %p101 = por %p99, %p100
      %p102 = scmp.ne.s32.totalorder %s93, %s94
      %p103 = scmp.eq.s32.totalorder %s20, 0
      %p104 = por %p102, %p103
      %p105 = scmp.ne.s32.totalorder %s93, %s94
      %p106 = scmp.eq.s32.totalorder %s21, 1
      %p107 = por %p105, %p106
      %p109 = scmp.ne.s32.totalorder %s94, %s108
      %p110 = scmp.eq.s32.totalorder %s21, 0
      %p111 = por %p109, %p110
      %s113 = sadd.s32 %s112, 1
      %p116 = scmp.eq.s32.totalorder %s15, 1
      %p117 = scmp.ne.s32.totalorder %s112, %s114
      %p118 = scmp.eq.s32.totalorder %s15, 0
      %p119 = por %p117, %p118
      %p120 = scmp.ne.s32.totalorder %s112, %s114
      %p121 = scmp.eq.s32.totalorder %s20, 1
      %p122 = por %p120, %p121
      %p123 = scmp.ne.s32.totalorder %s114, %s115
      %p124 = scmp.eq.s32.totalorder %s20, 0
      %p125 = por %p123, %p124
      %p126 = scmp.ne.s32.totalorder %s114, %s115
      %p127 = scmp.eq.s32.totalorder %s21, 1
      %p128 = por %p126, %p127
      %p130 = scmp.ne.s32.totalorder %s115, %s129
      %p131 = scmp.eq.s32.totalorder %s21, 0
      %p132 = por %p130, %p131
      %s134 = sadd.s32 %s133, 1
      %p137 = scmp.eq.s32.totalorder %s15, 1
      %p138 = scmp.ne.s32.totalorder %s133, %s135
      %p139 = scmp.eq.s32.totalorder %s15, 0
      %p140 = por %p138, %p139
      %p141 = scmp.ne.s32.totalorder %s133, %s135
      %p142 = scmp.eq.s32.totalorder %s20, 1
      %p143 = por %p141, %p142
      %p144 = scmp.ne.s32.totalorder %s135, %s136
      %p145 = scmp.eq.s32.totalorder %s20, 0
      %p146 = por %p144, %p145
      %p147 = scmp.ne.s32.totalorder %s135, %s136
      %p148 = scmp.eq.s32.totalorder %s21, 1
      %p149 = por %p147, %p148
      %p151 = scmp.ne.s32.totalorder %s136, %s150
      %p152 = scmp.eq.s32.totalorder %s21, 0
      %p153 = por %p151, %p152
      %s154 = ssub.s32 %s15, %s22
      %p155 = scmp.eq.s32.totalorder %s154, 0
      %s157 = sadd.s32 %s156, 1
      %s158 = scalar_select %p155, %s156, %s157
      %p161 = pneg %p155
      %p162 = scmp.eq.s32.totalorder %s15, 1
      %p163 = por %p161, %p162
      %p164 = scmp.ne.s32.totalorder %s156, %s159
      %p165 = scmp.eq.s32.totalorder %s15, 0
      %p166 = por %p164, %p165
      %p167 = scmp.ne.s32.totalorder %s156, %s159
      %p168 = scmp.eq.s32.totalorder %s20, 1
      %p169 = por %p167, %p168
      %p170 = scmp.ne.s32.totalorder %s159, %s160
      %p171 = scmp.eq.s32.totalorder %s20, 0
      %p172 = por %p170, %p171
      %p173 = scmp.ne.s32.totalorder %s159, %s160
      %p174 = scmp.eq.s32.totalorder %s21, 1
      %p175 = por %p173, %p174
      %p177 = scmp.ne.s32.totalorder %s160, %s176
      %p178 = scmp.eq.s32.totalorder %s21, 0
      %p179 = por %p177, %p178
      %p180 = scmp.le.s32.totalorder 1, %s15
      %p181 = scmp.lt.s32.totalorder %s15, 3
      %p182 = pnand %p180, %p181
      %p183 = pneg %p182
      // Predicated region
      $region9: #{tpu_custom_call.1} parent=5 // pred_check
        _
      $region10: #{tpu_custom_call.1} parent=5 // pred_check_branch
        %185 = sbr.rel (%p182) target = $region12
      $region11: #{tpu_custom_call.1} parent=5 // pred_region
        %s186 = ssub.s32 %s15, 1
        // Predicated region
        $region13: #{tpu_custom_call.1} parent=11 // pred_check
          %p187 = pneg %p62
        $region14: #{tpu_custom_call.1} parent=11 // pred_check_branch
          %189 = sbr.rel (%p187) target = $region16
        $region15: #{tpu_custom_call.1} parent=11 // pred_region
          _
        $region16: #{tpu_custom_call.1} parent=11 // pred_fallthru
          _
        // Predicated region
        $region17: #{tpu_custom_call.1} parent=11 // pred_check
          %p190 = pneg %p83
        $region18: #{tpu_custom_call.1} parent=11 // pred_check_branch
          %192 = sbr.rel (%p190) target = $region20
        $region19: #{tpu_custom_call.1} parent=11 // pred_region
          _
        $region20: #{tpu_custom_call.1} parent=11 // pred_fallthru
          _
        // Predicated region
        $region21: #{tpu_custom_call.1} parent=11 // pred_check
          %p193 = pneg %p104
        $region22: #{tpu_custom_call.1} parent=11 // pred_check_branch
          %195 = sbr.rel (%p193) target = $region24
        $region23: #{tpu_custom_call.1} parent=11 // pred_region
          _
        $region24: #{tpu_custom_call.1} parent=11 // pred_fallthru
          _
        // Predicated region
        $region25: #{tpu_custom_call.1} parent=11 // pred_check
          %p196 = pneg %p125
        $region26: #{tpu_custom_call.1} parent=11 // pred_check_branch
          %198 = sbr.rel (%p196) target = $region28
        $region27: #{tpu_custom_call.1} parent=11 // pred_region
          _
        $region28: #{tpu_custom_call.1} parent=11 // pred_fallthru
          _
        // Predicated region
        $region29: #{tpu_custom_call.1} parent=11 // pred_check
          %p199 = pneg %p146
        $region30: #{tpu_custom_call.1} parent=11 // pred_check_branch
          %201 = sbr.rel (%p199) target = $region32
        $region31: #{tpu_custom_call.1} parent=11 // pred_region
          _
        $region32: #{tpu_custom_call.1} parent=11 // pred_fallthru
          _
      $region12: #{tpu_custom_call.1} parent=5 // pred_fallthru
        _
      %p202 = scmp.lt.s32.totalorder %s15, 2
      // Predicated region
      $region33: #{tpu_custom_call.1} parent=5 // pred_check
        %p203 = pneg %p202
      $region34: #{tpu_custom_call.1} parent=5 // pred_check_branch
        %205 = sbr.rel (%p203) target = $region36
      $region35: #{tpu_custom_call.1} parent=5 // pred_region
        // Predicated region
        $region37: #{tpu_custom_call.1} parent=35 // pred_check
          %p206 = pneg %p35
        $region38: #{tpu_custom_call.1} parent=35 // pred_check_branch
          %208 = sbr.rel (%p206) target = $region40
        $region39: #{tpu_custom_call.1} parent=35 // pred_region
          %p209 = scmp.lt.s32.totalorder %s15, 1
          %s210 = scalar_select %p209, %s15, 1
          %s211 = smul.addr %s210, 37
          %s212 = smul.addr %s211, 8
          %s213 = scalar_lea.vmem %s0, %s212
        $region40: #{tpu_custom_call.1} parent=35 // pred_fallthru
          _
      $region36: #{tpu_custom_call.1} parent=5 // pred_fallthru
        _
      %p214 = scmp.le.s32.totalorder 1, %s15
      %p215 = scmp.lt.s32.totalorder %s15, 3
      %p216 = pnand %p214, %p215
      %p217 = pneg %p216
      // Predicated region
      $region41: #{tpu_custom_call.1} parent=5 // pred_check
        _
      $region42: #{tpu_custom_call.1} parent=5 // pred_check_branch
        %219 = sbr.rel (%p216) target = $region44
      $region43: #{tpu_custom_call.1} parent=5 // pred_region
        %s220 = ssub.s32 %s15, 1
        %p221 = scmp.lt.s32.totalorder %s20, 1
        %s222 = scalar_select %p221, %s20, 1
        %s223 = smul.addr %s222, 37
        %s224 = smul.addr %s223, 8
        %s225 = scalar_lea.vmem %s0, %s224
        %p226 = pneg %p41
        %p227 = pneg %p38
        %p228 = pneg %p62
        %p229 = pneg %p59
        %p230 = pneg %p83
        %p231 = pneg %p80
        %p232 = pneg %p104
        %p233 = pneg %p101
        %p234 = pneg %p125
        %p235 = pneg %p122
        %p236 = pneg %p146
        %p237 = pneg %p143
        %p238 = pneg %p172
        %p239 = pneg %p169
        %s240 = sand.u32 %s159, 1
        %s241 = scalar_lea.sflag [#allocation4], %s240
        %s242 = sand.u32 %s159, 1
        %s243 = scalar_lea.vmem [#allocation3], %s242
        %p244 = scmp.lt.s32.totalorder %s20, 1
        %s245 = scalar_select %p244, %s20, 1
        %s246 = smul.addr %s245, 37
        %s247 = smul.addr %s246, 8
        %s248 = scalar_lea.vmem %s0, %s247
        %v249 = vld [vmem:[%s248] sm:$0xff]
        %v250 = vld [vmem:[%s248 + $0x8] sm:$0xff]
        %v251 = vld [vmem:[%s248 + $0x10] sm:$0xff]
        %v252 = vld [vmem:[%s248 + $0x18] sm:$0xff]
        %v253 = vld [vmem:[%s248 + $0x20] sm:$0xff]
        %v254 = vld [vmem:[%s248 + $0x28] sm:$0xff]
        %v255 = vld [vmem:[%s248 + $0x30] sm:$0xff]
        %v256 = vld [vmem:[%s248 + $0x38] sm:$0xff]
        %v257 = vld [vmem:[%s248 + $0x40] sm:$0xff]
        %v258 = vld [vmem:[%s248 + $0x48] sm:$0xff]
        %v259 = vld [vmem:[%s248 + $0x50] sm:$0xff]
        %v260 = vld [vmem:[%s248 + $0x58] sm:$0xff]
        %v261 = vld [vmem:[%s248 + $0x60] sm:$0xff]
        %v262 = vld [vmem:[%s248 + $0x68] sm:$0xff]
        %v263 = vld [vmem:[%s248 + $0x70] sm:$0xff]
        %v264 = vld [vmem:[%s248 + $0x78] sm:$0xff]
        %v265 = vld [vmem:[%s248 + $0x80] sm:$0xff]
        %v266 = vld [vmem:[%s248 + $0x88] sm:$0xff]
        %v267 = vld [vmem:[%s248 + $0x90] sm:$0xff]
        %v268 = vld [vmem:[%s248 + $0x98] sm:$0xff]
        %v269 = vld [vmem:[%s248 + $0xa0] sm:$0xff]
        %v270 = vld [vmem:[%s248 + $0xa8] sm:$0xff]
        %v271 = vld [vmem:[%s248 + $0xb0] sm:$0xff]
        %v272 = vld [vmem:[%s248 + $0xb8] sm:$0xff]
        %v273 = vld [vmem:[%s248 + $0xc0] sm:$0xff]
        %v274 = vld [vmem:[%s248 + $0xc8] sm:$0xff]
        %v275 = vld [vmem:[%s248 + $0xd0] sm:$0xff]
        %v276 = vld [vmem:[%s248 + $0xd8] sm:$0xff]
        %v277 = vld [vmem:[%s248 + $0xe0] sm:$0xff]
        %v278 = vld [vmem:[%s248 + $0xe8] sm:$0xff]
        %v279 = vld [vmem:[%s248 + $0xf0] sm:$0xff]
        %v280 = vld [vmem:[%s248 + $0xf8] sm:$0xff]
        %v281 = vld [vmem:[%s1] sm:$0xff]
        %v282 = vld [vmem:[%s1 + $0x8] sm:$0xff]
        %v283 = vld [vmem:[%s1 + $0x10] sm:$0xff]
        %v284 = vld [vmem:[%s1 + $0x18] sm:$0xff]
        %v285 = vld [vmem:[%s1 + $0x20] sm:$0xff]
        %v286 = vld [vmem:[%s1 + $0x28] sm:$0xff]
        %v287 = vld [vmem:[%s1 + $0x30] sm:$0xff]
        %v288 = vld [vmem:[%s1 + $0x38] sm:$0xff]
        %v289 = vld [vmem:[%s1 + $0x40] sm:$0xff]
        %v290 = vld [vmem:[%s1 + $0x48] sm:$0xff]
        %v291 = vld [vmem:[%s1 + $0x50] sm:$0xff]
        %v292 = vld [vmem:[%s1 + $0x58] sm:$0xff]
        %v293 = vld [vmem:[%s1 + $0x60] sm:$0xff]
        %v294 = vld [vmem:[%s1 + $0x68] sm:$0xff]
        %v295 = vld [vmem:[%s1 + $0x70] sm:$0xff]
        %v296 = vld [vmem:[%s1 + $0x78] sm:$0xff]
        %v297 = vld [vmem:[%s1 + $0x80] sm:$0xff]
        %v298 = vld [vmem:[%s1 + $0x88] sm:$0xff]
        %v299 = vld [vmem:[%s1 + $0x90] sm:$0xff]
        %v300 = vld [vmem:[%s1 + $0x98] sm:$0xff]
        %v301 = vld [vmem:[%s1 + $0xa0] sm:$0xff]
        %v302 = vld [vmem:[%s1 + $0xa8] sm:$0xff]
        %v303 = vld [vmem:[%s1 + $0xb0] sm:$0xff]
        %v304 = vld [vmem:[%s1 + $0xb8] sm:$0xff]
        %v305 = vld [vmem:[%s1 + $0xc0] sm:$0xff]
        %v306 = vld [vmem:[%s1 + $0xc8] sm:$0xff]
        %v307 = vld [vmem:[%s1 + $0xd0] sm:$0xff]
        %v308 = vld [vmem:[%s1 + $0xd8] sm:$0xff]
        %v309 = vld [vmem:[%s1 + $0xe0] sm:$0xff]
        %v310 = vld [vmem:[%s1 + $0xe8] sm:$0xff]
        %v311 = vld [vmem:[%s1 + $0xf0] sm:$0xff]
        %v312 = vld [vmem:[%s1 + $0xf8] sm:$0xff]
        %314 = vset.pattern.permute.xlu0 0
        %315 = vperm.xlu0 %314, %v281
        %v316 = vpop.permute.xlu0 %315
        %319 = vset.pattern.permute.xlu0 0
        %320 = vperm.xlu0 %319, %v282
        %v321 = vpop.permute.xlu0 %320
        %324 = vset.pattern.permute.xlu0 0
        %325 = vperm.xlu0 %324, %v283
        %v326 = vpop.permute.xlu0 %325
        %329 = vset.pattern.permute.xlu0 0
        %330 = vperm.xlu0 %329, %v284
        %v331 = vpop.permute.xlu0 %330
        %334 = vset.pattern.permute.xlu0 0
        %335 = vperm.xlu0 %334, %v285
        %v336 = vpop.permute.xlu0 %335
        %339 = vset.pattern.permute.xlu0 0
        %340 = vperm.xlu0 %339, %v286
        %v341 = vpop.permute.xlu0 %340
        %344 = vset.pattern.permute.xlu0 0
        %345 = vperm.xlu0 %344, %v287
        %v346 = vpop.permute.xlu0 %345
        %349 = vset.pattern.permute.xlu0 0
        %350 = vperm.xlu0 %349, %v288
        %v351 = vpop.permute.xlu0 %350
        %354 = vset.pattern.permute.xlu0 0
        %355 = vperm.xlu0 %354, %v289
        %v356 = vpop.permute.xlu0 %355
        %359 = vset.pattern.permute.xlu0 0
        %360 = vperm.xlu0 %359, %v290
        %v361 = vpop.permute.xlu0 %360
        %364 = vset.pattern.permute.xlu0 0
        %365 = vperm.xlu0 %364, %v291
        %v366 = vpop.permute.xlu0 %365
        %369 = vset.pattern.permute.xlu0 0
        %370 = vperm.xlu0 %369, %v292
        %v371 = vpop.permute.xlu0 %370
        %374 = vset.pattern.permute.xlu0 0
        %375 = vperm.xlu0 %374, %v293
        %v376 = vpop.permute.xlu0 %375
        %379 = vset.pattern.permute.xlu0 0
        %380 = vperm.xlu0 %379, %v294
        %v381 = vpop.permute.xlu0 %380
        %384 = vset.pattern.permute.xlu0 0
        %385 = vperm.xlu0 %384, %v295
        %v386 = vpop.permute.xlu0 %385
        %389 = vset.pattern.permute.xlu0 0
        %390 = vperm.xlu0 %389, %v296
        %v391 = vpop.permute.xlu0 %390
        %394 = vset.pattern.permute.xlu0 0
        %395 = vperm.xlu0 %394, %v297
        %v396 = vpop.permute.xlu0 %395
        %399 = vset.pattern.permute.xlu0 0
        %400 = vperm.xlu0 %399, %v298
        %v401 = vpop.permute.xlu0 %400
        %404 = vset.pattern.permute.xlu0 0
        %405 = vperm.xlu0 %404, %v299
        %v406 = vpop.permute.xlu0 %405
        %409 = vset.pattern.permute.xlu0 0
        %410 = vperm.xlu0 %409, %v300
        %v411 = vpop.permute.xlu0 %410
        %414 = vset.pattern.permute.xlu0 0
        %415 = vperm.xlu0 %414, %v301
        %v416 = vpop.permute.xlu0 %415
        %419 = vset.pattern.permute.xlu0 0
        %420 = vperm.xlu0 %419, %v302
        %v421 = vpop.permute.xlu0 %420
        %424 = vset.pattern.permute.xlu0 0
        %425 = vperm.xlu0 %424, %v303
        %v426 = vpop.permute.xlu0 %425
        %429 = vset.pattern.permute.xlu0 0
        %430 = vperm.xlu0 %429, %v304
        %v431 = vpop.permute.xlu0 %430
        %434 = vset.pattern.permute.xlu0 0
        %435 = vperm.xlu0 %434, %v305
        %v436 = vpop.permute.xlu0 %435
        %439 = vset.pattern.permute.xlu0 0
        %440 = vperm.xlu0 %439, %v306
        %v441 = vpop.permute.xlu0 %440
        %444 = vset.pattern.permute.xlu0 0
        %445 = vperm.xlu0 %444, %v307
        %v446 = vpop.permute.xlu0 %445
        %449 = vset.pattern.permute.xlu0 0
        %450 = vperm.xlu0 %449, %v308
        %v451 = vpop.permute.xlu0 %450
        %454 = vset.pattern.permute.xlu0 0
        %455 = vperm.xlu0 %454, %v309
        %v456 = vpop.permute.xlu0 %455
        %459 = vset.pattern.permute.xlu0 0
        %460 = vperm.xlu0 %459, %v310
        %v461 = vpop.permute.xlu0 %460
        %464 = vset.pattern.permute.xlu0 0
        %465 = vperm.xlu0 %464, %v311
        %v466 = vpop.permute.xlu0 %465
        %469 = vset.pattern.permute.xlu0 0
        %470 = vperm.xlu0 %469, %v312
        %v471 = vpop.permute.xlu0 %470
        %v473 = vmul.f32 %v249, %v316
        %v474 = vmul.f32 %v250, %v321
        %v475 = vmul.f32 %v251, %v326
        %v476 = vmul.f32 %v252, %v331
        %v477 = vmul.f32 %v253, %v336
        %v478 = vmul.f32 %v254, %v341
        %v479 = vmul.f32 %v255, %v346
        %v480 = vmul.f32 %v256, %v351
        %v481 = vmul.f32 %v257, %v356
        %v482 = vmul.f32 %v258, %v361
        %v483 = vmul.f32 %v259, %v366
        %v484 = vmul.f32 %v260, %v371
        %v485 = vmul.f32 %v261, %v376
        %v486 = vmul.f32 %v262, %v381
        %v487 = vmul.f32 %v263, %v386
        %v488 = vmul.f32 %v264, %v391
        %v489 = vmul.f32 %v265, %v396
        %v490 = vmul.f32 %v266, %v401
        %v491 = vmul.f32 %v267, %v406
        %v492 = vmul.f32 %v268, %v411
        %v493 = vmul.f32 %v269, %v416
        %v494 = vmul.f32 %v270, %v421
        %v495 = vmul.f32 %v271, %v426
        %v496 = vmul.f32 %v272, %v431
        %v497 = vmul.f32 %v273, %v436
        %v498 = vmul.f32 %v274, %v441
        %v499 = vmul.f32 %v275, %v446
        %v500 = vmul.f32 %v276, %v451
        %v501 = vmul.f32 %v277, %v456
        %v502 = vmul.f32 %v278, %v461
        %v503 = vmul.f32 %v279, %v466
        %v504 = vmul.f32 %v280, %v471
        %v505 = vld [vmem:[%s2] sm:$0xff]
        %vm506 = vcmask 64512
        %v508 = vsel %vm506, %v473, 0
        %v511 = vsel %vm506, %v474, 0
        %v514 = vsel %vm506, %v475, 0
        %v517 = vsel %vm506, %v476, 0
        %v520 = vsel %vm506, %v477, 0
        %v523 = vsel %vm506, %v478, 0
        %v526 = vsel %vm506, %v479, 0
        %v529 = vsel %vm506, %v480, 0
        %v532 = vsel %vm506, %v481, 0
        %v535 = vsel %vm506, %v482, 0
        %v538 = vsel %vm506, %v483, 0
        %v541 = vsel %vm506, %v484, 0
        %v544 = vsel %vm506, %v485, 0
        %v547 = vsel %vm506, %v486, 0
        %v550 = vsel %vm506, %v487, 0
        %v553 = vsel %vm506, %v488, 0
        %v556 = vsel %vm506, %v489, 0
        %v559 = vsel %vm506, %v490, 0
        %v562 = vsel %vm506, %v491, 0
        %v565 = vsel %vm506, %v492, 0
        %v568 = vsel %vm506, %v493, 0
        %v571 = vsel %vm506, %v494, 0
        %v574 = vsel %vm506, %v495, 0
        %v577 = vsel %vm506, %v496, 0
        %v580 = vsel %vm506, %v497, 0
        %v583 = vsel %vm506, %v498, 0
        %v586 = vsel %vm506, %v499, 0
        %v589 = vsel %vm506, %v500, 0
        %v592 = vsel %vm506, %v501, 0
        %v595 = vsel %vm506, %v502, 0
        %v598 = vsel %vm506, %v503, 0
        %v601 = vsel %vm506, %v504, 0
        %603 = vmatprep.subr.mxu0 0.0
        %604 = vmatpush1.msra.mxu0 %v505
        %605 = vmatprep.subr.mxu0 0.0
        %606 = vmatpush1.msra.mxu0 0.0
        %607 = vmatprep.subr.mxu0 0.0
        %608 = vmatpush1.msra.mxu0 0.0
        %609 = vmatprep.subr.mxu0 0.0
        %610 = vmatpush1.msra.mxu0 0.0
        %611 = vmatprep.subr.mxu0 0.0
        %612 = vmatpush1.msra.mxu0 0.0
        %613 = vmatprep.subr.mxu0 0.0
        %614 = vmatpush1.msra.mxu0 0.0
        %615 = vmatprep.subr.mxu0 0.0
        %616 = vmatpush1.msra.mxu0 0.0
        %617 = vmatprep.subr.mxu0 0.0
        %618 = vmatpush1.msra.mxu0 0.0
        %619 = vmatprep.subr.mxu0 0.0
        %620 = vmatpush1.msra.mxu0 0.0
        %621 = vmatprep.subr.mxu0 0.0
        %622 = vmatpush1.msra.mxu0 0.0
        %623 = vmatprep.subr.mxu0 0.0
        %624 = vmatpush1.msra.mxu0 0.0
        %625 = vmatprep.subr.mxu0 0.0
        %626 = vmatpush1.msra.mxu0 0.0
        %627 = vmatprep.subr.mxu0 0.0
        %628 = vmatpush1.msra.mxu0 0.0
        %629 = vmatprep.subr.mxu0 0.0
        %630 = vmatpush1.msra.mxu0 0.0
        %631 = vmatprep.subr.mxu0 0.0
        %632 = vmatpush1.msra.mxu0 0.0
        %633 = vmatprep.subr.mxu0 0.0
        %634 = vmatpush1.msra.mxu0 0.0
        %635 = vmatprep.subr.mxu0 0.0
        %636 = vmatpush1.msra.mxu0 0.0
        %637 = vmatprep.subr.mxu0 0.0
        %638 = vmatpush1.msra.mxu0 0.0
        %639 = vmatprep.subr.mxu0 0.0
        %640 = vmatpush1.msra.mxu0 0.0
        %641 = vmatprep.subr.mxu0 0.0
        %642 = vmatpush1.msra.mxu0 0.0
        %643 = vmatprep.subr.mxu0 0.0
        %644 = vmatpush1.msra.mxu0 0.0
        %645 = vmatprep.subr.mxu0 0.0
        %646 = vmatpush1.msra.mxu0 0.0
        %647 = vmatprep.subr.mxu0 0.0
        %648 = vmatpush1.msra.mxu0 0.0
        %649 = vmatprep.subr.mxu0 0.0
        %650 = vmatpush1.msra.mxu0 0.0
        %651 = vmatprep.subr.mxu0 0.0
        %652 = vmatpush1.msra.mxu0 0.0
        %653 = vmatprep.subr.mxu0 0.0
        %654 = vmatpush1.msra.mxu0 0.0
        %655 = vmatprep.subr.mxu0 0.0
        %656 = vmatpush1.msra.mxu0 0.0
        %657 = vmatprep.subr.mxu0 0.0
        %658 = vmatpush1.msra.mxu0 0.0
        %659 = vmatprep.subr.mxu0 0.0
        %660 = vmatpush1.msra.mxu0 0.0
        %661 = vmatprep.subr.mxu0 0.0
        %662 = vmatpush1.msra.mxu0 0.0
        %663 = vmatprep.subr.mxu0 0.0
        %664 = vmatpush1.msra.mxu0 0.0
        %665 = vmatprep.subr.mxu0 0.0
        %666 = vmatpush1.msra.mxu0 0.0
        %667 = vmatprep.mubr.f32.mxu0 0.0
        %668 = vmatmul.mubr.f32.gmra.mrb[0].mxu0 %v508
        %v669 = vpop.f32.mrb[0].mxu0
        %v670 = vadd.f32 0.0, %v669
        %v671 = vpop.f32.mrb[0].mxu0
        %672 = vmatprep.mubr.f32.mxu0 0.0
        %673 = vmatmul.mubr.f32.gmra.mrb[0].mxu0 %v511
        %v674 = vpop.f32.mrb[0].mxu0
        %v675 = vadd.f32 0.0, %v674
        %v676 = vpop.f32.mrb[0].mxu0
        %677 = vmatprep.mubr.f32.mxu0 0.0
        %678 = vmatmul.mubr.f32.gmra.mrb[0].mxu0 %v514
        %v679 = vpop.f32.mrb[0].mxu0
        %v680 = vadd.f32 0.0, %v679
        %v681 = vpop.f32.mrb[0].mxu0
        %682 = vmatprep.mubr.f32.mxu0 0.0
        %683 = vmatmul.mubr.f32.gmra.mrb[0].mxu0 %v517
        %v684 = vpop.f32.mrb[0].mxu0
        %v685 = vadd.f32 0.0, %v684
        %v686 = vpop.f32.mrb[0].mxu0
        %687 = vmatprep.mubr.f32.mxu0 0.0
        %688 = vmatmul.mubr.f32.gmra.mrb[0].mxu0 %v520
        %v689 = vpop.f32.mrb[0].mxu0
        %v690 = vadd.f32 0.0, %v689
        %v691 = vpop.f32.mrb[0].mxu0
        %692 = vmatprep.mubr.f32.mxu0 0.0
        %693 = vmatmul.mubr.f32.gmra.mrb[0].mxu0 %v523
        %v694 = vpop.f32.mrb[0].mxu0
        %v695 = vadd.f32 0.0, %v694
        %v696 = vpop.f32.mrb[0].mxu0
        %697 = vmatprep.mubr.f32.mxu0 0.0
        %698 = vmatmul.mubr.f32.gmra.mrb[0].mxu0 %v526
        %v699 = vpop.f32.mrb[0].mxu0
        %v700 = vadd.f32 0.0, %v699
        %v701 = vpop.f32.mrb[0].mxu0
        %702 = vmatprep.mubr.f32.mxu0 0.0
        %703 = vmatmul.mubr.f32.gmra.mrb[0].mxu0 %v529
        %v704 = vpop.f32.mrb[0].mxu0
        %v705 = vadd.f32 0.0, %v704
        %v706 = vpop.f32.mrb[0].mxu0
        %707 = vmatprep.mubr.f32.mxu0 0.0
        %708 = vmatmul.mubr.f32.gmra.mrb[0].mxu0 %v532
        %v709 = vpop.f32.mrb[0].mxu0
        %v710 = vadd.f32 0.0, %v709
        %v711 = vpop.f32.mrb[0].mxu0
        %712 = vmatprep.mubr.f32.mxu0 0.0
        %713 = vmatmul.mubr.f32.gmra.mrb[0].mxu0 %v535
        %v714 = vpop.f32.mrb[0].mxu0
        %v715 = vadd.f32 0.0, %v714
        %v716 = vpop.f32.mrb[0].mxu0
        %717 = vmatprep.mubr.f32.mxu0 0.0
        %718 = vmatmul.mubr.f32.gmra.mrb[0].mxu0 %v538
        %v719 = vpop.f32.mrb[0].mxu0
        %v720 = vadd.f32 0.0, %v719
        %v721 = vpop.f32.mrb[0].mxu0
        %722 = vmatprep.mubr.f32.mxu0 0.0
        %723 = vmatmul.mubr.f32.gmra.mrb[0].mxu0 %v541
        %v724 = vpop.f32.mrb[0].mxu0
        %v725 = vadd.f32 0.0, %v724
        %v726 = vpop.f32.mrb[0].mxu0
        %727 = vmatprep.mubr.f32.mxu0 0.0
        %728 = vmatmul.mubr.f32.gmra.mrb[0].mxu0 %v544
        %v729 = vpop.f32.mrb[0].mxu0
        %v730 = vadd.f32 0.0, %v729
        %v731 = vpop.f32.mrb[0].mxu0
        %732 = vmatprep.mubr.f32.mxu0 0.0
        %733 = vmatmul.mubr.f32.gmra.mrb[0].mxu0 %v547
        %v734 = vpop.f32.mrb[0].mxu0
        %v735 = vadd.f32 0.0, %v734
        %v736 = vpop.f32.mrb[0].mxu0
        %737 = vmatprep.mubr.f32.mxu0 0.0
        %738 = vmatmul.mubr.f32.gmra.mrb[0].mxu0 %v550
        %v739 = vpop.f32.mrb[0].mxu0
        %v740 = vadd.f32 0.0, %v739
        %v741 = vpop.f32.mrb[0].mxu0
        %742 = vmatprep.mubr.f32.mxu0 0.0
        %743 = vmatmul.mubr.f32.gmra.mrb[0].mxu0 %v553
        %v744 = vpop.f32.mrb[0].mxu0
        %v745 = vadd.f32 0.0, %v744
        %v746 = vpop.f32.mrb[0].mxu0
        %747 = vmatprep.mubr.f32.mxu0 0.0
        %748 = vmatmul.mubr.f32.gmra.mrb[0].mxu0 %v556
        %v749 = vpop.f32.mrb[0].mxu0
        %v750 = vadd.f32 0.0, %v749
        %v751 = vpop.f32.mrb[0].mxu0
        %752 = vmatprep.mubr.f32.mxu0 0.0
        %753 = vmatmul.mubr.f32.gmra.mrb[0].mxu0 %v559
        %v754 = vpop.f32.mrb[0].mxu0
        %v755 = vadd.f32 0.0, %v754
        %v756 = vpop.f32.mrb[0].mxu0
        %757 = vmatprep.mubr.f32.mxu0 0.0
        %758 = vmatmul.mubr.f32.gmra.mrb[0].mxu0 %v562
        %v759 = vpop.f32.mrb[0].mxu0
        %v760 = vadd.f32 0.0, %v759
        %v761 = vpop.f32.mrb[0].mxu0
        %762 = vmatprep.mubr.f32.mxu0 0.0
        %763 = vmatmul.mubr.f32.gmra.mrb[0].mxu0 %v565
        %v764 = vpop.f32.mrb[0].mxu0
        %v765 = vadd.f32 0.0, %v764
        %v766 = vpop.f32.mrb[0].mxu0
        %767 = vmatprep.mubr.f32.mxu0 0.0
        %768 = vmatmul.mubr.f32.gmra.mrb[0].mxu0 %v568
        %v769 = vpop.f32.mrb[0].mxu0
        %v770 = vadd.f32 0.0, %v769
        %v771 = vpop.f32.mrb[0].mxu0
        %772 = vmatprep.mubr.f32.mxu0 0.0
        %773 = vmatmul.mubr.f32.gmra.mrb[0].mxu0 %v571
        %v774 = vpop.f32.mrb[0].mxu0
        %v775 = vadd.f32 0.0, %v774
        %v776 = vpop.f32.mrb[0].mxu0
        %777 = vmatprep.mubr.f32.mxu0 0.0
        %778 = vmatmul.mubr.f32.gmra.mrb[0].mxu0 %v574
        %v779 = vpop.f32.mrb[0].mxu0
        %v780 = vadd.f32 0.0, %v779
        %v781 = vpop.f32.mrb[0].mxu0
        %782 = vmatprep.mubr.f32.mxu0 0.0
        %783 = vmatmul.mubr.f32.gmra.mrb[0].mxu0 %v577
        %v784 = vpop.f32.mrb[0].mxu0
        %v785 = vadd.f32 0.0, %v784
        %v786 = vpop.f32.mrb[0].mxu0
        %787 = vmatprep.mubr.f32.mxu0 0.0
        %788 = vmatmul.mubr.f32.gmra.mrb[0].mxu0 %v580
        %v789 = vpop.f32.mrb[0].mxu0
        %v790 = vadd.f32 0.0, %v789
        %v791 = vpop.f32.mrb[0].mxu0
        %792 = vmatprep.mubr.f32.mxu0 0.0
        %793 = vmatmul.mubr.f32.gmra.mrb[0].mxu0 %v583
        %v794 = vpop.f32.mrb[0].mxu0
        %v795 = vadd.f32 0.0, %v794
        %v796 = vpop.f32.mrb[0].mxu0
        %797 = vmatprep.mubr.f32.mxu0 0.0
        %798 = vmatmul.mubr.f32.gmra.mrb[0].mxu0 %v586
        %v799 = vpop.f32.mrb[0].mxu0
        %v800 = vadd.f32 0.0, %v799
        %v801 = vpop.f32.mrb[0].mxu0
        %802 = vmatprep.mubr.f32.mxu0 0.0
        %803 = vmatmul.mubr.f32.gmra.mrb[0].mxu0 %v589
        %v804 = vpop.f32.mrb[0].mxu0
        %v805 = vadd.f32 0.0, %v804
        %v806 = vpop.f32.mrb[0].mxu0
        %807 = vmatprep.mubr.f32.mxu0 0.0
        %808 = vmatmul.mubr.f32.gmra.mrb[0].mxu0 %v592
        %v809 = vpop.f32.mrb[0].mxu0
        %v810 = vadd.f32 0.0, %v809
        %v811 = vpop.f32.mrb[0].mxu0
        %812 = vmatprep.mubr.f32.mxu0 0.0
        %813 = vmatmul.mubr.f32.gmra.mrb[0].mxu0 %v595
        %v814 = vpop.f32.mrb[0].mxu0
        %v815 = vadd.f32 0.0, %v814
        %v816 = vpop.f32.mrb[0].mxu0
        %817 = vmatprep.mubr.f32.mxu0 0.0
        %818 = vmatmul.mubr.f32.gmra.mrb[0].mxu0 %v598
        %v819 = vpop.f32.mrb[0].mxu0
        %v820 = vadd.f32 0.0, %v819
        %v821 = vpop.f32.mrb[0].mxu0
        %822 = vmatprep.mubr.f32.mxu0 0.0
        %823 = vmatmul.mubr.f32.gmra.mrb[0].mxu0 %v601
        %v824 = vpop.f32.mrb[0].mxu0
        %v825 = vadd.f32 0.0, %v824
        %v826 = vpop.f32.mrb[0].mxu0
        %827 = vdwg.mxu0
        %828 = vst [vmem:[#allocation2] sm:$0xff] %v670
        %829 = vst [vmem:[#allocation2 + $0x8] sm:$0xff] %v675
        %830 = vst [vmem:[#allocation2 + $0x10] sm:$0xff] %v680
        %831 = vst [vmem:[#allocation2 + $0x18] sm:$0xff] %v685
        %832 = vst [vmem:[#allocation2 + $0x20] sm:$0xff] %v690
        %833 = vst [vmem:[#allocation2 + $0x28] sm:$0xff] %v695
        %834 = vst [vmem:[#allocation2 + $0x30] sm:$0xff] %v700
        %835 = vst [vmem:[#allocation2 + $0x38] sm:$0xff] %v705
        %836 = vst [vmem:[#allocation2 + $0x40] sm:$0xff] %v710
        %837 = vst [vmem:[#allocation2 + $0x48] sm:$0xff] %v715
        %838 = vst [vmem:[#allocation2 + $0x50] sm:$0xff] %v720
        %839 = vst [vmem:[#allocation2 + $0x58] sm:$0xff] %v725
        %840 = vst [vmem:[#allocation2 + $0x60] sm:$0xff] %v730
        %841 = vst [vmem:[#allocation2 + $0x68] sm:$0xff] %v735
        %842 = vst [vmem:[#allocation2 + $0x70] sm:$0xff] %v740
        %843 = vst [vmem:[#allocation2 + $0x78] sm:$0xff] %v745
        %844 = vst [vmem:[#allocation2 + $0x80] sm:$0xff] %v750
        %845 = vst [vmem:[#allocation2 + $0x88] sm:$0xff] %v755
        %846 = vst [vmem:[#allocation2 + $0x90] sm:$0xff] %v760
        %847 = vst [vmem:[#allocation2 + $0x98] sm:$0xff] %v765
        %848 = vst [vmem:[#allocation2 + $0xa0] sm:$0xff] %v770
        %849 = vst [vmem:[#allocation2 + $0xa8] sm:$0xff] %v775
        %850 = vst [vmem:[#allocation2 + $0xb0] sm:$0xff] %v780
        %851 = vst [vmem:[#allocation2 + $0xb8] sm:$0xff] %v785
        %852 = vst [vmem:[#allocation2 + $0xc0] sm:$0xff] %v790
        %853 = vst [vmem:[#allocation2 + $0xc8] sm:$0xff] %v795
        %854 = vst [vmem:[#allocation2 + $0xd0] sm:$0xff] %v800
        %855 = vst [vmem:[#allocation2 + $0xd8] sm:$0xff] %v805
        %856 = vst [vmem:[#allocation2 + $0xe0] sm:$0xff] %v810
        %857 = vst [vmem:[#allocation2 + $0xe8] sm:$0xff] %v815
        %858 = vst [vmem:[#allocation2 + $0xf0] sm:$0xff] %v820
        %859 = vst [vmem:[#allocation2 + $0xf8] sm:$0xff] %v825
        %v860 = vld [vmem:[%s248 + $0x1] sm:$0xff]
        %v861 = vld [vmem:[%s248 + $0x9] sm:$0xff]
        %v862 = vld [vmem:[%s248 + $0x11] sm:$0xff]
        %v863 = vld [vmem:[%s248 + $0x19] sm:$0xff]
        %v864 = vld [vmem:[%s248 + $0x21] sm:$0xff]
        %v865 = vld [vmem:[%s248 + $0x29] sm:$0xff]
        %v866 = vld [vmem:[%s248 + $0x31] sm:$0xff]
        %v867 = vld [vmem:[%s248 + $0x39] sm:$0xff]
        %v868 = vld [vmem:[%s248 + $0x41] sm:$0xff]
        %v869 = vld [vmem:[%s248 + $0x49] sm:$0xff]
        %v870 = vld [vmem:[%s248 + $0x51] sm:$0xff]
        %v871 = vld [vmem:[%s248 + $0x59] sm:$0xff]
        %v872 = vld [vmem:[%s248 + $0x61] sm:$0xff]
        %v873 = vld [vmem:[%s248 + $0x69] sm:$0xff]
        %v874 = vld [vmem:[%s248 + $0x71] sm:$0xff]
        %v875 = vld [vmem:[%s248 + $0x79] sm:$0xff]
        %v876 = vld [vmem:[%s248 + $0x81] sm:$0xff]
        %v877 = vld [vmem:[%s248 + $0x89] sm:$0xff]
        %v878 = vld [vmem:[%s248 + $0x91] sm:$0xff]
        %v879 = vld [vmem:[%s248 + $0x99] sm:$0xff]
        %v880 = vld [vmem:[%s248 + $0xa1] sm:$0xff]
        %v881 = vld [vmem:[%s248 + $0xa9] sm:$0xff]
        %v882 = vld [vmem:[%s248 + $0xb1] sm:$0xff]
        %v883 = vld [vmem:[%s248 + $0xb9] sm:$0xff]
        %v884 = vld [vmem:[%s248 + $0xc1] sm:$0xff]
        %v885 = vld [vmem:[%s248 + $0xc9] sm:$0xff]
        %v886 = vld [vmem:[%s248 + $0xd1] sm:$0xff]
        %v887 = vld [vmem:[%s248 + $0xd9] sm:$0xff]
        %v888 = vld [vmem:[%s248 + $0xe1] sm:$0xff]
        %v889 = vld [vmem:[%s248 + $0xe9] sm:$0xff]
        %v890 = vld [vmem:[%s248 + $0xf1] sm:$0xff]
        %v891 = vld [vmem:[%s248 + $0xf9] sm:$0xff]
        %s892 = scalar_lea.vmem %s1, 256
        %v893 = vld [vmem:[%s892] sm:$0xff]
        %v894 = vld [vmem:[%s892 + $0x8] sm:$0xff]
        %v895 = vld [vmem:[%s892 + $0x10] sm:$0xff]
        %v896 = vld [vmem:[%s892 + $0x18] sm:$0xff]
        %v897 = vld [vmem:[%s892 + $0x20] sm:$0xff]
        %v898 = vld [vmem:[%s892 + $0x28] sm:$0xff]
        %v899 = vld [vmem:[%s892 + $0x30] sm:$0xff]
        %v900 = vld [vmem:[%s892 + $0x38] sm:$0xff]
        %v901 = vld [vmem:[%s892 + $0x40] sm:$0xff]
        %v902 = vld [vmem:[%s892 + $0x48] sm:$0xff]
        %v903 = vld [vmem:[%s892 + $0x50] sm:$0xff]
        %v904 = vld [vmem:[%s892 + $0x58] sm:$0xff]
        %v905 = vld [vmem:[%s892 + $0x60] sm:$0xff]
        %v906 = vld [vmem:[%s892 + $0x68] sm:$0xff]
        %v907 = vld [vmem:[%s892 + $0x70] sm:$0xff]
        %v908 = vld [vmem:[%s892 + $0x78] sm:$0xff]
        %v909 = vld [vmem:[%s892 + $0x80] sm:$0xff]
        %v910 = vld [vmem:[%s892 + $0x88] sm:$0xff]
        %v911 = vld [vmem:[%s892 + $0x90] sm:$0xff]
        %v912 = vld [vmem:[%s892 + $0x98] sm:$0xff]
        %v913 = vld [vmem:[%s892 + $0xa0] sm:$0xff]
        %v914 = vld [vmem:[%s892 + $0xa8] sm:$0xff]
        %v915 = vld [vmem:[%s892 + $0xb0] sm:$0xff]
        %v916 = vld [vmem:[%s892 + $0xb8] sm:$0xff]
        %v917 = vld [vmem:[%s892 + $0xc0] sm:$0xff]
        %v918 = vld [vmem:[%s892 + $0xc8] sm:$0xff]
        %v919 = vld [vmem:[%s892 + $0xd0] sm:$0xff]
        %v920 = vld [vmem:[%s892 + $0xd8] sm:$0xff]
        %v921 = vld [vmem:[%s892 + $0xe0] sm:$0xff]
        %v922 = vld [vmem:[%s892 + $0xe8] sm:$0xff]
        %v923 = vld [vmem:[%s892 + $0xf0] sm:$0xff]
        %v924 = vld [vmem:[%s892 + $0xf8] sm:$0xff]
        %926 = vset.pattern.permute.xlu0 0
        %927 = vperm.xlu0 %926, %v893
        %v928 = vpop.permute.xlu0 %927
        %931 = vset.pattern.permute.xlu0 0
        %932 = vperm.xlu0 %931, %v894
        %v933 = vpop.permute.xlu0 %932
        %936 = vset.pattern.permute.xlu0 0
        %937 = vperm.xlu0 %936, %v895
        %v938 = vpop.permute.xlu0 %937
        %941 = vset.pattern.permute.xlu0 0
        %942 = vperm.xlu0 %941, %v896
        %v943 = vpop.permute.xlu0 %942
        %946 = vset.pattern.permute.xlu0 0
        %947 = vperm.xlu0 %946, %v897
        %v948 = vpop.permute.xlu0 %947
        %951 = vset.pattern.permute.xlu0 0
        %952 = vperm.xlu0 %951, %v898
        %v953 = vpop.permute.xlu0 %952
        %956 = vset.pattern.permute.xlu0 0
        %957 = vperm.xlu0 %956, %v899
        %v958 = vpop.permute.xlu0 %957
        %961 = vset.pattern.permute.xlu0 0
        %962 = vperm.xlu0 %961, %v900
        %v963 = vpop.permute.xlu0 %962
        %966 = vset.pattern.permute.xlu0 0
        %967 = vperm.xlu0 %966, %v901
        %v968 = vpop.permute.xlu0 %967
        %971 = vset.pattern.permute.xlu0 0
        %972 = vperm.xlu0 %971, %v902
        %v973 = vpop.permute.xlu0 %972
        %976 = vset.pattern.permute.xlu0 0
        %977 = vperm.xlu0 %976, %v903
        %v978 = vpop.permute.xlu0 %977
        %981 = vset.pattern.permute.xlu0 0
        %982 = vperm.xlu0 %981, %v904
        %v983 = vpop.permute.xlu0 %982
        %986 = vset.pattern.permute.xlu0 0
        %987 = vperm.xlu0 %986, %v905
        %v988 = vpop.permute.xlu0 %987
        %991 = vset.pattern.permute.xlu0 0
        %992 = vperm.xlu0 %991, %v906
        %v993 = vpop.permute.xlu0 %992
        %996 = vset.pattern.permute.xlu0 0
        %997 = vperm.xlu0 %996, %v907
        %v998 = vpop.permute.xlu0 %997
        %1001 = vset.pattern.permute.xlu0 0
        %1002 = vperm.xlu0 %1001, %v908
        %v1003 = vpop.permute.xlu0 %1002
        %1006 = vset.pattern.permute.xlu0 0
        %1007 = vperm.xlu0 %1006, %v909
        %v1008 = vpop.permute.xlu0 %1007
        %1011 = vset.pattern.permute.xlu0 0
        %1012 = vperm.xlu0 %1011, %v910
        %v1013 = vpop.permute.xlu0 %1012
        %1016 = vset.pattern.permute.xlu0 0
        %1017 = vperm.xlu0 %1016, %v911
        %v1018 = vpop.permute.xlu0 %1017
        %1021 = vset.pattern.permute.xlu0 0
        %1022 = vperm.xlu0 %1021, %v912
        %v1023 = vpop.permute.xlu0 %1022
        %1026 = vset.pattern.permute.xlu0 0
        %1027 = vperm.xlu0 %1026, %v913
        %v1028 = vpop.permute.xlu0 %1027
        %1031 = vset.pattern.permute.xlu0 0
        %1032 = vperm.xlu0 %1031, %v914
        %v1033 = vpop.permute.xlu0 %1032
        %1036 = vset.pattern.permute.xlu0 0
        %1037 = vperm.xlu0 %1036, %v915
        %v1038 = vpop.permute.xlu0 %1037
        %1041 = vset.pattern.permute.xlu0 0
        %1042 = vperm.xlu0 %1041, %v916
        %v1043 = vpop.permute.xlu0 %1042
        %1046 = vset.pattern.permute.xlu0 0
        %1047 = vperm.xlu0 %1046, %v917
        %v1048 = vpop.permute.xlu0 %1047
        %1051 = vset.pattern.permute.xlu0 0
        %1052 = vperm.xlu0 %1051, %v918
        %v1053 = vpop.permute.xlu0 %1052
        %1056 = vset.pattern.permute.xlu0 0
        %1057 = vperm.xlu0 %1056, %v919
        %v1058 = vpop.permute.xlu0 %1057
        %1061 = vset.pattern.permute.xlu0 0
        %1062 = vperm.xlu0 %1061, %v920
        %v1063 = vpop.permute.xlu0 %1062
        %1066 = vset.pattern.permute.xlu0 0
        %1067 = vperm.xlu0 %1066, %v921
        %v1068 = vpop.permute.xlu0 %1067
        %1071 = vset.pattern.permute.xlu0 0
        %1072 = vperm.xlu0 %1071, %v922
        %v1073 = vpop.permute.xlu0 %1072
        %1076 = vset.pattern.permute.xlu0 0
        %1077 = vperm.xlu0 %1076, %v923
        %v1078 = vpop.permute.xlu0 %1077
        %1081 = vset.pattern.permute.xlu0 0
        %1082 = vperm.xlu0 %1081, %v924
        %v1083 = vpop.permute.xlu0 %1082
        %v1085 = vmul.f32 %v860, %v928
        %v1086 = vmul.f32 %v861, %v933
        %v1087 = vmul.f32 %v862, %v938
        %v1088 = vmul.f32 %v863, %v943
        %v1089 = vmul.f32 %v864, %v948
        %v1090 = vmul.f32 %v865, %v953
        %v1091 = vmul.f32 %v866, %v958
        %v1092 = vmul.f32 %v867, %v963
        %v1093 = vmul.f32 %v868, %v968
        %v1094 = vmul.f32 %v869, %v973
        %v1095 = vmul.f32 %v870, %v978
        %v1096 = vmul.f32 %v871, %v983
        %v1097 = vmul.f32 %v872, %v988
        %v1098 = vmul.f32 %v873, %v993
        %v1099 = vmul.f32 %v874, %v998
        %v1100 = vmul.f32 %v875, %v1003
        %v1101 = vmul.f32 %v876, %v1008
        %v1102 = vmul.f32 %v877, %v1013
        %v1103 = vmul.f32 %v878, %v1018
        %v1104 = vmul.f32 %v879, %v1023
        %v1105 = vmul.f32 %v880, %v1028
        %v1106 = vmul.f32 %v881, %v1033
        %v1107 = vmul.f32 %v882, %v1038
        %v1108 = vmul.f32 %v883, %v1043
        %v1109 = vmul.f32 %v884, %v1048
        %v1110 = vmul.f32 %v885, %v1053
        %v1111 = vmul.f32 %v886, %v1058
        %v1112 = vmul.f32 %v887, %v1063
        %v1113 = vmul.f32 %v888, %v1068
        %v1114 = vmul.f32 %v889, %v1073
        %v1115 = vmul.f32 %v890, %v1078
        %v1116 = vmul.f32 %v891, %v1083
        %s1117 = scalar_lea.vmem %s2, 8
        %v1118 = vld [vmem:[%s1117] sm:$0xff]
        %v1120 = vsel %vm506, %v1085, 0
        %v1123 = vsel %vm506, %v1086, 0
        %v1126 = vsel %vm506, %v1087, 0
        %v1129 = vsel %vm506, %v1088, 0
        %v1132 = vsel %vm506, %v1089, 0
        %v1135 = vsel %vm506, %v1090, 0
        %v1138 = vsel %vm506, %v1091, 0
        %v1141 = vsel %vm506, %v1092, 0
        %v1144 = vsel %vm506, %v1093, 0
        %v1147 = vsel %vm506, %v1094, 0
        %v1150 = vsel %vm506, %v1095, 0
        %v1153 = vsel %vm506, %v1096, 0
        %v1156 = vsel %vm506, %v1097, 0
        %v1159 = vsel %vm506, %v1098, 0
        %v1162 = vsel %vm506, %v1099, 0
        %v1165 = vsel %vm506, %v1100, 0
        %v1168 = vsel %vm506, %v1101, 0
        %v1171 = vsel %vm506, %v1102, 0
        %v1174 = vsel %vm506, %v1103, 0
        %v1177 = vsel %vm506, %v1104, 0
        %v1180 = vsel %vm506, %v1105, 0
        %v1183 = vsel %vm506, %v1106, 0
        %v1186 = vsel %vm506, %v1107, 0
        %v1189 = vsel %vm506, %v1108, 0
        %v1192 = vsel %vm506, %v1109, 0
        %v1195 = vsel %vm506, %v1110, 0
        %v1198 = vsel %vm506, %v1111, 0
        %v1201 = vsel %vm506, %v1112, 0
        %v1204 = vsel %vm506, %v1113, 0
        %v1207 = vsel %vm506, %v1114, 0
        %v1210 = vsel %vm506, %v1115, 0
        %v1213 = vsel %vm506, %v1116, 0
        %1215 = vmatprep.subr.mxu0 0.0
        %1216 = vmatpush1.msra.mxu0 %v1118
        %1217 = vmatprep.subr.mxu0 0.0
        %1218 = vmatpush1.msra.mxu0 0.0
        %1219 = vmatprep.subr.mxu0 0.0
        %1220 = vmatpush1.msra.mxu0 0.0
        %1221 = vmatprep.subr.mxu0 0.0
        %1222 = vmatpush1.msra.mxu0 0.0
        %1223 = vmatprep.subr.mxu0 0.0
        %1224 = vmatpush1.msra.mxu0 0.0
        %1225 = vmatprep.subr.mxu0 0.0
        %1226 = vmatpush1.msra.mxu0 0.0
        %1227 = vmatprep.subr.mxu0 0.0
        %1228 = vmatpush1.msra.mxu0 0.0
        %1229 = vmatprep.subr.mxu0 0.0
        %1230 = vmatpush1.msra.mxu0 0.0
        %1231 = vmatprep.subr.mxu0 0.0
        %1232 = vmatpush1.msra.mxu0 0.0
        %1233 = vmatprep.subr.mxu0 0.0
        %1234 = vmatpush1.msra.mxu0 0.0
        %1235 = vmatprep.subr.mxu0 0.0
        %1236 = vmatpush1.msra.mxu0 0.0
        %1237 = vmatprep.subr.mxu0 0.0
        %1238 = vmatpush1.msra.mxu0 0.0
        %1239 = vmatprep.subr.mxu0 0.0
        %1240 = vmatpush1.msra.mxu0 0.0
        %1241 = vmatprep.subr.mxu0 0.0
        %1242 = vmatpush1.msra.mxu0 0.0
        %1243 = vmatprep.subr.mxu0 0.0
        %1244 = vmatpush1.msra.mxu0 0.0
        %1245 = vmatprep.subr.mxu0 0.0
        %1246 = vmatpush1.msra.mxu0 0.0
        %1247 = vmatprep.subr.mxu0 0.0
        %1248 = vmatpush1.msra.mxu0 0.0
        %1249 = vmatprep.subr.mxu0 0.0
        %1250 = vmatpush1.msra.mxu0 0.0
        %1251 = vmatprep.subr.mxu0 0.0
        %1252 = vmatpush1.msra.mxu0 0.0
        %1253 = vmatprep.subr.mxu0 0.0
        %1254 = vmatpush1.msra.mxu0 0.0
        %1255 = vmatprep.subr.mxu0 0.0
        %1256 = vmatpush1.msra.mxu0 0.0
        %1257 = vmatprep.subr.mxu0 0.0
        %1258 = vmatpush1.msra.mxu0 0.0
        %1259 = vmatprep.subr.mxu0 0.0
        %1260 = vmatpush1.msra.mxu0 0.0
        %1261 = vmatprep.subr.mxu0 0.0
        %1262 = vmatpush1.msra.mxu0 0.0
        %1263 = vmatprep.subr.mxu0 0.0
        %1264 = vmatpush1.msra.mxu0 0.0
        %1265 = vmatprep.subr.mxu0 0.0
        %1266 = vmatpush1.msra.mxu0 0.0
        %1267 = vmatprep.subr.mxu0 0.0
        %1268 = vmatpush1.msra.mxu0 0.0
        %1269 = vmatprep.subr.mxu0 0.0
        %1270 = vmatpush1.msra.mxu0 0.0
        %1271 = vmatprep.subr.mxu0 0.0
        %1272 = vmatpush1.msra.mxu0 0.0
        %1273 = vmatprep.subr.mxu0 0.0
        %1274 = vmatpush1.msra.mxu0 0.0
        %1275 = vmatprep.subr.mxu0 0.0
        %1276 = vmatpush1.msra.mxu0 0.0
        %1277 = vmatprep.subr.mxu0 0.0
        %1278 = vmatpush1.msra.mxu0 0.0
        %1279 = vmatprep.mubr.f32.mxu0 0.0
        %1280 = vmatmul.mubr.f32.gmra.mrb[0].mxu0 %v1120
        %v1281 = vpop.f32.mrb[0].mxu0
        %v1282 = vadd.f32 0.0, %v1281
        %v1283 = vpop.f32.mrb[0].mxu0
        %1284 = vmatprep.mubr.f32.mxu0 0.0
        %1285 = vmatmul.mubr.f32.gmra.mrb[0].mxu0 %v1123
        %v1286 = vpop.f32.mrb[0].mxu0
        %v1287 = vadd.f32 0.0, %v1286
        %v1288 = vpop.f32.mrb[0].mxu0
        %1289 = vmatprep.mubr.f32.mxu0 0.0
        %1290 = vmatmul.mubr.f32.gmra.mrb[0].mxu0 %v1126
        %v1291 = vpop.f32.mrb[0].mxu0
        %v1292 = vadd.f32 0.0, %v1291
        %v1293 = vpop.f32.mrb[0].mxu0
        %1294 = vmatprep.mubr.f32.mxu0 0.0
        %1295 = vmatmul.mubr.f32.gmra.mrb[0].mxu0 %v1129
        %v1296 = vpop.f32.mrb[0].mxu0
        %v1297 = vadd.f32 0.0, %v1296
        %v1298 = vpop.f32.mrb[0].mxu0
        %1299 = vmatprep.mubr.f32.mxu0 0.0
        %1300 = vmatmul.mubr.f32.gmra.mrb[0].mxu0 %v1132
        %v1301 = vpop.f32.mrb[0].mxu0
        %v1302 = vadd.f32 0.0, %v1301
        %v1303 = vpop.f32.mrb[0].mxu0
        %1304 = vmatprep.mubr.f32.mxu0 0.0
        %1305 = vmatmul.mubr.f32.gmra.mrb[0].mxu0 %v1135
        %v1306 = vpop.f32.mrb[0].mxu0
        %v1307 = vadd.f32 0.0, %v1306
        %v1308 = vpop.f32.mrb[0].mxu0
        %1309 = vmatprep.mubr.f32.mxu0 0.0
        %1310 = vmatmul.mubr.f32.gmra.mrb[0].mxu0 %v1138
        %v1311 = vpop.f32.mrb[0].mxu0
        %v1312 = vadd.f32 0.0, %v1311
        %v1313 = vpop.f32.mrb[0].mxu0
        %1314 = vmatprep.mubr.f32.mxu0 0.0
        %1315 = vmatmul.mubr.f32.gmra.mrb[0].mxu0 %v1141
        %v1316 = vpop.f32.mrb[0].mxu0
        %v1317 = vadd.f32 0.0, %v1316
        %v1318 = vpop.f32.mrb[0].mxu0
        %1319 = vmatprep.mubr.f32.mxu0 0.0
        %1320 = vmatmul.mubr.f32.gmra.mrb[0].mxu0 %v1144
        %v1321 = vpop.f32.mrb[0].mxu0
        %v1322 = vadd.f32 0.0, %v1321
        %v1323 = vpop.f32.mrb[0].mxu0
        %1324 = vmatprep.mubr.f32.mxu0 0.0
        %1325 = vmatmul.mubr.f32.gmra.mrb[0].mxu0 %v1147
        %v1326 = vpop.f32.mrb[0].mxu0
        %v1327 = vadd.f32 0.0, %v1326
        %v1328 = vpop.f32.mrb[0].mxu0
        %1329 = vmatprep.mubr.f32.mxu0 0.0
        %1330 = vmatmul.mubr.f32.gmra.mrb[0].mxu0 %v1150
        %v1331 = vpop.f32.mrb[0].mxu0
        %v1332 = vadd.f32 0.0, %v1331
        %v1333 = vpop.f32.mrb[0].mxu0
        %1334 = vmatprep.mubr.f32.mxu0 0.0
        %1335 = vmatmul.mubr.f32.gmra.mrb[0].mxu0 %v1153
        %v1336 = vpop.f32.mrb[0].mxu0
        %v1337 = vadd.f32 0.0, %v1336
        %v1338 = vpop.f32.mrb[0].mxu0
        %1339 = vmatprep.mubr.f32.mxu0 0.0
        %1340 = vmatmul.mubr.f32.gmra.mrb[0].mxu0 %v1156
        %v1341 = vpop.f32.mrb[0].mxu0
        %v1342 = vadd.f32 0.0, %v1341
        %v1343 = vpop.f32.mrb[0].mxu0
        %1344 = vmatprep.mubr.f32.mxu0 0.0
        %1345 = vmatmul.mubr.f32.gmra.mrb[0].mxu0 %v1159
        %v1346 = vpop.f32.mrb[0].mxu0
        %v1347 = vadd.f32 0.0, %v1346
        %v1348 = vpop.f32.mrb[0].mxu0
        %1349 = vmatprep.mubr.f32.mxu0 0.0
        %1350 = vmatmul.mubr.f32.gmra.mrb[0].mxu0 %v1162
        %v1351 = vpop.f32.mrb[0].mxu0
        %v1352 = vadd.f32 0.0, %v1351
        %v1353 = vpop.f32.mrb[0].mxu0
        %1354 = vmatprep.mubr.f32.mxu0 0.0
        %1355 = vmatmul.mubr.f32.gmra.mrb[0].mxu0 %v1165
        %v1356 = vpop.f32.mrb[0].mxu0
        %v1357 = vadd.f32 0.0, %v1356
        %v1358 = vpop.f32.mrb[0].mxu0
        %1359 = vmatprep.mubr.f32.mxu0 0.0
        %1360 = vmatmul.mubr.f32.gmra.mrb[0].mxu0 %v1168
        %v1361 = vpop.f32.mrb[0].mxu0
        %v1362 = vadd.f32 0.0, %v1361
        %v1363 = vpop.f32.mrb[0].mxu0
        %1364 = vmatprep.mubr.f32.mxu0 0.0
        %1365 = vmatmul.mubr.f32.gmra.mrb[0].mxu0 %v1171
        %v1366 = vpop.f32.mrb[0].mxu0
        %v1367 = vadd.f32 0.0, %v1366
        %v1368 = vpop.f32.mrb[0].mxu0
        %1369 = vmatprep.mubr.f32.mxu0 0.0
        %1370 = vmatmul.mubr.f32.gmra.mrb[0].mxu0 %v1174
        %v1371 = vpop.f32.mrb[0].mxu0
        %v1372 = vadd.f32 0.0, %v1371
        %v1373 = vpop.f32.mrb[0].mxu0
        %1374 = vmatprep.mubr.f32.mxu0 0.0
        %1375 = vmatmul.mubr.f32.gmra.mrb[0].mxu0 %v1177
        %v1376 = vpop.f32.mrb[0].mxu0
        %v1377 = vadd.f32 0.0, %v1376
        %v1378 = vpop.f32.mrb[0].mxu0
        %1379 = vmatprep.mubr.f32.mxu0 0.0
        %1380 = vmatmul.mubr.f32.gmra.mrb[0].mxu0 %v1180
        %v1381 = vpop.f32.mrb[0].mxu0
        %v1382 = vadd.f32 0.0, %v1381
        %v1383 = vpop.f32.mrb[0].mxu0
        %1384 = vmatprep.mubr.f32.mxu0 0.0
        %1385 = vmatmul.mubr.f32.gmra.mrb[0].mxu0 %v1183
        %v1386 = vpop.f32.mrb[0].mxu0
        %v1387 = vadd.f32 0.0, %v1386
        %v1388 = vpop.f32.mrb[0].mxu0
        %1389 = vmatprep.mubr.f32.mxu0 0.0
        %1390 = vmatmul.mubr.f32.gmra.mrb[0].mxu0 %v1186
        %v1391 = vpop.f32.mrb[0].mxu0
        %v1392 = vadd.f32 0.0, %v1391
        %v1393 = vpop.f32.mrb[0].mxu0
        %1394 = vmatprep.mubr.f32.mxu0 0.0
        %1395 = vmatmul.mubr.f32.gmra.mrb[0].mxu0 %v1189
        %v1396 = vpop.f32.mrb[0].mxu0
        %v1397 = vadd.f32 0.0, %v1396
        %v1398 = vpop.f32.mrb[0].mxu0
        %1399 = vmatprep.mubr.f32.mxu0 0.0
        %1400 = vmatmul.mubr.f32.gmra.mrb[0].mxu0 %v1192
        %v1401 = vpop.f32.mrb[0].mxu0
        %v1402 = vadd.f32 0.0, %v1401
        %v1403 = vpop.f32.mrb[0].mxu0
        %1404 = vmatprep.mubr.f32.mxu0 0.0
        %1405 = vmatmul.mubr.f32.gmra.mrb[0].mxu0 %v1195
        %v1406 = vpop.f32.mrb[0].mxu0
        %v1407 = vadd.f32 0.0, %v1406
        %v1408 = vpop.f32.mrb[0].mxu0
        %1409 = vmatprep.mubr.f32.mxu0 0.0
        %1410 = vmatmul.mubr.f32.gmra.mrb[0].mxu0 %v1198
        %v1411 = vpop.f32.mrb[0].mxu0
        %v1412 = vadd.f32 0.0, %v1411
        %v1413 = vpop.f32.mrb[0].mxu0
        %1414 = vmatprep.mubr.f32.mxu0 0.0
        %1415 = vmatmul.mubr.f32.gmra.mrb[0].mxu0 %v1201
        %v1416 = vpop.f32.mrb[0].mxu0
        %v1417 = vadd.f32 0.0, %v1416
        %v1418 = vpop.f32.mrb[0].mxu0
        %1419 = vmatprep.mubr.f32.mxu0 0.0
        %1420 = vmatmul.mubr.f32.gmra.mrb[0].mxu0 %v1204
        %v1421 = vpop.f32.mrb[0].mxu0
        %v1422 = vadd.f32 0.0, %v1421
        %v1423 = vpop.f32.mrb[0].mxu0
        %1424 = vmatprep.mubr.f32.mxu0 0.0
        %1425 = vmatmul.mubr.f32.gmra.mrb[0].mxu0 %v1207
        %v1426 = vpop.f32.mrb[0].mxu0
        %v1427 = vadd.f32 0.0, %v1426
        %v1428 = vpop.f32.mrb[0].mxu0
        %1429 = vmatprep.mubr.f32.mxu0 0.0
        %1430 = vmatmul.mubr.f32.gmra.mrb[0].mxu0 %v1210
        %v1431 = vpop.f32.mrb[0].mxu0
        %v1432 = vadd.f32 0.0, %v1431
        %v1433 = vpop.f32.mrb[0].mxu0
        %1434 = vmatprep.mubr.f32.mxu0 0.0
        %1435 = vmatmul.mubr.f32.gmra.mrb[0].mxu0 %v1213
        %v1436 = vpop.f32.mrb[0].mxu0
        %v1437 = vadd.f32 0.0, %v1436
        %v1438 = vpop.f32.mrb[0].mxu0
        %1439 = vdwg.mxu0
        %v1440 = vld [vmem:[#allocation2] sm:$0xff]
        %v1441 = vld [vmem:[#allocation2 + $0x8] sm:$0xff]
        %v1442 = vld [vmem:[#allocation2 + $0x10] sm:$0xff]
        %v1443 = vld [vmem:[#allocation2 + $0x18] sm:$0xff]
        %v1444 = vld [vmem:[#allocation2 + $0x20] sm:$0xff]
        %v1445 = vld [vmem:[#allocation2 + $0x28] sm:$0xff]
        %v1446 = vld [vmem:[#allocation2 + $0x30] sm:$0xff]
        %v1447 = vld [vmem:[#allocation2 + $0x38] sm:$0xff]
        %v1448 = vld [vmem:[#allocation2 + $0x40] sm:$0xff]
        %v1449 = vld [vmem:[#allocation2 + $0x48] sm:$0xff]
        %v1450 = vld [vmem:[#allocation2 + $0x50] sm:$0xff]
        %v1451 = vld [vmem:[#allocation2 + $0x58] sm:$0xff]
        %v1452 = vld [vmem:[#allocation2 + $0x60] sm:$0xff]
        %v1453 = vld [vmem:[#allocation2 + $0x68] sm:$0xff]
        %v1454 = vld [vmem:[#allocation2 + $0x70] sm:$0xff]
        %v1455 = vld [vmem:[#allocation2 + $0x78] sm:$0xff]
        %v1456 = vld [vmem:[#allocation2 + $0x80] sm:$0xff]
        %v1457 = vld [vmem:[#allocation2 + $0x88] sm:$0xff]
        %v1458 = vld [vmem:[#allocation2 + $0x90] sm:$0xff]
        %v1459 = vld [vmem:[#allocation2 + $0x98] sm:$0xff]
        %v1460 = vld [vmem:[#allocation2 + $0xa0] sm:$0xff]
        %v1461 = vld [vmem:[#allocation2 + $0xa8] sm:$0xff]
        %v1462 = vld [vmem:[#allocation2 + $0xb0] sm:$0xff]
        %v1463 = vld [vmem:[#allocation2 + $0xb8] sm:$0xff]
        %v1464 = vld [vmem:[#allocation2 + $0xc0] sm:$0xff]
        %v1465 = vld [vmem:[#allocation2 + $0xc8] sm:$0xff]
        %v1466 = vld [vmem:[#allocation2 + $0xd0] sm:$0xff]
        %v1467 = vld [vmem:[#allocation2 + $0xd8] sm:$0xff]
        %v1468 = vld [vmem:[#allocation2 + $0xe0] sm:$0xff]
        %v1469 = vld [vmem:[#allocation2 + $0xe8] sm:$0xff]
        %v1470 = vld [vmem:[#allocation2 + $0xf0] sm:$0xff]
        %v1471 = vld [vmem:[#allocation2 + $0xf8] sm:$0xff]
        %v1472 = vadd.f32 %v1440, %v1282
        %v1473 = vadd.f32 %v1441, %v1287
        %v1474 = vadd.f32 %v1442, %v1292
        %v1475 = vadd.f32 %v1443, %v1297
        %v1476 = vadd.f32 %v1444, %v1302
        %v1477 = vadd.f32 %v1445, %v1307
        %v1478 = vadd.f32 %v1446, %v1312
        %v1479 = vadd.f32 %v1447, %v1317
        %v1480 = vadd.f32 %v1448, %v1322
        %v1481 = vadd.f32 %v1449, %v1327
        %v1482 = vadd.f32 %v1450, %v1332
        %v1483 = vadd.f32 %v1451, %v1337
        %v1484 = vadd.f32 %v1452, %v1342
        %v1485 = vadd.f32 %v1453, %v1347
        %v1486 = vadd.f32 %v1454, %v1352
        %v1487 = vadd.f32 %v1455, %v1357
        %v1488 = vadd.f32 %v1456, %v1362
        %v1489 = vadd.f32 %v1457, %v1367
        %v1490 = vadd.f32 %v1458, %v1372
        %v1491 = vadd.f32 %v1459, %v1377
        %v1492 = vadd.f32 %v1460, %v1382
        %v1493 = vadd.f32 %v1461, %v1387
        %v1494 = vadd.f32 %v1462, %v1392
        %v1495 = vadd.f32 %v1463, %v1397
        %v1496 = vadd.f32 %v1464, %v1402
        %v1497 = vadd.f32 %v1465, %v1407
        %v1498 = vadd.f32 %v1466, %v1412
        %v1499 = vadd.f32 %v1467, %v1417
        %v1500 = vadd.f32 %v1468, %v1422
        %v1501 = vadd.f32 %v1469, %v1427
        %v1502 = vadd.f32 %v1470, %v1432
        %v1503 = vadd.f32 %v1471, %v1437
        %1504 = vst [vmem:[#allocation2] sm:$0xff] %v1472
        %1505 = vst [vmem:[#allocation2 + $0x8] sm:$0xff] %v1473
        %1506 = vst [vmem:[#allocation2 + $0x10] sm:$0xff] %v1474
        %1507 = vst [vmem:[#allocation2 + $0x18] sm:$0xff] %v1475
        %1508 = vst [vmem:[#allocation2 + $0x20] sm:$0xff] %v1476
        %1509 = vst [vmem:[#allocation2 + $0x28] sm:$0xff] %v1477
        %1510 = vst [vmem:[#allocation2 + $0x30] sm:$0xff] %v1478
        %1511 = vst [vmem:[#allocation2 + $0x38] sm:$0xff] %v1479
        %1512 = vst [vmem:[#allocation2 + $0x40] sm:$0xff] %v1480
        %1513 = vst [vmem:[#allocation2 + $0x48] sm:$0xff] %v1481
        %1514 = vst [vmem:[#allocation2 + $0x50] sm:$0xff] %v1482
        %1515 = vst [vmem:[#allocation2 + $0x58] sm:$0xff] %v1483
        %1516 = vst [vmem:[#allocation2 + $0x60] sm:$0xff] %v1484
        %1517 = vst [vmem:[#allocation2 + $0x68] sm:$0xff] %v1485
        %1518 = vst [vmem:[#allocation2 + $0x70] sm:$0xff] %v1486
        %1519 = vst [vmem:[#allocation2 + $0x78] sm:$0xff] %v1487
        %1520 = vst [vmem:[#allocation2 + $0x80] sm:$0xff] %v1488
        %1521 = vst [vmem:[#allocation2 + $0x88] sm:$0xff] %v1489
        %1522 = vst [vmem:[#allocation2 + $0x90] sm:$0xff] %v1490
        %1523 = vst [vmem:[#allocation2 + $0x98] sm:$0xff] %v1491
        %1524 = vst [vmem:[#allocation2 + $0xa0] sm:$0xff] %v1492
        %1525 = vst [vmem:[#allocation2 + $0xa8] sm:$0xff] %v1493
        %1526 = vst [vmem:[#allocation2 + $0xb0] sm:$0xff] %v1494
        %1527 = vst [vmem:[#allocation2 + $0xb8] sm:$0xff] %v1495
        %1528 = vst [vmem:[#allocation2 + $0xc0] sm:$0xff] %v1496
        %1529 = vst [vmem:[#allocation2 + $0xc8] sm:$0xff] %v1497
        %1530 = vst [vmem:[#allocation2 + $0xd0] sm:$0xff] %v1498
        %1531 = vst [vmem:[#allocation2 + $0xd8] sm:$0xff] %v1499
        %1532 = vst [vmem:[#allocation2 + $0xe0] sm:$0xff] %v1500
        %1533 = vst [vmem:[#allocation2 + $0xe8] sm:$0xff] %v1501
        %1534 = vst [vmem:[#allocation2 + $0xf0] sm:$0xff] %v1502
        %1535 = vst [vmem:[#allocation2 + $0xf8] sm:$0xff] %v1503
        %v1536 = vld [vmem:[%s248 + $0x2] sm:$0xff]
        %v1537 = vld [vmem:[%s248 + $0xa] sm:$0xff]
        %v1538 = vld [vmem:[%s248 + $0x12] sm:$0xff]
        %v1539 = vld [vmem:[%s248 + $0x1a] sm:$0xff]
        %v1540 = vld [vmem:[%s248 + $0x22] sm:$0xff]
        %v1541 = vld [vmem:[%s248 + $0x2a] sm:$0xff]
        %v1542 = vld [vmem:[%s248 + $0x32] sm:$0xff]
        %v1543 = vld [vmem:[%s248 + $0x3a] sm:$0xff]
        %v1544 = vld [vmem:[%s248 + $0x42] sm:$0xff]
        %v1545 = vld [vmem:[%s248 + $0x4a] sm:$0xff]
        %v1546 = vld [vmem:[%s248 + $0x52] sm:$0xff]
        %v1547 = vld [vmem:[%s248 + $0x5a] sm:$0xff]
        %v1548 = vld [vmem:[%s248 + $0x62] sm:$0xff]
        %v1549 = vld [vmem:[%s248 + $0x6a] sm:$0xff]
        %v1550 = vld [vmem:[%s248 + $0x72] sm:$0xff]
        %v1551 = vld [vmem:[%s248 + $0x7a] sm:$0xff]
        %v1552 = vld [vmem:[%s248 + $0x82] sm:$0xff]
        %v1553 = vld [vmem:[%s248 + $0x8a] sm:$0xff]
        %v1554 = vld [vmem:[%s248 + $0x92] sm:$0xff]
        %v1555 = vld [vmem:[%s248 + $0x9a] sm:$0xff]
        %v1556 = vld [vmem:[%s248 + $0xa2] sm:$0xff]
        %v1557 = vld [vmem:[%s248 + $0xaa] sm:$0xff]
        %v1558 = vld [vmem:[%s248 + $0xb2] sm:$0xff]
        %v1559 = vld [vmem:[%s248 + $0xba] sm:$0xff]
        %v1560 = vld [vmem:[%s248 + $0xc2] sm:$0xff]
        %v1561 = vld [vmem:[%s248 + $0xca] sm:$0xff]
        %v1562 = vld [vmem:[%s248 + $0xd2] sm:$0xff]
        %v1563 = vld [vmem:[%s248 + $0xda] sm:$0xff]
        %v1564 = vld [vmem:[%s248 + $0xe2] sm:$0xff]
        %v1565 = vld [vmem:[%s248 + $0xea] sm:$0xff]
        %v1566 = vld [vmem:[%s248 + $0xf2] sm:$0xff]
        %v1567 = vld [vmem:[%s248 + $0xfa] sm:$0xff]
        %s1568 = scalar_lea.vmem %s1, 512
        %v1569 = vld [vmem:[%s1568] sm:$0xff]
        %v1570 = vld [vmem:[%s1568 + $0x8] sm:$0xff]
        %v1571 = vld [vmem:[%s1568 + $0x10] sm:$0xff]
        %v1572 = vld [vmem:[%s1568 + $0x18] sm:$0xff]
        %v1573 = vld [vmem:[%s1568 + $0x20] sm:$0xff]
        %v1574 = vld [vmem:[%s1568 + $0x28] sm:$0xff]
        %v1575 = vld [vmem:[%s1568 + $0x30] sm:$0xff]
        %v1576 = vld [vmem:[%s1568 + $0x38] sm:$0xff]
        %v1577 = vld [vmem:[%s1568 + $0x40] sm:$0xff]
        %v1578 = vld [vmem:[%s1568 + $0x48] sm:$0xff]
        %v1579 = vld [vmem:[%s1568 + $0x50] sm:$0xff]
        %v1580 = vld [vmem:[%s1568 + $0x58] sm:$0xff]
        %v1581 = vld [vmem:[%s1568 + $0x60] sm:$0xff]
        %v1582 = vld [vmem:[%s1568 + $0x68] sm:$0xff]
        %v1583 = vld [vmem:[%s1568 + $0x70] sm:$0xff]
        %v1584 = vld [vmem:[%s1568 + $0x78] sm:$0xff]
        %v1585 = vld [vmem:[%s1568 + $0x80] sm:$0xff]
        %v1586 = vld [vmem:[%s1568 + $0x88] sm:$0xff]
        %v1587 = vld [vmem:[%s1568 + $0x90] sm:$0xff]
        %v1588 = vld [vmem:[%s1568 + $0x98] sm:$0xff]
        %v1589 = vld [vmem:[%s1568 + $0xa0] sm:$0xff]
        %v1590 = vld [vmem:[%s1568 + $0xa8] sm:$0xff]
        %v1591 = vld [vmem:[%s1568 + $0xb0] sm:$0xff]
        %v1592 = vld [vmem:[%s1568 + $0xb8] sm:$0xff]
        %v1593 = vld [vmem:[%s1568 + $0xc0] sm:$0xff]
        %v1594 = vld [vmem:[%s1568 + $0xc8] sm:$0xff]
        %v1595 = vld [vmem:[%s1568 + $0xd0] sm:$0xff]
        %v1596 = vld [vmem:[%s1568 + $0xd8] sm:$0xff]
        %v1597 = vld [vmem:[%s1568 + $0xe0] sm:$0xff]
        %v1598 = vld [vmem:[%s1568 + $0xe8] sm:$0xff]
        %v1599 = vld [vmem:[%s1568 + $0xf0] sm:$0xff]
        %v1600 = vld [vmem:[%s1568 + $0xf8] sm:$0xff]
        %1602 = vset.pattern.permute.xlu0 0
        %1603 = vperm.xlu0 %1602, %v1569
        %v1604 = vpop.permute.xlu0 %1603
        %1607 = vset.pattern.permute.xlu0 0
        %1608 = vperm.xlu0 %1607, %v1570
        %v1609 = vpop.permute.xlu0 %1608
        %1612 = vset.pattern.permute.xlu0 0
        %1613 = vperm.xlu0 %1612, %v1571
        %v1614 = vpop.permute.xlu0 %1613
        %1617 = vset.pattern.permute.xlu0 0
        %1618 = vperm.xlu0 %1617, %v1572
        %v1619 = vpop.permute.xlu0 %1618
        %1622 = vset.pattern.permute.xlu0 0
        %1623 = vperm.xlu0 %1622, %v1573
        %v1624 = vpop.permute.xlu0 %1623
        %1627 = vset.pattern.permute.xlu0 0
        %1628 = vperm.xlu0 %1627, %v1574
        %v1629 = vpop.permute.xlu0 %1628
        %1632 = vset.pattern.permute.xlu0 0
        %1633 = vperm.xlu0 %1632, %v1575
        %v1634 = vpop.permute.xlu0 %1633
        %1637 = vset.pattern.permute.xlu0 0
        %1638 = vperm.xlu0 %1637, %v1576
        %v1639 = vpop.permute.xlu0 %1638
        %1642 = vset.pattern.permute.xlu0 0
        %1643 = vperm.xlu0 %1642, %v1577
        %v1644 = vpop.permute.xlu0 %1643
        %1647 = vset.pattern.permute.xlu0 0
        %1648 = vperm.xlu0 %1647, %v1578
        %v1649 = vpop.permute.xlu0 %1648
        %1652 = vset.pattern.permute.xlu0 0
        %1653 = vperm.xlu0 %1652, %v1579
        %v1654 = vpop.permute.xlu0 %1653
        %1657 = vset.pattern.permute.xlu0 0
        %1658 = vperm.xlu0 %1657, %v1580
        %v1659 = vpop.permute.xlu0 %1658
        %1662 = vset.pattern.permute.xlu0 0
        %1663 = vperm.xlu0 %1662, %v1581
        %v1664 = vpop.permute.xlu0 %1663
        %1667 = vset.pattern.permute.xlu0 0
        %1668 = vperm.xlu0 %1667, %v1582
        %v1669 = vpop.permute.xlu0 %1668
        %1672 = vset.pattern.permute.xlu0 0
        %1673 = vperm.xlu0 %1672, %v1583
        %v1674 = vpop.permute.xlu0 %1673
        %1677 = vset.pattern.permute.xlu0 0
        %1678 = vperm.xlu0 %1677, %v1584
        %v1679 = vpop.permute.xlu0 %1678
        %1682 = vset.pattern.permute.xlu0 0
        %1683 = vperm.xlu0 %1682, %v1585
        %v1684 = vpop.permute.xlu0 %1683
        %1687 = vset.pattern.permute.xlu0 0
        %1688 = vperm.xlu0 %1687, %v1586
        %v1689 = vpop.permute.xlu0 %1688
        %1692 = vset.pattern.permute.xlu0 0
        %1693 = vperm.xlu0 %1692, %v1587
        %v1694 = vpop.permute.xlu0 %1693
        %1697 = vset.pattern.permute.xlu0 0
        %1698 = vperm.xlu0 %1697, %v1588
        %v1699 = vpop.permute.xlu0 %1698
        %1702 = vset.pattern.permute.xlu0 0
        %1703 = vperm.xlu0 %1702, %v1589
        %v1704 = vpop.permute.xlu0 %1703
        %1707 = vset.pattern.permute.xlu0 0
        %1708 = vperm.xlu0 %1707, %v1590
        %v1709 = vpop.permute.xlu0 %1708
        %1712 = vset.pattern.permute.xlu0 0
        %1713 = vperm.xlu0 %1712, %v1591
        %v1714 = vpop.permute.xlu0 %1713
        %1717 = vset.pattern.permute.xlu0 0
        %1718 = vperm.xlu0 %1717, %v1592
        %v1719 = vpop.permute.xlu0 %1718
        %1722 = vset.pattern.permute.xlu0 0
        %1723 = vperm.xlu0 %1722, %v1593
        %v1724 = vpop.permute.xlu0 %1723
        %1727 = vset.pattern.permute.xlu0 0
        %1728 = vperm.xlu0 %1727, %v1594
        %v1729 = vpop.permute.xlu0 %1728
        %1732 = vset.pattern.permute.xlu0 0
        %1733 = vperm.xlu0 %1732, %v1595
        %v1734 = vpop.permute.xlu0 %1733
        %1737 = vset.pattern.permute.xlu0 0
        %1738 = vperm.xlu0 %1737, %v1596
        %v1739 = vpop.permute.xlu0 %1738
        %1742 = vset.pattern.permute.xlu0 0
        %1743 = vperm.xlu0 %1742, %v1597
        %v1744 = vpop.permute.xlu0 %1743
        %1747 = vset.pattern.permute.xlu0 0
        %1748 = vperm.xlu0 %1747, %v1598
        %v1749 = vpop.permute.xlu0 %1748
        %1752 = vset.pattern.permute.xlu0 0
        %1753 = vperm.xlu0 %1752, %v1599
        %v1754 = vpop.permute.xlu0 %1753
        %1757 = vset.pattern.permute.xlu0 0
        %1758 = vperm.xlu0 %1757, %v1600
        %v1759 = vpop.permute.xlu0 %1758
        %v1761 = vmul.f32 %v1536, %v1604
        %v1762 = vmul.f32 %v1537, %v1609
        %v1763 = vmul.f32 %v1538, %v1614
        %v1764 = vmul.f32 %v1539, %v1619
        %v1765 = vmul.f32 %v1540, %v1624
        %v1766 = vmul.f32 %v1541, %v1629
        %v1767 = vmul.f32 %v1542, %v1634
        %v1768 = vmul.f32 %v1543, %v1639
        %v1769 = vmul.f32 %v1544, %v1644
        %v1770 = vmul.f32 %v1545, %v1649
        %v1771 = vmul.f32 %v1546, %v1654
        %v1772 = vmul.f32 %v1547, %v1659
        %v1773 = vmul.f32 %v1548, %v1664
        %v1774 = vmul.f32 %v1549, %v1669
        %v1775 = vmul.f32 %v1550, %v1674
        %v1776 = vmul.f32 %v1551, %v1679
        %v1777 = vmul.f32 %v1552, %v1684
        %v1778 = vmul.f32 %v1553, %v1689
        %v1779 = vmul.f32 %v1554, %v1694
        %v1780 = vmul.f32 %v1555, %v1699
        %v1781 = vmul.f32 %v1556, %v1704
        %v1782 = vmul.f32 %v1557, %v1709
        %v1783 = vmul.f32 %v1558, %v1714
        %v1784 = vmul.f32 %v1559, %v1719
        %v1785 = vmul.f32 %v1560, %v1724
        %v1786 = vmul.f32 %v1561, %v1729
        %v1787 = vmul.f32 %v1562, %v1734
        %v1788 = vmul.f32 %v1563, %v1739
        %v1789 = vmul.f32 %v1564, %v1744
        %v1790 = vmul.f32 %v1565, %v1749
        %v1791 = vmul.f32 %v1566, %v1754
        %v1792 = vmul.f32 %v1567, %v1759
        %s1793 = scalar_lea.vmem %s2, 16
        %v1794 = vld [vmem:[%s1793] sm:$0xff]
        %v1796 = vsel %vm506, %v1761, 0
        %v1799 = vsel %vm506, %v1762, 0
        %v1802 = vsel %vm506, %v1763, 0
        %v1805 = vsel %vm506, %v1764, 0
        %v1808 = vsel %vm506, %v1765, 0
        %v1811 = vsel %vm506, %v1766, 0
        %v1814 = vsel %vm506, %v1767, 0
        %v1817 = vsel %vm506, %v1768, 0
        %v1820 = vsel %vm506, %v1769, 0
        %v1823 = vsel %vm506, %v1770, 0
        %v1826 = vsel %vm506, %v1771, 0
        %v1829 = vsel %vm506, %v1772, 0
        %v1832 = vsel %vm506, %v1773, 0
        %v1835 = vsel %vm506, %v1774, 0
        %v1838 = vsel %vm506, %v1775, 0
        %v1841 = vsel %vm506, %v1776, 0
        %v1844 = vsel %vm506, %v1777, 0
        %v1847 = vsel %vm506, %v1778, 0
        %v1850 = vsel %vm506, %v1779, 0
        %v1853 = vsel %vm506, %v1780, 0
        %v1856 = vsel %vm506, %v1781, 0
        %v1859 = vsel %vm506, %v1782, 0
        %v1862 = vsel %vm506, %v1783, 0
        %v1865 = vsel %vm506, %v1784, 0
        %v1868 = vsel %vm506, %v1785, 0
        %v1871 = vsel %vm506, %v1786, 0
        %v1874 = vsel %vm506, %v1787, 0
        %v1877 = vsel %vm506, %v1788, 0
        %v1880 = vsel %vm506, %v1789, 0
        %v1883 = vsel %vm506, %v1790, 0
        %v1886 = vsel %vm506, %v1791, 0
        %v1889 = vsel %vm506, %v1792, 0
        %1891 = vmatprep.subr.mxu0 0.0
        %1892 = vmatpush1.msra.mxu0 %v1794
        %1893 = vmatprep.subr.mxu0 0.0
        %1894 = vmatpush1.msra.mxu0 0.0
        %1895 = vmatprep.subr.mxu0 0.0
        %1896 = vmatpush1.msra.mxu0 0.0
        %1897 = vmatprep.subr.mxu0 0.0
        %1898 = vmatpush1.msra.mxu0 0.0
        %1899 = vmatprep.subr.mxu0 0.0
        %1900 = vmatpush1.msra.mxu0 0.0
        %1901 = vmatprep.subr.mxu0 0.0
        %1902 = vmatpush1.msra.mxu0 0.0
        %1903 = vmatprep.subr.mxu0 0.0
        %1904 = vmatpush1.msra.mxu0 0.0
        %1905 = vmatprep.subr.mxu0 0.0
        %1906 = vmatpush1.msra.mxu0 0.0
        %1907 = vmatprep.subr.mxu0 0.0
        %1908 = vmatpush1.msra.mxu0 0.0
        %1909 = vmatprep.subr.mxu0 0.0
        %1910 = vmatpush1.msra.mxu0 0.0
        %1911 = vmatprep.subr.mxu0 0.0
        %1912 = vmatpush1.msra.mxu0 0.0
        %1913 = vmatprep.subr.mxu0 0.0
        %1914 = vmatpush1.msra.mxu0 0.0
        %1915 = vmatprep.subr.mxu0 0.0
        %1916 = vmatpush1.msra.mxu0 0.0
        %1917 = vmatprep.subr.mxu0 0.0
        %1918 = vmatpush1.msra.mxu0 0.0
        %1919 = vmatprep.subr.mxu0 0.0
        %1920 = vmatpush1.msra.mxu0 0.0
        %1921 = vmatprep.subr.mxu0 0.0
        %1922 = vmatpush1.msra.mxu0 0.0
        %1923 = vmatprep.subr.mxu0 0.0
        %1924 = vmatpush1.msra.mxu0 0.0
        %1925 = vmatprep.subr.mxu0 0.0
        %1926 = vmatpush1.msra.mxu0 0.0
        %1927 = vmatprep.subr.mxu0 0.0
        %1928 = vmatpush1.msra.mxu0 0.0
        %1929 = vmatprep.subr.mxu0 0.0
        %1930 = vmatpush1.msra.mxu0 0.0
        %1931 = vmatprep.subr.mxu0 0.0
        %1932 = vmatpush1.msra.mxu0 0.0
        %1933 = vmatprep.subr.mxu0 0.0
        %1934 = vmatpush1.msra.mxu0 0.0
        %1935 = vmatprep.subr.mxu0 0.0
        %1936 = vmatpush1.msra.mxu0 0.0
        %1937 = vmatprep.subr.mxu0 0.0
        %1938 = vmatpush1.msra.mxu0 0.0
        %1939 = vmatprep.subr.mxu0 0.0
        %1940 = vmatpush1.msra.mxu0 0.0
        %1941 = vmatprep.subr.mxu0 0.0
        %1942 = vmatpush1.msra.mxu0 0.0
        %1943 = vmatprep.subr.mxu0 0.0
        %1944 = vmatpush1.msra.mxu0 0.0
        %1945 = vmatprep.subr.mxu0 0.0
        %1946 = vmatpush1.msra.mxu0 0.0
        %1947 = vmatprep.subr.mxu0 0.0
        %1948 = vmatpush1.msra.mxu0 0.0
        %1949 = vmatprep.subr.mxu0 0.0
        %1950 = vmatpush1.msra.mxu0 0.0
        %1951 = vmatprep.subr.mxu0 0.0
        %1952 = vmatpush1.msra.mxu0 0.0
        %1953 = vmatprep.subr.mxu0 0.0
        %1954 = vmatpush1.msra.mxu0 0.0
        %1955 = vmatprep.mubr.f32.mxu0 0.0
        %1956 = vmatmul.mubr.f32.gmra.mrb[0].mxu0 %v1796
        %v1957 = vpop.f32.mrb[0].mxu0
        %v1958 = vadd.f32 0.0, %v1957
        %v1959 = vpop.f32.mrb[0].mxu0
        %1960 = vmatprep.mubr.f32.mxu0 0.0
        %1961 = vmatmul.mubr.f32.gmra.mrb[0].mxu0 %v1799
        %v1962 = vpop.f32.mrb[0].mxu0
        %v1963 = vadd.f32 0.0, %v1962
        %v1964 = vpop.f32.mrb[0].mxu0
        %1965 = vmatprep.mubr.f32.mxu0 0.0
        %1966 = vmatmul.mubr.f32.gmra.mrb[0].mxu0 %v1802
        %v1967 = vpop.f32.mrb[0].mxu0
        %v1968 = vadd.f32 0.0, %v1967
        %v1969 = vpop.f32.mrb[0].mxu0
        %1970 = vmatprep.mubr.f32.mxu0 0.0
        %1971 = vmatmul.mubr.f32.gmra.mrb[0].mxu0 %v1805
        %v1972 = vpop.f32.mrb[0].mxu0
        %v1973 = vadd.f32 0.0, %v1972
        %v1974 = vpop.f32.mrb[0].mxu0
        %1975 = vmatprep.mubr.f32.mxu0 0.0
        %1976 = vmatmul.mubr.f32.gmra.mrb[0].mxu0 %v1808
        %v1977 = vpop.f32.mrb[0].mxu0
        %v1978 = vadd.f32 0.0, %v1977
        %v1979 = vpop.f32.mrb[0].mxu0
        %1980 = vmatprep.mubr.f32.mxu0 0.0
        %1981 = vmatmul.mubr.f32.gmra.mrb[0].mxu0 %v1811
        %v1982 = vpop.f32.mrb[0].mxu0
        %v1983 = vadd.f32 0.0, %v1982
        %v1984 = vpop.f32.mrb[0].mxu0
        %1985 = vmatprep.mubr.f32.mxu0 0.0
        %1986 = vmatmul.mubr.f32.gmra.mrb[0].mxu0 %v1814
        %v1987 = vpop.f32.mrb[0].mxu0
        %v1988 = vadd.f32 0.0, %v1987
        %v1989 = vpop.f32.mrb[0].mxu0
        %1990 = vmatprep.mubr.f32.mxu0 0.0
        %1991 = vmatmul.mubr.f32.gmra.mrb[0].mxu0 %v1817
        %v1992 = vpop.f32.mrb[0].mxu0
        %v1993 = vadd.f32 0.0, %v1992
        %v1994 = vpop.f32.mrb[0].mxu0
        %1995 = vmatprep.mubr.f32.mxu0 0.0
        %1996 = vmatmul.mubr.f32.gmra.mrb[0].mxu0 %v1820
        %v1997 = vpop.f32.mrb[0].mxu0
        %v1998 = vadd.f32 0.0, %v1997
        %v1999 = vpop.f32.mrb[0].mxu0
        %2000 = vmatprep.mubr.f32.mxu0 0.0
        %2001 = vmatmul.mubr.f32.gmra.mrb[0].mxu0 %v1823
        %v2002 = vpop.f32.mrb[0].mxu0
        %v2003 = vadd.f32 0.0, %v2002
        %v2004 = vpop.f32.mrb[0].mxu0
        %2005 = vmatprep.mubr.f32.mxu0 0.0
        %2006 = vmatmul.mubr.f32.gmra.mrb[0].mxu0 %v1826
        %v2007 = vpop.f32.mrb[0].mxu0
        %v2008 = vadd.f32 0.0, %v2007
        %v2009 = vpop.f32.mrb[0].mxu0
        %2010 = vmatprep.mubr.f32.mxu0 0.0
        %2011 = vmatmul.mubr.f32.gmra.mrb[0].mxu0 %v1829
        %v2012 = vpop.f32.mrb[0].mxu0
        %v2013 = vadd.f32 0.0, %v2012
        %v2014 = vpop.f32.mrb[0].mxu0
        %2015 = vmatprep.mubr.f32.mxu0 0.0
        %2016 = vmatmul.mubr.f32.gmra.mrb[0].mxu0 %v1832
        %v2017 = vpop.f32.mrb[0].mxu0
        %v2018 = vadd.f32 0.0, %v2017
        %v2019 = vpop.f32.mrb[0].mxu0
        %2020 = vmatprep.mubr.f32.mxu0 0.0
        %2021 = vmatmul.mubr.f32.gmra.mrb[0].mxu0 %v1835
        %v2022 = vpop.f32.mrb[0].mxu0
        %v2023 = vadd.f32 0.0, %v2022
        %v2024 = vpop.f32.mrb[0].mxu0
        %2025 = vmatprep.mubr.f32.mxu0 0.0
        %2026 = vmatmul.mubr.f32.gmra.mrb[0].mxu0 %v1838
        %v2027 = vpop.f32.mrb[0].mxu0
        %v2028 = vadd.f32 0.0, %v2027
        %v2029 = vpop.f32.mrb[0].mxu0
        %2030 = vmatprep.mubr.f32.mxu0 0.0
        %2031 = vmatmul.mubr.f32.gmra.mrb[0].mxu0 %v1841
        %v2032 = vpop.f32.mrb[0].mxu0
        %v2033 = vadd.f32 0.0, %v2032
        %v2034 = vpop.f32.mrb[0].mxu0
        %2035 = vmatprep.mubr.f32.mxu0 0.0
        %2036 = vmatmul.mubr.f32.gmra.mrb[0].mxu0 %v1844
        %v2037 = vpop.f32.mrb[0].mxu0
        %v2038 = vadd.f32 0.0, %v2037
        %v2039 = vpop.f32.mrb[0].mxu0
        %2040 = vmatprep.mubr.f32.mxu0 0.0
        %2041 = vmatmul.mubr.f32.gmra.mrb[0].mxu0 %v1847
        %v2042 = vpop.f32.mrb[0].mxu0
        %v2043 = vadd.f32 0.0, %v2042
        %v2044 = vpop.f32.mrb[0].mxu0
        %2045 = vmatprep.mubr.f32.mxu0 0.0
        %2046 = vmatmul.mubr.f32.gmra.mrb[0].mxu0 %v1850
        %v2047 = vpop.f32.mrb[0].mxu0
        %v2048 = vadd.f32 0.0, %v2047
        %v2049 = vpop.f32.mrb[0].mxu0
        %2050 = vmatprep.mubr.f32.mxu0 0.0
        %2051 = vmatmul.mubr.f32.gmra.mrb[0].mxu0 %v1853
        %v2052 = vpop.f32.mrb[0].mxu0
        %v2053 = vadd.f32 0.0, %v2052
        %v2054 = vpop.f32.mrb[0].mxu0
        %2055 = vmatprep.mubr.f32.mxu0 0.0
        %2056 = vmatmul.mubr.f32.gmra.mrb[0].mxu0 %v1856
        %v2057 = vpop.f32.mrb[0].mxu0
        %v2058 = vadd.f32 0.0, %v2057
        %v2059 = vpop.f32.mrb[0].mxu0
        %2060 = vmatprep.mubr.f32.mxu0 0.0
        %2061 = vmatmul.mubr.f32.gmra.mrb[0].mxu0 %v1859
        %v2062 = vpop.f32.mrb[0].mxu0
        %v2063 = vadd.f32 0.0, %v2062
        %v2064 = vpop.f32.mrb[0].mxu0
        %2065 = vmatprep.mubr.f32.mxu0 0.0
        %2066 = vmatmul.mubr.f32.gmra.mrb[0].mxu0 %v1862
        %v2067 = vpop.f32.mrb[0].mxu0
        %v2068 = vadd.f32 0.0, %v2067
        %v2069 = vpop.f32.mrb[0].mxu0
        %2070 = vmatprep.mubr.f32.mxu0 0.0
        %2071 = vmatmul.mubr.f32.gmra.mrb[0].mxu0 %v1865
        %v2072 = vpop.f32.mrb[0].mxu0
        %v2073 = vadd.f32 0.0, %v2072
        %v2074 = vpop.f32.mrb[0].mxu0
        %2075 = vmatprep.mubr.f32.mxu0 0.0
        %2076 = vmatmul.mubr.f32.gmra.mrb[0].mxu0 %v1868
        %v2077 = vpop.f32.mrb[0].mxu0
        %v2078 = vadd.f32 0.0, %v2077
        %v2079 = vpop.f32.mrb[0].mxu0
        %2080 = vmatprep.mubr.f32.mxu0 0.0
        %2081 = vmatmul.mubr.f32.gmra.mrb[0].mxu0 %v1871
        %v2082 = vpop.f32.mrb[0].mxu0
        %v2083 = vadd.f32 0.0, %v2082
        %v2084 = vpop.f32.mrb[0].mxu0
        %2085 = vmatprep.mubr.f32.mxu0 0.0
        %2086 = vmatmul.mubr.f32.gmra.mrb[0].mxu0 %v1874
        %v2087 = vpop.f32.mrb[0].mxu0
        %v2088 = vadd.f32 0.0, %v2087
        %v2089 = vpop.f32.mrb[0].mxu0
        %2090 = vmatprep.mubr.f32.mxu0 0.0
        %2091 = vmatmul.mubr.f32.gmra.mrb[0].mxu0 %v1877
        %v2092 = vpop.f32.mrb[0].mxu0
        %v2093 = vadd.f32 0.0, %v2092
        %v2094 = vpop.f32.mrb[0].mxu0
        %2095 = vmatprep.mubr.f32.mxu0 0.0
        %2096 = vmatmul.mubr.f32.gmra.mrb[0].mxu0 %v1880
        %v2097 = vpop.f32.mrb[0].mxu0
        %v2098 = vadd.f32 0.0, %v2097
        %v2099 = vpop.f32.mrb[0].mxu0
        %2100 = vmatprep.mubr.f32.mxu0 0.0
        %2101 = vmatmul.mubr.f32.gmra.mrb[0].mxu0 %v1883
        %v2102 = vpop.f32.mrb[0].mxu0
        %v2103 = vadd.f32 0.0, %v2102
        %v2104 = vpop.f32.mrb[0].mxu0
        %2105 = vmatprep.mubr.f32.mxu0 0.0
        %2106 = vmatmul.mubr.f32.gmra.mrb[0].mxu0 %v1886
        %v2107 = vpop.f32.mrb[0].mxu0
        %v2108 = vadd.f32 0.0, %v2107
        %v2109 = vpop.f32.mrb[0].mxu0
        %2110 = vmatprep.mubr.f32.mxu0 0.0
        %2111 = vmatmul.mubr.f32.gmra.mrb[0].mxu0 %v1889
        %v2112 = vpop.f32.mrb[0].mxu0
        %v2113 = vadd.f32 0.0, %v2112
        %v2114 = vpop.f32.mrb[0].mxu0
        %2115 = vdwg.mxu0
        %v2116 = vld [vmem:[#allocation2] sm:$0xff]
        %v2117 = vld [vmem:[#allocation2 + $0x8] sm:$0xff]
        %v2118 = vld [vmem:[#allocation2 + $0x10] sm:$0xff]
        %v2119 = vld [vmem:[#allocation2 + $0x18] sm:$0xff]
        %v2120 = vld [vmem:[#allocation2 + $0x20] sm:$0xff]
        %v2121 = vld [vmem:[#allocation2 + $0x28] sm:$0xff]
        %v2122 = vld [vmem:[#allocation2 + $0x30] sm:$0xff]
        %v2123 = vld [vmem:[#allocation2 + $0x38] sm:$0xff]
        %v2124 = vld [vmem:[#allocation2 + $0x40] sm:$0xff]
        %v2125 = vld [vmem:[#allocation2 + $0x48] sm:$0xff]
        %v2126 = vld [vmem:[#allocation2 + $0x50] sm:$0xff]
        %v2127 = vld [vmem:[#allocation2 + $0x58] sm:$0xff]
        %v2128 = vld [vmem:[#allocation2 + $0x60] sm:$0xff]
        %v2129 = vld [vmem:[#allocation2 + $0x68] sm:$0xff]
        %v2130 = vld [vmem:[#allocation2 + $0x70] sm:$0xff]
        %v2131 = vld [vmem:[#allocation2 + $0x78] sm:$0xff]
        %v2132 = vld [vmem:[#allocation2 + $0x80] sm:$0xff]
        %v2133 = vld [vmem:[#allocation2 + $0x88] sm:$0xff]
        %v2134 = vld [vmem:[#allocation2 + $0x90] sm:$0xff]
        %v2135 = vld [vmem:[#allocation2 + $0x98] sm:$0xff]
        %v2136 = vld [vmem:[#allocation2 + $0xa0] sm:$0xff]
        %v2137 = vld [vmem:[#allocation2 + $0xa8] sm:$0xff]
        %v2138 = vld [vmem:[#allocation2 + $0xb0] sm:$0xff]
        %v2139 = vld [vmem:[#allocation2 + $0xb8] sm:$0xff]
        %v2140 = vld [vmem:[#allocation2 + $0xc0] sm:$0xff]
        %v2141 = vld [vmem:[#allocation2 + $0xc8] sm:$0xff]
        %v2142 = vld [vmem:[#allocation2 + $0xd0] sm:$0xff]
        %v2143 = vld [vmem:[#allocation2 + $0xd8] sm:$0xff]
        %v2144 = vld [vmem:[#allocation2 + $0xe0] sm:$0xff]
        %v2145 = vld [vmem:[#allocation2 + $0xe8] sm:$0xff]
        %v2146 = vld [vmem:[#allocation2 + $0xf0] sm:$0xff]
        %v2147 = vld [vmem:[#allocation2 + $0xf8] sm:$0xff]
        %v2148 = vadd.f32 %v2116, %v1958
        %v2149 = vadd.f32 %v2117, %v1963
        %v2150 = vadd.f32 %v2118, %v1968
        %v2151 = vadd.f32 %v2119, %v1973
        %v2152 = vadd.f32 %v2120, %v1978
        %v2153 = vadd.f32 %v2121, %v1983
        %v2154 = vadd.f32 %v2122, %v1988
        %v2155 = vadd.f32 %v2123, %v1993
        %v2156 = vadd.f32 %v2124, %v1998
        %v2157 = vadd.f32 %v2125, %v2003
        %v2158 = vadd.f32 %v2126, %v2008
        %v2159 = vadd.f32 %v2127, %v2013
        %v2160 = vadd.f32 %v2128, %v2018
        %v2161 = vadd.f32 %v2129, %v2023
        %v2162 = vadd.f32 %v2130, %v2028
        %v2163 = vadd.f32 %v2131, %v2033
        %v2164 = vadd.f32 %v2132, %v2038
        %v2165 = vadd.f32 %v2133, %v2043
        %v2166 = vadd.f32 %v2134, %v2048
        %v2167 = vadd.f32 %v2135, %v2053
        %v2168 = vadd.f32 %v2136, %v2058
        %v2169 = vadd.f32 %v2137, %v2063
        %v2170 = vadd.f32 %v2138, %v2068
        %v2171 = vadd.f32 %v2139, %v2073
        %v2172 = vadd.f32 %v2140, %v2078
        %v2173 = vadd.f32 %v2141, %v2083
        %v2174 = vadd.f32 %v2142, %v2088
        %v2175 = vadd.f32 %v2143, %v2093
        %v2176 = vadd.f32 %v2144, %v2098
        %v2177 = vadd.f32 %v2145, %v2103
        %v2178 = vadd.f32 %v2146, %v2108
        %v2179 = vadd.f32 %v2147, %v2113
        %2180 = vst [vmem:[#allocation2] sm:$0xff] %v2148
        %2181 = vst [vmem:[#allocation2 + $0x8] sm:$0xff] %v2149
        %2182 = vst [vmem:[#allocation2 + $0x10] sm:$0xff] %v2150
        %2183 = vst [vmem:[#allocation2 + $0x18] sm:$0xff] %v2151
        %2184 = vst [vmem:[#allocation2 + $0x20] sm:$0xff] %v2152
        %2185 = vst [vmem:[#allocation2 + $0x28] sm:$0xff] %v2153
        %2186 = vst [vmem:[#allocation2 + $0x30] sm:$0xff] %v2154
        %2187 = vst [vmem:[#allocation2 + $0x38] sm:$0xff] %v2155
        %2188 = vst [vmem:[#allocation2 + $0x40] sm:$0xff] %v2156
        %2189 = vst [vmem:[#allocation2 + $0x48] sm:$0xff] %v2157
        %2190 = vst [vmem:[#allocation2 + $0x50] sm:$0xff] %v2158
        %2191 = vst [vmem:[#allocation2 + $0x58] sm:$0xff] %v2159
        %2192 = vst [vmem:[#allocation2 + $0x60] sm:$0xff] %v2160
        %2193 = vst [vmem:[#allocation2 + $0x68] sm:$0xff] %v2161
        %2194 = vst [vmem:[#allocation2 + $0x70] sm:$0xff] %v2162
        %2195 = vst [vmem:[#allocation2 + $0x78] sm:$0xff] %v2163
        %2196 = vst [vmem:[#allocation2 + $0x80] sm:$0xff] %v2164
        %2197 = vst [vmem:[#allocation2 + $0x88] sm:$0xff] %v2165
        %2198 = vst [vmem:[#allocation2 + $0x90] sm:$0xff] %v2166
        %2199 = vst [vmem:[#allocation2 + $0x98] sm:$0xff] %v2167
        %2200 = vst [vmem:[#allocation2 + $0xa0] sm:$0xff] %v2168
        %2201 = vst [vmem:[#allocation2 + $0xa8] sm:$0xff] %v2169
        %2202 = vst [vmem:[#allocation2 + $0xb0] sm:$0xff] %v2170
        %2203 = vst [vmem:[#allocation2 + $0xb8] sm:$0xff] %v2171
        %2204 = vst [vmem:[#allocation2 + $0xc0] sm:$0xff] %v2172
        %2205 = vst [vmem:[#allocation2 + $0xc8] sm:$0xff] %v2173
        %2206 = vst [vmem:[#allocation2 + $0xd0] sm:$0xff] %v2174
        %2207 = vst [vmem:[#allocation2 + $0xd8] sm:$0xff] %v2175
        %2208 = vst [vmem:[#allocation2 + $0xe0] sm:$0xff] %v2176
        %2209 = vst [vmem:[#allocation2 + $0xe8] sm:$0xff] %v2177
        %2210 = vst [vmem:[#allocation2 + $0xf0] sm:$0xff] %v2178
        %2211 = vst [vmem:[#allocation2 + $0xf8] sm:$0xff] %v2179
        %v2212 = vld [vmem:[%s248 + $0x10] sm:$0xff]
        %v2213 = vld [vmem:[%s248 + $0x18] sm:$0xff]
        %v2214 = vld [vmem:[%s248 + $0x20] sm:$0xff]
        %v2215 = vld [vmem:[%s248 + $0x28] sm:$0xff]
        %v2216 = vld [vmem:[%s248 + $0x30] sm:$0xff]
        %v2217 = vld [vmem:[%s248 + $0x38] sm:$0xff]
        %v2218 = vld [vmem:[%s248 + $0x40] sm:$0xff]
        %v2219 = vld [vmem:[%s248 + $0x48] sm:$0xff]
        %v2220 = vld [vmem:[%s248 + $0x50] sm:$0xff]
        %v2221 = vld [vmem:[%s248 + $0x58] sm:$0xff]
        %v2222 = vld [vmem:[%s248 + $0x60] sm:$0xff]
        %v2223 = vld [vmem:[%s248 + $0x68] sm:$0xff]
        %v2224 = vld [vmem:[%s248 + $0x70] sm:$0xff]
        %v2225 = vld [vmem:[%s248 + $0x78] sm:$0xff]
        %v2226 = vld [vmem:[%s248 + $0x80] sm:$0xff]
        %v2227 = vld [vmem:[%s248 + $0x88] sm:$0xff]
        %v2228 = vld [vmem:[%s248 + $0x90] sm:$0xff]
        %v2229 = vld [vmem:[%s248 + $0x98] sm:$0xff]
        %v2230 = vld [vmem:[%s248 + $0xa0] sm:$0xff]
        %v2231 = vld [vmem:[%s248 + $0xa8] sm:$0xff]
        %v2232 = vld [vmem:[%s248 + $0xb0] sm:$0xff]
        %v2233 = vld [vmem:[%s248 + $0xb8] sm:$0xff]
        %v2234 = vld [vmem:[%s248 + $0xc0] sm:$0xff]
        %v2235 = vld [vmem:[%s248 + $0xc8] sm:$0xff]
        %v2236 = vld [vmem:[%s248 + $0xd0] sm:$0xff]
        %v2237 = vld [vmem:[%s248 + $0xd8] sm:$0xff]
        %v2238 = vld [vmem:[%s248 + $0xe0] sm:$0xff]
        %v2239 = vld [vmem:[%s248 + $0xe8] sm:$0xff]
        %v2240 = vld [vmem:[%s248 + $0xf0] sm:$0xff]
        %v2241 = vld [vmem:[%s248 + $0xf8] sm:$0xff]
        %v2242 = vld [vmem:[%s248 + $0x100] sm:$0xff]
        %v2243 = vld [vmem:[%s248 + $0x108] sm:$0xff]
        %s2244 = scalar_lea.vmem %s1, 768
        %v2245 = vld [vmem:[%s2244] sm:$0xff]
        %v2246 = vld [vmem:[%s2244 + $0x8] sm:$0xff]
        %v2247 = vld [vmem:[%s2244 + $0x10] sm:$0xff]
        %v2248 = vld [vmem:[%s2244 + $0x18] sm:$0xff]
        %v2249 = vld [vmem:[%s2244 + $0x20] sm:$0xff]
        %v2250 = vld [vmem:[%s2244 + $0x28] sm:$0xff]
        %v2251 = vld [vmem:[%s2244 + $0x30] sm:$0xff]
        %v2252 = vld [vmem:[%s2244 + $0x38] sm:$0xff]
        %v2253 = vld [vmem:[%s2244 + $0x40] sm:$0xff]
        %v2254 = vld [vmem:[%s2244 + $0x48] sm:$0xff]
        %v2255 = vld [vmem:[%s2244 + $0x50] sm:$0xff]
        %v2256 = vld [vmem:[%s2244 + $0x58] sm:$0xff]
        %v2257 = vld [vmem:[%s2244 + $0x60] sm:$0xff]
        %v2258 = vld [vmem:[%s2244 + $0x68] sm:$0xff]
        %v2259 = vld [vmem:[%s2244 + $0x70] sm:$0xff]
        %v2260 = vld [vmem:[%s2244 + $0x78] sm:$0xff]
        %v2261 = vld [vmem:[%s2244 + $0x80] sm:$0xff]
        %v2262 = vld [vmem:[%s2244 + $0x88] sm:$0xff]
        %v2263 = vld [vmem:[%s2244 + $0x90] sm:$0xff]
        %v2264 = vld [vmem:[%s2244 + $0x98] sm:$0xff]
        %v2265 = vld [vmem:[%s2244 + $0xa0] sm:$0xff]
        %v2266 = vld [vmem:[%s2244 + $0xa8] sm:$0xff]
        %v2267 = vld [vmem:[%s2244 + $0xb0] sm:$0xff]
        %v2268 = vld [vmem:[%s2244 + $0xb8] sm:$0xff]
        %v2269 = vld [vmem:[%s2244 + $0xc0] sm:$0xff]
        %v2270 = vld [vmem:[%s2244 + $0xc8] sm:$0xff]
        %v2271 = vld [vmem:[%s2244 + $0xd0] sm:$0xff]
        %v2272 = vld [vmem:[%s2244 + $0xd8] sm:$0xff]
        %v2273 = vld [vmem:[%s2244 + $0xe0] sm:$0xff]
        %v2274 = vld [vmem:[%s2244 + $0xe8] sm:$0xff]
        %v2275 = vld [vmem:[%s2244 + $0xf0] sm:$0xff]
        %v2276 = vld [vmem:[%s2244 + $0xf8] sm:$0xff]
        %2278 = vset.pattern.permute.xlu0 0
        %2279 = vperm.xlu0 %2278, %v2245
        %v2280 = vpop.permute.xlu0 %2279
        %2283 = vset.pattern.permute.xlu0 0
        %2284 = vperm.xlu0 %2283, %v2246
        %v2285 = vpop.permute.xlu0 %2284
        %2288 = vset.pattern.permute.xlu0 0
        %2289 = vperm.xlu0 %2288, %v2247
        %v2290 = vpop.permute.xlu0 %2289
        %2293 = vset.pattern.permute.xlu0 0
        %2294 = vperm.xlu0 %2293, %v2248
        %v2295 = vpop.permute.xlu0 %2294
        %2298 = vset.pattern.permute.xlu0 0
        %2299 = vperm.xlu0 %2298, %v2249
        %v2300 = vpop.permute.xlu0 %2299
        %2303 = vset.pattern.permute.xlu0 0
        %2304 = vperm.xlu0 %2303, %v2250
        %v2305 = vpop.permute.xlu0 %2304
        %2308 = vset.pattern.permute.xlu0 0
        %2309 = vperm.xlu0 %2308, %v2251
        %v2310 = vpop.permute.xlu0 %2309
        %2313 = vset.pattern.permute.xlu0 0
        %2314 = vperm.xlu0 %2313, %v2252
        %v2315 = vpop.permute.xlu0 %2314
        %2318 = vset.pattern.permute.xlu0 0
        %2319 = vperm.xlu0 %2318, %v2253
        %v2320 = vpop.permute.xlu0 %2319
        %2323 = vset.pattern.permute.xlu0 0
        %2324 = vperm.xlu0 %2323, %v2254
        %v2325 = vpop.permute.xlu0 %2324
        %2328 = vset.pattern.permute.xlu0 0
        %2329 = vperm.xlu0 %2328, %v2255
        %v2330 = vpop.permute.xlu0 %2329
        %2333 = vset.pattern.permute.xlu0 0
        %2334 = vperm.xlu0 %2333, %v2256
        %v2335 = vpop.permute.xlu0 %2334
        %2338 = vset.pattern.permute.xlu0 0
        %2339 = vperm.xlu0 %2338, %v2257
        %v2340 = vpop.permute.xlu0 %2339
        %2343 = vset.pattern.permute.xlu0 0
        %2344 = vperm.xlu0 %2343, %v2258
        %v2345 = vpop.permute.xlu0 %2344
        %2348 = vset.pattern.permute.xlu0 0
        %2349 = vperm.xlu0 %2348, %v2259
        %v2350 = vpop.permute.xlu0 %2349
        %2353 = vset.pattern.permute.xlu0 0
        %2354 = vperm.xlu0 %2353, %v2260
        %v2355 = vpop.permute.xlu0 %2354
        %2358 = vset.pattern.permute.xlu0 0
        %2359 = vperm.xlu0 %2358, %v2261
        %v2360 = vpop.permute.xlu0 %2359
        %2363 = vset.pattern.permute.xlu0 0
        %2364 = vperm.xlu0 %2363, %v2262
        %v2365 = vpop.permute.xlu0 %2364
        %2368 = vset.pattern.permute.xlu0 0
        %2369 = vperm.xlu0 %2368, %v2263
        %v2370 = vpop.permute.xlu0 %2369
        %2373 = vset.pattern.permute.xlu0 0
        %2374 = vperm.xlu0 %2373, %v2264
        %v2375 = vpop.permute.xlu0 %2374
        %2378 = vset.pattern.permute.xlu0 0
        %2379 = vperm.xlu0 %2378, %v2265
        %v2380 = vpop.permute.xlu0 %2379
        %2383 = vset.pattern.permute.xlu0 0
        %2384 = vperm.xlu0 %2383, %v2266
        %v2385 = vpop.permute.xlu0 %2384
        %2388 = vset.pattern.permute.xlu0 0
        %2389 = vperm.xlu0 %2388, %v2267
        %v2390 = vpop.permute.xlu0 %2389
        %2393 = vset.pattern.permute.xlu0 0
        %2394 = vperm.xlu0 %2393, %v2268
        %v2395 = vpop.permute.xlu0 %2394
        %2398 = vset.pattern.permute.xlu0 0
        %2399 = vperm.xlu0 %2398, %v2269
        %v2400 = vpop.permute.xlu0 %2399
        %2403 = vset.pattern.permute.xlu0 0
        %2404 = vperm.xlu0 %2403, %v2270
        %v2405 = vpop.permute.xlu0 %2404
        %2408 = vset.pattern.permute.xlu0 0
        %2409 = vperm.xlu0 %2408, %v2271
        %v2410 = vpop.permute.xlu0 %2409
        %2413 = vset.pattern.permute.xlu0 0
        %2414 = vperm.xlu0 %2413, %v2272
        %v2415 = vpop.permute.xlu0 %2414
        %2418 = vset.pattern.permute.xlu0 0
        %2419 = vperm.xlu0 %2418, %v2273
        %v2420 = vpop.permute.xlu0 %2419
        %2423 = vset.pattern.permute.xlu0 0
        %2424 = vperm.xlu0 %2423, %v2274
        %v2425 = vpop.permute.xlu0 %2424
        %2428 = vset.pattern.permute.xlu0 0
        %2429 = vperm.xlu0 %2428, %v2275
        %v2430 = vpop.permute.xlu0 %2429
        %2433 = vset.pattern.permute.xlu0 0
        %2434 = vperm.xlu0 %2433, %v2276
        %v2435 = vpop.permute.xlu0 %2434
        %v2437 = vmul.f32 %v2212, %v2280
        %v2438 = vmul.f32 %v2213, %v2285
        %v2439 = vmul.f32 %v2214, %v2290
        %v2440 = vmul.f32 %v2215, %v2295
        %v2441 = vmul.f32 %v2216, %v2300
        %v2442 = vmul.f32 %v2217, %v2305
        %v2443 = vmul.f32 %v2218, %v2310
        %v2444 = vmul.f32 %v2219, %v2315
        %v2445 = vmul.f32 %v2220, %v2320
        %v2446 = vmul.f32 %v2221, %v2325
        %v2447 = vmul.f32 %v2222, %v2330
        %v2448 = vmul.f32 %v2223, %v2335
        %v2449 = vmul.f32 %v2224, %v2340
        %v2450 = vmul.f32 %v2225, %v2345
        %v2451 = vmul.f32 %v2226, %v2350
        %v2452 = vmul.f32 %v2227, %v2355
        %v2453 = vmul.f32 %v2228, %v2360
        %v2454 = vmul.f32 %v2229, %v2365
        %v2455 = vmul.f32 %v2230, %v2370
        %v2456 = vmul.f32 %v2231, %v2375
        %v2457 = vmul.f32 %v2232, %v2380
        %v2458 = vmul.f32 %v2233, %v2385
        %v2459 = vmul.f32 %v2234, %v2390
        %v2460 = vmul.f32 %v2235, %v2395
        %v2461 = vmul.f32 %v2236, %v2400
        %v2462 = vmul.f32 %v2237, %v2405
        %v2463 = vmul.f32 %v2238, %v2410
        %v2464 = vmul.f32 %v2239, %v2415
        %v2465 = vmul.f32 %v2240, %v2420
        %v2466 = vmul.f32 %v2241, %v2425
        %v2467 = vmul.f32 %v2242, %v2430
        %v2468 = vmul.f32 %v2243, %v2435
        %s2469 = scalar_lea.vmem %s2, 24
        %v2470 = vld [vmem:[%s2469] sm:$0xff]
        %v2472 = vsel %vm506, %v2437, 0
        %v2475 = vsel %vm506, %v2438, 0
        %v2478 = vsel %vm506, %v2439, 0
        %v2481 = vsel %vm506, %v2440, 0
        %v2484 = vsel %vm506, %v2441, 0
        %v2487 = vsel %vm506, %v2442, 0
        %v2490 = vsel %vm506, %v2443, 0
        %v2493 = vsel %vm506, %v2444, 0
        %v2496 = vsel %vm506, %v2445, 0
        %v2499 = vsel %vm506, %v2446, 0
        %v2502 = vsel %vm506, %v2447, 0
        %v2505 = vsel %vm506, %v2448, 0
        %v2508 = vsel %vm506, %v2449, 0
        %v2511 = vsel %vm506, %v2450, 0
        %v2514 = vsel %vm506, %v2451, 0
        %v2517 = vsel %vm506, %v2452, 0
        %v2520 = vsel %vm506, %v2453, 0
        %v2523 = vsel %vm506, %v2454, 0
        %v2526 = vsel %vm506, %v2455, 0
        %v2529 = vsel %vm506, %v2456, 0
        %v2532 = vsel %vm506, %v2457, 0
        %v2535 = vsel %vm506, %v2458, 0
        %v2538 = vsel %vm506, %v2459, 0
        %v2541 = vsel %vm506, %v2460, 0
        %v2544 = vsel %vm506, %v2461, 0
        %v2547 = vsel %vm506, %v2462, 0
        %v2550 = vsel %vm506, %v2463, 0
        %v2553 = vsel %vm506, %v2464, 0
        %v2556 = vsel %vm506, %v2465, 0
        %v2559 = vsel %vm506, %v2466, 0
        %v2562 = vsel %vm506, %v2467, 0
        %v2565 = vsel %vm506, %v2468, 0
        %2567 = vmatprep.subr.mxu0 0.0
        %2568 = vmatpush1.msra.mxu0 %v2470
        %2569 = vmatprep.subr.mxu0 0.0
        %2570 = vmatpush1.msra.mxu0 0.0
        %2571 = vmatprep.subr.mxu0 0.0
        %2572 = vmatpush1.msra.mxu0 0.0
        %2573 = vmatprep.subr.mxu0 0.0
        %2574 = vmatpush1.msra.mxu0 0.0
        %2575 = vmatprep.subr.mxu0 0.0
        %2576 = vmatpush1.msra.mxu0 0.0
        %2577 = vmatprep.subr.mxu0 0.0
        %2578 = vmatpush1.msra.mxu0 0.0
        %2579 = vmatprep.subr.mxu0 0.0
        %2580 = vmatpush1.msra.mxu0 0.0
        %2581 = vmatprep.subr.mxu0 0.0
        %2582 = vmatpush1.msra.mxu0 0.0
        %2583 = vmatprep.subr.mxu0 0.0
        %2584 = vmatpush1.msra.mxu0 0.0
        %2585 = vmatprep.subr.mxu0 0.0
        %2586 = vmatpush1.msra.mxu0 0.0
        %2587 = vmatprep.subr.mxu0 0.0
        %2588 = vmatpush1.msra.mxu0 0.0
        %2589 = vmatprep.subr.mxu0 0.0
        %2590 = vmatpush1.msra.mxu0 0.0
        %2591 = vmatprep.subr.mxu0 0.0
        %2592 = vmatpush1.msra.mxu0 0.0
        %2593 = vmatprep.subr.mxu0 0.0
        %2594 = vmatpush1.msra.mxu0 0.0
        %2595 = vmatprep.subr.mxu0 0.0
        %2596 = vmatpush1.msra.mxu0 0.0
        %2597 = vmatprep.subr.mxu0 0.0
        %2598 = vmatpush1.msra.mxu0 0.0
        %2599 = vmatprep.subr.mxu0 0.0
        %2600 = vmatpush1.msra.mxu0 0.0
        %2601 = vmatprep.subr.mxu0 0.0
        %2602 = vmatpush1.msra.mxu0 0.0
        %2603 = vmatprep.subr.mxu0 0.0
        %2604 = vmatpush1.msra.mxu0 0.0
        %2605 = vmatprep.subr.mxu0 0.0
        %2606 = vmatpush1.msra.mxu0 0.0
        %2607 = vmatprep.subr.mxu0 0.0
        %2608 = vmatpush1.msra.mxu0 0.0
        %2609 = vmatprep.subr.mxu0 0.0
        %2610 = vmatpush1.msra.mxu0 0.0
        %2611 = vmatprep.subr.mxu0 0.0
        %2612 = vmatpush1.msra.mxu0 0.0
        %2613 = vmatprep.subr.mxu0 0.0
        %2614 = vmatpush1.msra.mxu0 0.0
        %2615 = vmatprep.subr.mxu0 0.0
        %2616 = vmatpush1.msra.mxu0 0.0
        %2617 = vmatprep.subr.mxu0 0.0
        %2618 = vmatpush1.msra.mxu0 0.0
        %2619 = vmatprep.subr.mxu0 0.0
        %2620 = vmatpush1.msra.mxu0 0.0
        %2621 = vmatprep.subr.mxu0 0.0
        %2622 = vmatpush1.msra.mxu0 0.0
        %2623 = vmatprep.subr.mxu0 0.0
        %2624 = vmatpush1.msra.mxu0 0.0
        %2625 = vmatprep.subr.mxu0 0.0
        %2626 = vmatpush1.msra.mxu0 0.0
        %2627 = vmatprep.subr.mxu0 0.0
        %2628 = vmatpush1.msra.mxu0 0.0
        %2629 = vmatprep.subr.mxu0 0.0
        %2630 = vmatpush1.msra.mxu0 0.0
        %2631 = vmatprep.mubr.f32.mxu0 0.0
        %2632 = vmatmul.mubr.f32.gmra.mrb[0].mxu0 %v2472
        %v2633 = vpop.f32.mrb[0].mxu0
        %v2634 = vadd.f32 0.0, %v2633
        %v2635 = vpop.f32.mrb[0].mxu0
        %2636 = vmatprep.mubr.f32.mxu0 0.0
        %2637 = vmatmul.mubr.f32.gmra.mrb[0].mxu0 %v2475
        %v2638 = vpop.f32.mrb[0].mxu0
        %v2639 = vadd.f32 0.0, %v2638
        %v2640 = vpop.f32.mrb[0].mxu0
        %2641 = vmatprep.mubr.f32.mxu0 0.0
        %2642 = vmatmul.mubr.f32.gmra.mrb[0].mxu0 %v2478
        %v2643 = vpop.f32.mrb[0].mxu0
        %v2644 = vadd.f32 0.0, %v2643
        %v2645 = vpop.f32.mrb[0].mxu0
        %2646 = vmatprep.mubr.f32.mxu0 0.0
        %2647 = vmatmul.mubr.f32.gmra.mrb[0].mxu0 %v2481
        %v2648 = vpop.f32.mrb[0].mxu0
        %v2649 = vadd.f32 0.0, %v2648
        %v2650 = vpop.f32.mrb[0].mxu0
        %2651 = vmatprep.mubr.f32.mxu0 0.0
        %2652 = vmatmul.mubr.f32.gmra.mrb[0].mxu0 %v2484
        %v2653 = vpop.f32.mrb[0].mxu0
        %v2654 = vadd.f32 0.0, %v2653
        %v2655 = vpop.f32.mrb[0].mxu0
        %2656 = vmatprep.mubr.f32.mxu0 0.0
        %2657 = vmatmul.mubr.f32.gmra.mrb[0].mxu0 %v2487
        %v2658 = vpop.f32.mrb[0].mxu0
        %v2659 = vadd.f32 0.0, %v2658
        %v2660 = vpop.f32.mrb[0].mxu0
        %2661 = vmatprep.mubr.f32.mxu0 0.0
        %2662 = vmatmul.mubr.f32.gmra.mrb[0].mxu0 %v2490
        %v2663 = vpop.f32.mrb[0].mxu0
        %v2664 = vadd.f32 0.0, %v2663
        %v2665 = vpop.f32.mrb[0].mxu0
        %2666 = vmatprep.mubr.f32.mxu0 0.0
        %2667 = vmatmul.mubr.f32.gmra.mrb[0].mxu0 %v2493
        %v2668 = vpop.f32.mrb[0].mxu0
        %v2669 = vadd.f32 0.0, %v2668
        %v2670 = vpop.f32.mrb[0].mxu0
        %2671 = vmatprep.mubr.f32.mxu0 0.0
        %2672 = vmatmul.mubr.f32.gmra.mrb[0].mxu0 %v2496
        %v2673 = vpop.f32.mrb[0].mxu0
        %v2674 = vadd.f32 0.0, %v2673
        %v2675 = vpop.f32.mrb[0].mxu0
        %2676 = vmatprep.mubr.f32.mxu0 0.0
        %2677 = vmatmul.mubr.f32.gmra.mrb[0].mxu0 %v2499
        %v2678 = vpop.f32.mrb[0].mxu0
        %v2679 = vadd.f32 0.0, %v2678
        %v2680 = vpop.f32.mrb[0].mxu0
        %2681 = vmatprep.mubr.f32.mxu0 0.0
        %2682 = vmatmul.mubr.f32.gmra.mrb[0].mxu0 %v2502
        %v2683 = vpop.f32.mrb[0].mxu0
        %v2684 = vadd.f32 0.0, %v2683
        %v2685 = vpop.f32.mrb[0].mxu0
        %2686 = vmatprep.mubr.f32.mxu0 0.0
        %2687 = vmatmul.mubr.f32.gmra.mrb[0].mxu0 %v2505
        %v2688 = vpop.f32.mrb[0].mxu0
        %v2689 = vadd.f32 0.0, %v2688
        %v2690 = vpop.f32.mrb[0].mxu0
        %2691 = vmatprep.mubr.f32.mxu0 0.0
        %2692 = vmatmul.mubr.f32.gmra.mrb[0].mxu0 %v2508
        %v2693 = vpop.f32.mrb[0].mxu0
        %v2694 = vadd.f32 0.0, %v2693
        %v2695 = vpop.f32.mrb[0].mxu0
        %2696 = vmatprep.mubr.f32.mxu0 0.0
        %2697 = vmatmul.mubr.f32.gmra.mrb[0].mxu0 %v2511
        %v2698 = vpop.f32.mrb[0].mxu0
        %v2699 = vadd.f32 0.0, %v2698
        %v2700 = vpop.f32.mrb[0].mxu0
        %2701 = vmatprep.mubr.f32.mxu0 0.0
        %2702 = vmatmul.mubr.f32.gmra.mrb[0].mxu0 %v2514
        %v2703 = vpop.f32.mrb[0].mxu0
        %v2704 = vadd.f32 0.0, %v2703
        %v2705 = vpop.f32.mrb[0].mxu0
        %2706 = vmatprep.mubr.f32.mxu0 0.0
        %2707 = vmatmul.mubr.f32.gmra.mrb[0].mxu0 %v2517
        %v2708 = vpop.f32.mrb[0].mxu0
        %v2709 = vadd.f32 0.0, %v2708
        %v2710 = vpop.f32.mrb[0].mxu0
        %2711 = vmatprep.mubr.f32.mxu0 0.0
        %2712 = vmatmul.mubr.f32.gmra.mrb[0].mxu0 %v2520
        %v2713 = vpop.f32.mrb[0].mxu0
        %v2714 = vadd.f32 0.0, %v2713
        %v2715 = vpop.f32.mrb[0].mxu0
        %2716 = vmatprep.mubr.f32.mxu0 0.0
        %2717 = vmatmul.mubr.f32.gmra.mrb[0].mxu0 %v2523
        %v2718 = vpop.f32.mrb[0].mxu0
        %v2719 = vadd.f32 0.0, %v2718
        %v2720 = vpop.f32.mrb[0].mxu0
        %2721 = vmatprep.mubr.f32.mxu0 0.0
        %2722 = vmatmul.mubr.f32.gmra.mrb[0].mxu0 %v2526
        %v2723 = vpop.f32.mrb[0].mxu0
        %v2724 = vadd.f32 0.0, %v2723
        %v2725 = vpop.f32.mrb[0].mxu0
        %2726 = vmatprep.mubr.f32.mxu0 0.0
        %2727 = vmatmul.mubr.f32.gmra.mrb[0].mxu0 %v2529
        %v2728 = vpop.f32.mrb[0].mxu0
        %v2729 = vadd.f32 0.0, %v2728
        %v2730 = vpop.f32.mrb[0].mxu0
        %2731 = vmatprep.mubr.f32.mxu0 0.0
        %2732 = vmatmul.mubr.f32.gmra.mrb[0].mxu0 %v2532
        %v2733 = vpop.f32.mrb[0].mxu0
        %v2734 = vadd.f32 0.0, %v2733
        %v2735 = vpop.f32.mrb[0].mxu0
        %2736 = vmatprep.mubr.f32.mxu0 0.0
        %2737 = vmatmul.mubr.f32.gmra.mrb[0].mxu0 %v2535
        %v2738 = vpop.f32.mrb[0].mxu0
        %v2739 = vadd.f32 0.0, %v2738
        %v2740 = vpop.f32.mrb[0].mxu0
        %2741 = vmatprep.mubr.f32.mxu0 0.0
        %2742 = vmatmul.mubr.f32.gmra.mrb[0].mxu0 %v2538
        %v2743 = vpop.f32.mrb[0].mxu0
        %v2744 = vadd.f32 0.0, %v2743
        %v2745 = vpop.f32.mrb[0].mxu0
        %2746 = vmatprep.mubr.f32.mxu0 0.0
        %2747 = vmatmul.mubr.f32.gmra.mrb[0].mxu0 %v2541
        %v2748 = vpop.f32.mrb[0].mxu0
        %v2749 = vadd.f32 0.0, %v2748
        %v2750 = vpop.f32.mrb[0].mxu0
        %2751 = vmatprep.mubr.f32.mxu0 0.0
        %2752 = vmatmul.mubr.f32.gmra.mrb[0].mxu0 %v2544
        %v2753 = vpop.f32.mrb[0].mxu0
        %v2754 = vadd.f32 0.0, %v2753
        %v2755 = vpop.f32.mrb[0].mxu0
        %2756 = vmatprep.mubr.f32.mxu0 0.0
        %2757 = vmatmul.mubr.f32.gmra.mrb[0].mxu0 %v2547
        %v2758 = vpop.f32.mrb[0].mxu0
        %v2759 = vadd.f32 0.0, %v2758
        %v2760 = vpop.f32.mrb[0].mxu0
        %2761 = vmatprep.mubr.f32.mxu0 0.0
        %2762 = vmatmul.mubr.f32.gmra.mrb[0].mxu0 %v2550
        %v2763 = vpop.f32.mrb[0].mxu0
        %v2764 = vadd.f32 0.0, %v2763
        %v2765 = vpop.f32.mrb[0].mxu0
        %2766 = vmatprep.mubr.f32.mxu0 0.0
        %2767 = vmatmul.mubr.f32.gmra.mrb[0].mxu0 %v2553
        %v2768 = vpop.f32.mrb[0].mxu0
        %v2769 = vadd.f32 0.0, %v2768
        %v2770 = vpop.f32.mrb[0].mxu0
        %2771 = vmatprep.mubr.f32.mxu0 0.0
        %2772 = vmatmul.mubr.f32.gmra.mrb[0].mxu0 %v2556
        %v2773 = vpop.f32.mrb[0].mxu0
        %v2774 = vadd.f32 0.0, %v2773
        %v2775 = vpop.f32.mrb[0].mxu0
        %2776 = vmatprep.mubr.f32.mxu0 0.0
        %2777 = vmatmul.mubr.f32.gmra.mrb[0].mxu0 %v2559
        %v2778 = vpop.f32.mrb[0].mxu0
        %v2779 = vadd.f32 0.0, %v2778
        %v2780 = vpop.f32.mrb[0].mxu0
        %2781 = vmatprep.mubr.f32.mxu0 0.0
        %2782 = vmatmul.mubr.f32.gmra.mrb[0].mxu0 %v2562
        %v2783 = vpop.f32.mrb[0].mxu0
        %v2784 = vadd.f32 0.0, %v2783
        %v2785 = vpop.f32.mrb[0].mxu0
        %2786 = vmatprep.mubr.f32.mxu0 0.0
        %2787 = vmatmul.mubr.f32.gmra.mrb[0].mxu0 %v2565
        %v2788 = vpop.f32.mrb[0].mxu0
        %v2789 = vadd.f32 0.0, %v2788
        %v2790 = vpop.f32.mrb[0].mxu0
        %2791 = vdwg.mxu0
        %v2792 = vld [vmem:[#allocation2] sm:$0xff]
        %v2793 = vld [vmem:[#allocation2 + $0x8] sm:$0xff]
        %v2794 = vld [vmem:[#allocation2 + $0x10] sm:$0xff]
        %v2795 = vld [vmem:[#allocation2 + $0x18] sm:$0xff]
        %v2796 = vld [vmem:[#allocation2 + $0x20] sm:$0xff]
        %v2797 = vld [vmem:[#allocation2 + $0x28] sm:$0xff]
        %v2798 = vld [vmem:[#allocation2 + $0x30] sm:$0xff]
        %v2799 = vld [vmem:[#allocation2 + $0x38] sm:$0xff]
        %v2800 = vld [vmem:[#allocation2 + $0x40] sm:$0xff]
        %v2801 = vld [vmem:[#allocation2 + $0x48] sm:$0xff]
        %v2802 = vld [vmem:[#allocation2 + $0x50] sm:$0xff]
        %v2803 = vld [vmem:[#allocation2 + $0x58] sm:$0xff]
        %v2804 = vld [vmem:[#allocation2 + $0x60] sm:$0xff]
        %v2805 = vld [vmem:[#allocation2 + $0x68] sm:$0xff]
        %v2806 = vld [vmem:[#allocation2 + $0x70] sm:$0xff]
        %v2807 = vld [vmem:[#allocation2 + $0x78] sm:$0xff]
        %v2808 = vld [vmem:[#allocation2 + $0x80] sm:$0xff]
        %v2809 = vld [vmem:[#allocation2 + $0x88] sm:$0xff]
        %v2810 = vld [vmem:[#allocation2 + $0x90] sm:$0xff]
        %v2811 = vld [vmem:[#allocation2 + $0x98] sm:$0xff]
        %v2812 = vld [vmem:[#allocation2 + $0xa0] sm:$0xff]
        %v2813 = vld [vmem:[#allocation2 + $0xa8] sm:$0xff]
        %v2814 = vld [vmem:[#allocation2 + $0xb0] sm:$0xff]
        %v2815 = vld [vmem:[#allocation2 + $0xb8] sm:$0xff]
        %v2816 = vld [vmem:[#allocation2 + $0xc0] sm:$0xff]
        %v2817 = vld [vmem:[#allocation2 + $0xc8] sm:$0xff]
        %v2818 = vld [vmem:[#allocation2 + $0xd0] sm:$0xff]
        %v2819 = vld [vmem:[#allocation2 + $0xd8] sm:$0xff]
        %v2820 = vld [vmem:[#allocation2 + $0xe0] sm:$0xff]
        %v2821 = vld [vmem:[#allocation2 + $0xe8] sm:$0xff]
        %v2822 = vld [vmem:[#allocation2 + $0xf0] sm:$0xff]
        %v2823 = vld [vmem:[#allocation2 + $0xf8] sm:$0xff]
        %v2824 = vadd.f32 %v2792, %v2634
        %v2825 = vadd.f32 %v2793, %v2639
        %v2826 = vadd.f32 %v2794, %v2644
        %v2827 = vadd.f32 %v2795, %v2649
        %v2828 = vadd.f32 %v2796, %v2654
        %v2829 = vadd.f32 %v2797, %v2659
        %v2830 = vadd.f32 %v2798, %v2664
        %v2831 = vadd.f32 %v2799, %v2669
        %v2832 = vadd.f32 %v2800, %v2674
        %v2833 = vadd.f32 %v2801, %v2679
        %v2834 = vadd.f32 %v2802, %v2684
        %v2835 = vadd.f32 %v2803, %v2689
        %v2836 = vadd.f32 %v2804, %v2694
        %v2837 = vadd.f32 %v2805, %v2699
        %v2838 = vadd.f32 %v2806, %v2704
        %v2839 = vadd.f32 %v2807, %v2709
        %v2840 = vadd.f32 %v2808, %v2714
        %v2841 = vadd.f32 %v2809, %v2719
        %v2842 = vadd.f32 %v2810, %v2724
        %v2843 = vadd.f32 %v2811, %v2729
        %v2844 = vadd.f32 %v2812, %v2734
        %v2845 = vadd.f32 %v2813, %v2739
        %v2846 = vadd.f32 %v2814, %v2744
        %v2847 = vadd.f32 %v2815, %v2749
        %v2848 = vadd.f32 %v2816, %v2754
        %v2849 = vadd.f32 %v2817, %v2759
        %v2850 = vadd.f32 %v2818, %v2764
        %v2851 = vadd.f32 %v2819, %v2769
        %v2852 = vadd.f32 %v2820, %v2774
        %v2853 = vadd.f32 %v2821, %v2779
        %v2854 = vadd.f32 %v2822, %v2784
        %v2855 = vadd.f32 %v2823, %v2789
        %2856 = vst [vmem:[#allocation2] sm:$0xff] %v2824
        %2857 = vst [vmem:[#allocation2 + $0x8] sm:$0xff] %v2825
        %2858 = vst [vmem:[#allocation2 + $0x10] sm:$0xff] %v2826
        %2859 = vst [vmem:[#allocation2 + $0x18] sm:$0xff] %v2827
        %2860 = vst [vmem:[#allocation2 + $0x20] sm:$0xff] %v2828
        %2861 = vst [vmem:[#allocation2 + $0x28] sm:$0xff] %v2829
        %2862 = vst [vmem:[#allocation2 + $0x30] sm:$0xff] %v2830
        %2863 = vst [vmem:[#allocation2 + $0x38] sm:$0xff] %v2831
        %2864 = vst [vmem:[#allocation2 + $0x40] sm:$0xff] %v2832
        %2865 = vst [vmem:[#allocation2 + $0x48] sm:$0xff] %v2833
        %2866 = vst [vmem:[#allocation2 + $0x50] sm:$0xff] %v2834
        %2867 = vst [vmem:[#allocation2 + $0x58] sm:$0xff] %v2835
        %2868 = vst [vmem:[#allocation2 + $0x60] sm:$0xff] %v2836
        %2869 = vst [vmem:[#allocation2 + $0x68] sm:$0xff] %v2837
        %2870 = vst [vmem:[#allocation2 + $0x70] sm:$0xff] %v2838
        %2871 = vst [vmem:[#allocation2 + $0x78] sm:$0xff] %v2839
        %2872 = vst [vmem:[#allocation2 + $0x80] sm:$0xff] %v2840
        %2873 = vst [vmem:[#allocation2 + $0x88] sm:$0xff] %v2841
        %2874 = vst [vmem:[#allocation2 + $0x90] sm:$0xff] %v2842
        %2875 = vst [vmem:[#allocation2 + $0x98] sm:$0xff] %v2843
        %2876 = vst [vmem:[#allocation2 + $0xa0] sm:$0xff] %v2844
        %2877 = vst [vmem:[#allocation2 + $0xa8] sm:$0xff] %v2845
        %2878 = vst [vmem:[#allocation2 + $0xb0] sm:$0xff] %v2846
        %2879 = vst [vmem:[#allocation2 + $0xb8] sm:$0xff] %v2847
        %2880 = vst [vmem:[#allocation2 + $0xc0] sm:$0xff] %v2848
        %2881 = vst [vmem:[#allocation2 + $0xc8] sm:$0xff] %v2849
        %2882 = vst [vmem:[#allocation2 + $0xd0] sm:$0xff] %v2850
        %2883 = vst [vmem:[#allocation2 + $0xd8] sm:$0xff] %v2851
        %2884 = vst [vmem:[#allocation2 + $0xe0] sm:$0xff] %v2852
        %2885 = vst [vmem:[#allocation2 + $0xe8] sm:$0xff] %v2853
        %2886 = vst [vmem:[#allocation2 + $0xf0] sm:$0xff] %v2854
        %2887 = vst [vmem:[#allocation2 + $0xf8] sm:$0xff] %v2855
        %v2888 = vld [vmem:[%s248 + $0x11] sm:$0xff]
        %v2889 = vld [vmem:[%s248 + $0x19] sm:$0xff]
        %v2890 = vld [vmem:[%s248 + $0x21] sm:$0xff]
        %v2891 = vld [vmem:[%s248 + $0x29] sm:$0xff]
        %v2892 = vld [vmem:[%s248 + $0x31] sm:$0xff]
        %v2893 = vld [vmem:[%s248 + $0x39] sm:$0xff]
        %v2894 = vld [vmem:[%s248 + $0x41] sm:$0xff]
        %v2895 = vld [vmem:[%s248 + $0x49] sm:$0xff]
        %v2896 = vld [vmem:[%s248 + $0x51] sm:$0xff]
        %v2897 = vld [vmem:[%s248 + $0x59] sm:$0xff]
        %v2898 = vld [vmem:[%s248 + $0x61] sm:$0xff]
        %v2899 = vld [vmem:[%s248 + $0x69] sm:$0xff]
        %v2900 = vld [vmem:[%s248 + $0x71] sm:$0xff]
        %v2901 = vld [vmem:[%s248 + $0x79] sm:$0xff]
        %v2902 = vld [vmem:[%s248 + $0x81] sm:$0xff]
        %v2903 = vld [vmem:[%s248 + $0x89] sm:$0xff]
        %v2904 = vld [vmem:[%s248 + $0x91] sm:$0xff]
        %v2905 = vld [vmem:[%s248 + $0x99] sm:$0xff]
        %v2906 = vld [vmem:[%s248 + $0xa1] sm:$0xff]
        %v2907 = vld [vmem:[%s248 + $0xa9] sm:$0xff]
        %v2908 = vld [vmem:[%s248 + $0xb1] sm:$0xff]
        %v2909 = vld [vmem:[%s248 + $0xb9] sm:$0xff]
        %v2910 = vld [vmem:[%s248 + $0xc1] sm:$0xff]
        %v2911 = vld [vmem:[%s248 + $0xc9] sm:$0xff]
        %v2912 = vld [vmem:[%s248 + $0xd1] sm:$0xff]
        %v2913 = vld [vmem:[%s248 + $0xd9] sm:$0xff]
        %v2914 = vld [vmem:[%s248 + $0xe1] sm:$0xff]
        %v2915 = vld [vmem:[%s248 + $0xe9] sm:$0xff]
        %v2916 = vld [vmem:[%s248 + $0xf1] sm:$0xff]
        %v2917 = vld [vmem:[%s248 + $0xf9] sm:$0xff]
        %v2918 = vld [vmem:[%s248 + $0x101] sm:$0xff]
        %v2919 = vld [vmem:[%s248 + $0x109] sm:$0xff]
        %s2920 = scalar_lea.vmem %s1, 1024
        %v2921 = vld [vmem:[%s2920] sm:$0xff]
        %v2922 = vld [vmem:[%s2920 + $0x8] sm:$0xff]
        %v2923 = vld [vmem:[%s2920 + $0x10] sm:$0xff]
        %v2924 = vld [vmem:[%s2920 + $0x18] sm:$0xff]
        %v2925 = vld [vmem:[%s2920 + $0x20] sm:$0xff]
        %v2926 = vld [vmem:[%s2920 + $0x28] sm:$0xff]
        %v2927 = vld [vmem:[%s2920 + $0x30] sm:$0xff]
        %v2928 = vld [vmem:[%s2920 + $0x38] sm:$0xff]
        %v2929 = vld [vmem:[%s2920 + $0x40] sm:$0xff]
        %v2930 = vld [vmem:[%s2920 + $0x48] sm:$0xff]
        %v2931 = vld [vmem:[%s2920 + $0x50] sm:$0xff]
        %v2932 = vld [vmem:[%s2920 + $0x58] sm:$0xff]
        %v2933 = vld [vmem:[%s2920 + $0x60] sm:$0xff]
        %v2934 = vld [vmem:[%s2920 + $0x68] sm:$0xff]
        %v2935 = vld [vmem:[%s2920 + $0x70] sm:$0xff]
        %v2936 = vld [vmem:[%s2920 + $0x78] sm:$0xff]
        %v2937 = vld [vmem:[%s2920 + $0x80] sm:$0xff]
        %v2938 = vld [vmem:[%s2920 + $0x88] sm:$0xff]
        %v2939 = vld [vmem:[%s2920 + $0x90] sm:$0xff]
        %v2940 = vld [vmem:[%s2920 + $0x98] sm:$0xff]
        %v2941 = vld [vmem:[%s2920 + $0xa0] sm:$0xff]
        %v2942 = vld [vmem:[%s2920 + $0xa8] sm:$0xff]
        %v2943 = vld [vmem:[%s2920 + $0xb0] sm:$0xff]
        %v2944 = vld [vmem:[%s2920 + $0xb8] sm:$0xff]
        %v2945 = vld [vmem:[%s2920 + $0xc0] sm:$0xff]
        %v2946 = vld [vmem:[%s2920 + $0xc8] sm:$0xff]
        %v2947 = vld [vmem:[%s2920 + $0xd0] sm:$0xff]
        %v2948 = vld [vmem:[%s2920 + $0xd8] sm:$0xff]
        %v2949 = vld [vmem:[%s2920 + $0xe0] sm:$0xff]
        %v2950 = vld [vmem:[%s2920 + $0xe8] sm:$0xff]
        %v2951 = vld [vmem:[%s2920 + $0xf0] sm:$0xff]
        %v2952 = vld [vmem:[%s2920 + $0xf8] sm:$0xff]
        %2954 = vset.pattern.permute.xlu0 0
        %2955 = vperm.xlu0 %2954, %v2921
        %v2956 = vpop.permute.xlu0 %2955
        %2959 = vset.pattern.permute.xlu0 0
        %2960 = vperm.xlu0 %2959, %v2922
        %v2961 = vpop.permute.xlu0 %2960
        %2964 = vset.pattern.permute.xlu0 0
        %2965 = vperm.xlu0 %2964, %v2923
        %v2966 = vpop.permute.xlu0 %2965
        %2969 = vset.pattern.permute.xlu0 0
        %2970 = vperm.xlu0 %2969, %v2924
        %v2971 = vpop.permute.xlu0 %2970
        %2974 = vset.pattern.permute.xlu0 0
        %2975 = vperm.xlu0 %2974, %v2925
        %v2976 = vpop.permute.xlu0 %2975
        %2979 = vset.pattern.permute.xlu0 0
        %2980 = vperm.xlu0 %2979, %v2926
        %v2981 = vpop.permute.xlu0 %2980
        %2984 = vset.pattern.permute.xlu0 0
        %2985 = vperm.xlu0 %2984, %v2927
        %v2986 = vpop.permute.xlu0 %2985
        %2989 = vset.pattern.permute.xlu0 0
        %2990 = vperm.xlu0 %2989, %v2928
        %v2991 = vpop.permute.xlu0 %2990
        %2994 = vset.pattern.permute.xlu0 0
        %2995 = vperm.xlu0 %2994, %v2929
        %v2996 = vpop.permute.xlu0 %2995
        %2999 = vset.pattern.permute.xlu0 0
        %3000 = vperm.xlu0 %2999, %v2930
        %v3001 = vpop.permute.xlu0 %3000
        %3004 = vset.pattern.permute.xlu0 0
        %3005 = vperm.xlu0 %3004, %v2931
        %v3006 = vpop.permute.xlu0 %3005
        %3009 = vset.pattern.permute.xlu0 0
        %3010 = vperm.xlu0 %3009, %v2932
        %v3011 = vpop.permute.xlu0 %3010
        %3014 = vset.pattern.permute.xlu0 0
        %3015 = vperm.xlu0 %3014, %v2933
        %v3016 = vpop.permute.xlu0 %3015
        %3019 = vset.pattern.permute.xlu0 0
        %3020 = vperm.xlu0 %3019, %v2934
        %v3021 = vpop.permute.xlu0 %3020
        %3024 = vset.pattern.permute.xlu0 0
        %3025 = vperm.xlu0 %3024, %v2935
        %v3026 = vpop.permute.xlu0 %3025
        %3029 = vset.pattern.permute.xlu0 0
        %3030 = vperm.xlu0 %3029, %v2936
        %v3031 = vpop.permute.xlu0 %3030
        %3034 = vset.pattern.permute.xlu0 0
        %3035 = vperm.xlu0 %3034, %v2937
        %v3036 = vpop.permute.xlu0 %3035
        %3039 = vset.pattern.permute.xlu0 0
        %3040 = vperm.xlu0 %3039, %v2938
        %v3041 = vpop.permute.xlu0 %3040
        %3044 = vset.pattern.permute.xlu0 0
        %3045 = vperm.xlu0 %3044, %v2939
        %v3046 = vpop.permute.xlu0 %3045
        %3049 = vset.pattern.permute.xlu0 0
        %3050 = vperm.xlu0 %3049, %v2940
        %v3051 = vpop.permute.xlu0 %3050
        %3054 = vset.pattern.permute.xlu0 0
        %3055 = vperm.xlu0 %3054, %v2941
        %v3056 = vpop.permute.xlu0 %3055
        %3059 = vset.pattern.permute.xlu0 0
        %3060 = vperm.xlu0 %3059, %v2942
        %v3061 = vpop.permute.xlu0 %3060
        %3064 = vset.pattern.permute.xlu0 0
        %3065 = vperm.xlu0 %3064, %v2943
        %v3066 = vpop.permute.xlu0 %3065
        %3069 = vset.pattern.permute.xlu0 0
        %3070 = vperm.xlu0 %3069, %v2944
        %v3071 = vpop.permute.xlu0 %3070
        %3074 = vset.pattern.permute.xlu0 0
        %3075 = vperm.xlu0 %3074, %v2945
        %v3076 = vpop.permute.xlu0 %3075
        %3079 = vset.pattern.permute.xlu0 0
        %3080 = vperm.xlu0 %3079, %v2946
        %v3081 = vpop.permute.xlu0 %3080
        %3084 = vset.pattern.permute.xlu0 0
        %3085 = vperm.xlu0 %3084, %v2947
        %v3086 = vpop.permute.xlu0 %3085
        %3089 = vset.pattern.permute.xlu0 0
        %3090 = vperm.xlu0 %3089, %v2948
        %v3091 = vpop.permute.xlu0 %3090
        %3094 = vset.pattern.permute.xlu0 0
        %3095 = vperm.xlu0 %3094, %v2949
        %v3096 = vpop.permute.xlu0 %3095
        %3099 = vset.pattern.permute.xlu0 0
        %3100 = vperm.xlu0 %3099, %v2950
        %v3101 = vpop.permute.xlu0 %3100
        %3104 = vset.pattern.permute.xlu0 0
        %3105 = vperm.xlu0 %3104, %v2951
        %v3106 = vpop.permute.xlu0 %3105
        %3109 = vset.pattern.permute.xlu0 0
        %3110 = vperm.xlu0 %3109, %v2952
        %v3111 = vpop.permute.xlu0 %3110
        %v3113 = vmul.f32 %v2888, %v2956
        %v3114 = vmul.f32 %v2889, %v2961
        %v3115 = vmul.f32 %v2890, %v2966
        %v3116 = vmul.f32 %v2891, %v2971
        %v3117 = vmul.f32 %v2892, %v2976
        %v3118 = vmul.f32 %v2893, %v2981
        %v3119 = vmul.f32 %v2894, %v2986
        %v3120 = vmul.f32 %v2895, %v2991
        %v3121 = vmul.f32 %v2896, %v2996
        %v3122 = vmul.f32 %v2897, %v3001
        %v3123 = vmul.f32 %v2898, %v3006
        %v3124 = vmul.f32 %v2899, %v3011
        %v3125 = vmul.f32 %v2900, %v3016
        %v3126 = vmul.f32 %v2901, %v3021
        %v3127 = vmul.f32 %v2902, %v3026
        %v3128 = vmul.f32 %v2903, %v3031
        %v3129 = vmul.f32 %v2904, %v3036
        %v3130 = vmul.f32 %v2905, %v3041
        %v3131 = vmul.f32 %v2906, %v3046
        %v3132 = vmul.f32 %v2907, %v3051
        %v3133 = vmul.f32 %v2908, %v3056
        %v3134 = vmul.f32 %v2909, %v3061
        %v3135 = vmul.f32 %v2910, %v3066
        %v3136 = vmul.f32 %v2911, %v3071
        %v3137 = vmul.f32 %v2912, %v3076
        %v3138 = vmul.f32 %v2913, %v3081
        %v3139 = vmul.f32 %v2914, %v3086
        %v3140 = vmul.f32 %v2915, %v3091
        %v3141 = vmul.f32 %v2916, %v3096
        %v3142 = vmul.f32 %v2917, %v3101
        %v3143 = vmul.f32 %v2918, %v3106
        %v3144 = vmul.f32 %v2919, %v3111
        %s3145 = scalar_lea.vmem %s2, 32
        %v3146 = vld [vmem:[%s3145] sm:$0xff]
        %v3148 = vsel %vm506, %v3113, 0
        %v3151 = vsel %vm506, %v3114, 0
        %v3154 = vsel %vm506, %v3115, 0
        %v3157 = vsel %vm506, %v3116, 0
        %v3160 = vsel %vm506, %v3117, 0
        %v3163 = vsel %vm506, %v3118, 0
        %v3166 = vsel %vm506, %v3119, 0
        %v3169 = vsel %vm506, %v3120, 0
        %v3172 = vsel %vm506, %v3121, 0
        %v3175 = vsel %vm506, %v3122, 0
        %v3178 = vsel %vm506, %v3123, 0
        %v3181 = vsel %vm506, %v3124, 0
        %v3184 = vsel %vm506, %v3125, 0
        %v3187 = vsel %vm506, %v3126, 0
        %v3190 = vsel %vm506, %v3127, 0
        %v3193 = vsel %vm506, %v3128, 0
        %v3196 = vsel %vm506, %v3129, 0
        %v3199 = vsel %vm506, %v3130, 0
        %v3202 = vsel %vm506, %v3131, 0
        %v3205 = vsel %vm506, %v3132, 0
        %v3208 = vsel %vm506, %v3133, 0
        %v3211 = vsel %vm506, %v3134, 0
        %v3214 = vsel %vm506, %v3135, 0
        %v3217 = vsel %vm506, %v3136, 0
        %v3220 = vsel %vm506, %v3137, 0
        %v3223 = vsel %vm506, %v3138, 0
        %v3226 = vsel %vm506, %v3139, 0
        %v3229 = vsel %vm506, %v3140, 0
        %v3232 = vsel %vm506, %v3141, 0
        %v3235 = vsel %vm506, %v3142, 0
        %v3238 = vsel %vm506, %v3143, 0
        %v3241 = vsel %vm506, %v3144, 0
        %3243 = vmatprep.subr.mxu0 0.0
        %3244 = vmatpush1.msra.mxu0 %v3146
        %3245 = vmatprep.subr.mxu0 0.0
        %3246 = vmatpush1.msra.mxu0 0.0
        %3247 = vmatprep.subr.mxu0 0.0
        %3248 = vmatpush1.msra.mxu0 0.0
        %3249 = vmatprep.subr.mxu0 0.0
        %3250 = vmatpush1.msra.mxu0 0.0
        %3251 = vmatprep.subr.mxu0 0.0
        %3252 = vmatpush1.msra.mxu0 0.0
        %3253 = vmatprep.subr.mxu0 0.0
        %3254 = vmatpush1.msra.mxu0 0.0
        %3255 = vmatprep.subr.mxu0 0.0
        %3256 = vmatpush1.msra.mxu0 0.0
        %3257 = vmatprep.subr.mxu0 0.0
        %3258 = vmatpush1.msra.mxu0 0.0
        %3259 = vmatprep.subr.mxu0 0.0
        %3260 = vmatpush1.msra.mxu0 0.0
        %3261 = vmatprep.subr.mxu0 0.0
        %3262 = vmatpush1.msra.mxu0 0.0
        %3263 = vmatprep.subr.mxu0 0.0
        %3264 = vmatpush1.msra.mxu0 0.0
        %3265 = vmatprep.subr.mxu0 0.0
        %3266 = vmatpush1.msra.mxu0 0.0
        %3267 = vmatprep.subr.mxu0 0.0
        %3268 = vmatpush1.msra.mxu0 0.0
        %3269 = vmatprep.subr.mxu0 0.0
        %3270 = vmatpush1.msra.mxu0 0.0
        %3271 = vmatprep.subr.mxu0 0.0
        %3272 = vmatpush1.msra.mxu0 0.0
        %3273 = vmatprep.subr.mxu0 0.0
        %3274 = vmatpush1.msra.mxu0 0.0
        %3275 = vmatprep.subr.mxu0 0.0
        %3276 = vmatpush1.msra.mxu0 0.0
        %3277 = vmatprep.subr.mxu0 0.0
        %3278 = vmatpush1.msra.mxu0 0.0
        %3279 = vmatprep.subr.mxu0 0.0
        %3280 = vmatpush1.msra.mxu0 0.0
        %3281 = vmatprep.subr.mxu0 0.0
        %3282 = vmatpush1.msra.mxu0 0.0
        %3283 = vmatprep.subr.mxu0 0.0
        %3284 = vmatpush1.msra.mxu0 0.0
        %3285 = vmatprep.subr.mxu0 0.0
        %3286 = vmatpush1.msra.mxu0 0.0
        %3287 = vmatprep.subr.mxu0 0.0
        %3288 = vmatpush1.msra.mxu0 0.0
        %3289 = vmatprep.subr.mxu0 0.0
        %3290 = vmatpush1.msra.mxu0 0.0
        %3291 = vmatprep.subr.mxu0 0.0
        %3292 = vmatpush1.msra.mxu0 0.0
        %3293 = vmatprep.subr.mxu0 0.0
        %3294 = vmatpush1.msra.mxu0 0.0
        %3295 = vmatprep.subr.mxu0 0.0
        %3296 = vmatpush1.msra.mxu0 0.0
        %3297 = vmatprep.subr.mxu0 0.0
        %3298 = vmatpush1.msra.mxu0 0.0
        %3299 = vmatprep.subr.mxu0 0.0
        %3300 = vmatpush1.msra.mxu0 0.0
        %3301 = vmatprep.subr.mxu0 0.0
        %3302 = vmatpush1.msra.mxu0 0.0
        %3303 = vmatprep.subr.mxu0 0.0
        %3304 = vmatpush1.msra.mxu0 0.0
        %3305 = vmatprep.subr.mxu0 0.0
        %3306 = vmatpush1.msra.mxu0 0.0
        %3307 = vmatprep.mubr.f32.mxu0 0.0
        %3308 = vmatmul.mubr.f32.gmra.mrb[0].mxu0 %v3148
        %v3309 = vpop.f32.mrb[0].mxu0
        %v3310 = vadd.f32 0.0, %v3309
        %v3311 = vpop.f32.mrb[0].mxu0
        %3312 = vmatprep.mubr.f32.mxu0 0.0
        %3313 = vmatmul.mubr.f32.gmra.mrb[0].mxu0 %v3151
        %v3314 = vpop.f32.mrb[0].mxu0
        %v3315 = vadd.f32 0.0, %v3314
        %v3316 = vpop.f32.mrb[0].mxu0
        %3317 = vmatprep.mubr.f32.mxu0 0.0
        %3318 = vmatmul.mubr.f32.gmra.mrb[0].mxu0 %v3154
        %v3319 = vpop.f32.mrb[0].mxu0
        %v3320 = vadd.f32 0.0, %v3319
        %v3321 = vpop.f32.mrb[0].mxu0
        %3322 = vmatprep.mubr.f32.mxu0 0.0
        %3323 = vmatmul.mubr.f32.gmra.mrb[0].mxu0 %v3157
        %v3324 = vpop.f32.mrb[0].mxu0
        %v3325 = vadd.f32 0.0, %v3324
        %v3326 = vpop.f32.mrb[0].mxu0
        %3327 = vmatprep.mubr.f32.mxu0 0.0
        %3328 = vmatmul.mubr.f32.gmra.mrb[0].mxu0 %v3160
        %v3329 = vpop.f32.mrb[0].mxu0
        %v3330 = vadd.f32 0.0, %v3329
        %v3331 = vpop.f32.mrb[0].mxu0
        %3332 = vmatprep.mubr.f32.mxu0 0.0
        %3333 = vmatmul.mubr.f32.gmra.mrb[0].mxu0 %v3163
        %v3334 = vpop.f32.mrb[0].mxu0
        %v3335 = vadd.f32 0.0, %v3334
        %v3336 = vpop.f32.mrb[0].mxu0
        %3337 = vmatprep.mubr.f32.mxu0 0.0
        %3338 = vmatmul.mubr.f32.gmra.mrb[0].mxu0 %v3166
        %v3339 = vpop.f32.mrb[0].mxu0
        %v3340 = vadd.f32 0.0, %v3339
        %v3341 = vpop.f32.mrb[0].mxu0
        %3342 = vmatprep.mubr.f32.mxu0 0.0
        %3343 = vmatmul.mubr.f32.gmra.mrb[0].mxu0 %v3169
        %v3344 = vpop.f32.mrb[0].mxu0
        %v3345 = vadd.f32 0.0, %v3344
        %v3346 = vpop.f32.mrb[0].mxu0
        %3347 = vmatprep.mubr.f32.mxu0 0.0
        %3348 = vmatmul.mubr.f32.gmra.mrb[0].mxu0 %v3172
        %v3349 = vpop.f32.mrb[0].mxu0
        %v3350 = vadd.f32 0.0, %v3349
        %v3351 = vpop.f32.mrb[0].mxu0
        %3352 = vmatprep.mubr.f32.mxu0 0.0
        %3353 = vmatmul.mubr.f32.gmra.mrb[0].mxu0 %v3175
        %v3354 = vpop.f32.mrb[0].mxu0
        %v3355 = vadd.f32 0.0, %v3354
        %v3356 = vpop.f32.mrb[0].mxu0
        %3357 = vmatprep.mubr.f32.mxu0 0.0
        %3358 = vmatmul.mubr.f32.gmra.mrb[0].mxu0 %v3178
        %v3359 = vpop.f32.mrb[0].mxu0
        %v3360 = vadd.f32 0.0, %v3359
        %v3361 = vpop.f32.mrb[0].mxu0
        %3362 = vmatprep.mubr.f32.mxu0 0.0
        %3363 = vmatmul.mubr.f32.gmra.mrb[0].mxu0 %v3181
        %v3364 = vpop.f32.mrb[0].mxu0
        %v3365 = vadd.f32 0.0, %v3364
        %v3366 = vpop.f32.mrb[0].mxu0
        %3367 = vmatprep.mubr.f32.mxu0 0.0
        %3368 = vmatmul.mubr.f32.gmra.mrb[0].mxu0 %v3184
        %v3369 = vpop.f32.mrb[0].mxu0
        %v3370 = vadd.f32 0.0, %v3369
        %v3371 = vpop.f32.mrb[0].mxu0
        %3372 = vmatprep.mubr.f32.mxu0 0.0
        %3373 = vmatmul.mubr.f32.gmra.mrb[0].mxu0 %v3187
        %v3374 = vpop.f32.mrb[0].mxu0
        %v3375 = vadd.f32 0.0, %v3374
        %v3376 = vpop.f32.mrb[0].mxu0
        %3377 = vmatprep.mubr.f32.mxu0 0.0
        %3378 = vmatmul.mubr.f32.gmra.mrb[0].mxu0 %v3190
        %v3379 = vpop.f32.mrb[0].mxu0
        %v3380 = vadd.f32 0.0, %v3379
        %v3381 = vpop.f32.mrb[0].mxu0
        %3382 = vmatprep.mubr.f32.mxu0 0.0
        %3383 = vmatmul.mubr.f32.gmra.mrb[0].mxu0 %v3193
        %v3384 = vpop.f32.mrb[0].mxu0
        %v3385 = vadd.f32 0.0, %v3384
        %v3386 = vpop.f32.mrb[0].mxu0
        %3387 = vmatprep.mubr.f32.mxu0 0.0
        %3388 = vmatmul.mubr.f32.gmra.mrb[0].mxu0 %v3196
        %v3389 = vpop.f32.mrb[0].mxu0
        %v3390 = vadd.f32 0.0, %v3389
        %v3391 = vpop.f32.mrb[0].mxu0
        %3392 = vmatprep.mubr.f32.mxu0 0.0
        %3393 = vmatmul.mubr.f32.gmra.mrb[0].mxu0 %v3199
        %v3394 = vpop.f32.mrb[0].mxu0
        %v3395 = vadd.f32 0.0, %v3394
        %v3396 = vpop.f32.mrb[0].mxu0
        %3397 = vmatprep.mubr.f32.mxu0 0.0
        %3398 = vmatmul.mubr.f32.gmra.mrb[0].mxu0 %v3202
        %v3399 = vpop.f32.mrb[0].mxu0
        %v3400 = vadd.f32 0.0, %v3399
        %v3401 = vpop.f32.mrb[0].mxu0
        %3402 = vmatprep.mubr.f32.mxu0 0.0
        %3403 = vmatmul.mubr.f32.gmra.mrb[0].mxu0 %v3205
        %v3404 = vpop.f32.mrb[0].mxu0
        %v3405 = vadd.f32 0.0, %v3404
        %v3406 = vpop.f32.mrb[0].mxu0
        %3407 = vmatprep.mubr.f32.mxu0 0.0
        %3408 = vmatmul.mubr.f32.gmra.mrb[0].mxu0 %v3208
        %v3409 = vpop.f32.mrb[0].mxu0
        %v3410 = vadd.f32 0.0, %v3409
        %v3411 = vpop.f32.mrb[0].mxu0
        %3412 = vmatprep.mubr.f32.mxu0 0.0
        %3413 = vmatmul.mubr.f32.gmra.mrb[0].mxu0 %v3211
        %v3414 = vpop.f32.mrb[0].mxu0
        %v3415 = vadd.f32 0.0, %v3414
        %v3416 = vpop.f32.mrb[0].mxu0
        %3417 = vmatprep.mubr.f32.mxu0 0.0
        %3418 = vmatmul.mubr.f32.gmra.mrb[0].mxu0 %v3214
        %v3419 = vpop.f32.mrb[0].mxu0
        %v3420 = vadd.f32 0.0, %v3419
        %v3421 = vpop.f32.mrb[0].mxu0
        %3422 = vmatprep.mubr.f32.mxu0 0.0
        %3423 = vmatmul.mubr.f32.gmra.mrb[0].mxu0 %v3217
        %v3424 = vpop.f32.mrb[0].mxu0
        %v3425 = vadd.f32 0.0, %v3424
        %v3426 = vpop.f32.mrb[0].mxu0
        %3427 = vmatprep.mubr.f32.mxu0 0.0
        %3428 = vmatmul.mubr.f32.gmra.mrb[0].mxu0 %v3220
        %v3429 = vpop.f32.mrb[0].mxu0
        %v3430 = vadd.f32 0.0, %v3429
        %v3431 = vpop.f32.mrb[0].mxu0
        %3432 = vmatprep.mubr.f32.mxu0 0.0
        %3433 = vmatmul.mubr.f32.gmra.mrb[0].mxu0 %v3223
        %v3434 = vpop.f32.mrb[0].mxu0
        %v3435 = vadd.f32 0.0, %v3434
        %v3436 = vpop.f32.mrb[0].mxu0
        %3437 = vmatprep.mubr.f32.mxu0 0.0
        %3438 = vmatmul.mubr.f32.gmra.mrb[0].mxu0 %v3226
        %v3439 = vpop.f32.mrb[0].mxu0
        %v3440 = vadd.f32 0.0, %v3439
        %v3441 = vpop.f32.mrb[0].mxu0
        %3442 = vmatprep.mubr.f32.mxu0 0.0
        %3443 = vmatmul.mubr.f32.gmra.mrb[0].mxu0 %v3229
        %v3444 = vpop.f32.mrb[0].mxu0
        %v3445 = vadd.f32 0.0, %v3444
        %v3446 = vpop.f32.mrb[0].mxu0
        %3447 = vmatprep.mubr.f32.mxu0 0.0
        %3448 = vmatmul.mubr.f32.gmra.mrb[0].mxu0 %v3232
        %v3449 = vpop.f32.mrb[0].mxu0
        %v3450 = vadd.f32 0.0, %v3449
        %v3451 = vpop.f32.mrb[0].mxu0
        %3452 = vmatprep.mubr.f32.mxu0 0.0
        %3453 = vmatmul.mubr.f32.gmra.mrb[0].mxu0 %v3235
        %v3454 = vpop.f32.mrb[0].mxu0
        %v3455 = vadd.f32 0.0, %v3454
        %v3456 = vpop.f32.mrb[0].mxu0
        %3457 = vmatprep.mubr.f32.mxu0 0.0
        %3458 = vmatmul.mubr.f32.gmra.mrb[0].mxu0 %v3238
        %v3459 = vpop.f32.mrb[0].mxu0
        %v3460 = vadd.f32 0.0, %v3459
        %v3461 = vpop.f32.mrb[0].mxu0
        %3462 = vmatprep.mubr.f32.mxu0 0.0
        %3463 = vmatmul.mubr.f32.gmra.mrb[0].mxu0 %v3241
        %v3464 = vpop.f32.mrb[0].mxu0
        %v3465 = vadd.f32 0.0, %v3464
        %v3466 = vpop.f32.mrb[0].mxu0
        %3467 = vdwg.mxu0
        %v3468 = vld [vmem:[#allocation2] sm:$0xff]
        %v3469 = vld [vmem:[#allocation2 + $0x8] sm:$0xff]
        %v3470 = vld [vmem:[#allocation2 + $0x10] sm:$0xff]
        %v3471 = vld [vmem:[#allocation2 + $0x18] sm:$0xff]
        %v3472 = vld [vmem:[#allocation2 + $0x20] sm:$0xff]
        %v3473 = vld [vmem:[#allocation2 + $0x28] sm:$0xff]
        %v3474 = vld [vmem:[#allocation2 + $0x30] sm:$0xff]
        %v3475 = vld [vmem:[#allocation2 + $0x38] sm:$0xff]
        %v3476 = vld [vmem:[#allocation2 + $0x40] sm:$0xff]
        %v3477 = vld [vmem:[#allocation2 + $0x48] sm:$0xff]
        %v3478 = vld [vmem:[#allocation2 + $0x50] sm:$0xff]
        %v3479 = vld [vmem:[#allocation2 + $0x58] sm:$0xff]
        %v3480 = vld [vmem:[#allocation2 + $0x60] sm:$0xff]
        %v3481 = vld [vmem:[#allocation2 + $0x68] sm:$0xff]
        %v3482 = vld [vmem:[#allocation2 + $0x70] sm:$0xff]
        %v3483 = vld [vmem:[#allocation2 + $0x78] sm:$0xff]
        %v3484 = vld [vmem:[#allocation2 + $0x80] sm:$0xff]
        %v3485 = vld [vmem:[#allocation2 + $0x88] sm:$0xff]
        %v3486 = vld [vmem:[#allocation2 + $0x90] sm:$0xff]
        %v3487 = vld [vmem:[#allocation2 + $0x98] sm:$0xff]
        %v3488 = vld [vmem:[#allocation2 + $0xa0] sm:$0xff]
        %v3489 = vld [vmem:[#allocation2 + $0xa8] sm:$0xff]
        %v3490 = vld [vmem:[#allocation2 + $0xb0] sm:$0xff]
        %v3491 = vld [vmem:[#allocation2 + $0xb8] sm:$0xff]
        %v3492 = vld [vmem:[#allocation2 + $0xc0] sm:$0xff]
        %v3493 = vld [vmem:[#allocation2 + $0xc8] sm:$0xff]
        %v3494 = vld [vmem:[#allocation2 + $0xd0] sm:$0xff]
        %v3495 = vld [vmem:[#allocation2 + $0xd8] sm:$0xff]
        %v3496 = vld [vmem:[#allocation2 + $0xe0] sm:$0xff]
        %v3497 = vld [vmem:[#allocation2 + $0xe8] sm:$0xff]
        %v3498 = vld [vmem:[#allocation2 + $0xf0] sm:$0xff]
        %v3499 = vld [vmem:[#allocation2 + $0xf8] sm:$0xff]
        %v3500 = vadd.f32 %v3468, %v3310
        %v3501 = vadd.f32 %v3469, %v3315
        %v3502 = vadd.f32 %v3470, %v3320
        %v3503 = vadd.f32 %v3471, %v3325
        %v3504 = vadd.f32 %v3472, %v3330
        %v3505 = vadd.f32 %v3473, %v3335
        %v3506 = vadd.f32 %v3474, %v3340
        %v3507 = vadd.f32 %v3475, %v3345
        %v3508 = vadd.f32 %v3476, %v3350
        %v3509 = vadd.f32 %v3477, %v3355
        %v3510 = vadd.f32 %v3478, %v3360
        %v3511 = vadd.f32 %v3479, %v3365
        %v3512 = vadd.f32 %v3480, %v3370
        %v3513 = vadd.f32 %v3481, %v3375
        %v3514 = vadd.f32 %v3482, %v3380
        %v3515 = vadd.f32 %v3483, %v3385
        %v3516 = vadd.f32 %v3484, %v3390
        %v3517 = vadd.f32 %v3485, %v3395
        %v3518 = vadd.f32 %v3486, %v3400
        %v3519 = vadd.f32 %v3487, %v3405
        %v3520 = vadd.f32 %v3488, %v3410
        %v3521 = vadd.f32 %v3489, %v3415
        %v3522 = vadd.f32 %v3490, %v3420
        %v3523 = vadd.f32 %v3491, %v3425
        %v3524 = vadd.f32 %v3492, %v3430
        %v3525 = vadd.f32 %v3493, %v3435
        %v3526 = vadd.f32 %v3494, %v3440
        %v3527 = vadd.f32 %v3495, %v3445
        %v3528 = vadd.f32 %v3496, %v3450
        %v3529 = vadd.f32 %v3497, %v3455
        %v3530 = vadd.f32 %v3498, %v3460
        %v3531 = vadd.f32 %v3499, %v3465
        %3532 = vst [vmem:[#allocation2] sm:$0xff] %v3500
        %3533 = vst [vmem:[#allocation2 + $0x8] sm:$0xff] %v3501
        %3534 = vst [vmem:[#allocation2 + $0x10] sm:$0xff] %v3502
        %3535 = vst [vmem:[#allocation2 + $0x18] sm:$0xff] %v3503
        %3536 = vst [vmem:[#allocation2 + $0x20] sm:$0xff] %v3504
        %3537 = vst [vmem:[#allocation2 + $0x28] sm:$0xff] %v3505
        %3538 = vst [vmem:[#allocation2 + $0x30] sm:$0xff] %v3506
        %3539 = vst [vmem:[#allocation2 + $0x38] sm:$0xff] %v3507
        %3540 = vst [vmem:[#allocation2 + $0x40] sm:$0xff] %v3508
        %3541 = vst [vmem:[#allocation2 + $0x48] sm:$0xff] %v3509
        %3542 = vst [vmem:[#allocation2 + $0x50] sm:$0xff] %v3510
        %3543 = vst [vmem:[#allocation2 + $0x58] sm:$0xff] %v3511
        %3544 = vst [vmem:[#allocation2 + $0x60] sm:$0xff] %v3512
        %3545 = vst [vmem:[#allocation2 + $0x68] sm:$0xff] %v3513
        %3546 = vst [vmem:[#allocation2 + $0x70] sm:$0xff] %v3514
        %3547 = vst [vmem:[#allocation2 + $0x78] sm:$0xff] %v3515
        %3548 = vst [vmem:[#allocation2 + $0x80] sm:$0xff] %v3516
        %3549 = vst [vmem:[#allocation2 + $0x88] sm:$0xff] %v3517
        %3550 = vst [vmem:[#allocation2 + $0x90] sm:$0xff] %v3518
        %3551 = vst [vmem:[#allocation2 + $0x98] sm:$0xff] %v3519
        %3552 = vst [vmem:[#allocation2 + $0xa0] sm:$0xff] %v3520
        %3553 = vst [vmem:[#allocation2 + $0xa8] sm:$0xff] %v3521
        %3554 = vst [vmem:[#allocation2 + $0xb0] sm:$0xff] %v3522
        %3555 = vst [vmem:[#allocation2 + $0xb8] sm:$0xff] %v3523
        %3556 = vst [vmem:[#allocation2 + $0xc0] sm:$0xff] %v3524
        %3557 = vst [vmem:[#allocation2 + $0xc8] sm:$0xff] %v3525
        %3558 = vst [vmem:[#allocation2 + $0xd0] sm:$0xff] %v3526
        %3559 = vst [vmem:[#allocation2 + $0xd8] sm:$0xff] %v3527
        %3560 = vst [vmem:[#allocation2 + $0xe0] sm:$0xff] %v3528
        %3561 = vst [vmem:[#allocation2 + $0xe8] sm:$0xff] %v3529
        %3562 = vst [vmem:[#allocation2 + $0xf0] sm:$0xff] %v3530
        %3563 = vst [vmem:[#allocation2 + $0xf8] sm:$0xff] %v3531
        %v3564 = vld [vmem:[%s248 + $0x12] sm:$0xff]
        %v3565 = vld [vmem:[%s248 + $0x1a] sm:$0xff]
        %v3566 = vld [vmem:[%s248 + $0x22] sm:$0xff]
        %v3567 = vld [vmem:[%s248 + $0x2a] sm:$0xff]
        %v3568 = vld [vmem:[%s248 + $0x32] sm:$0xff]
        %v3569 = vld [vmem:[%s248 + $0x3a] sm:$0xff]
        %v3570 = vld [vmem:[%s248 + $0x42] sm:$0xff]
        %v3571 = vld [vmem:[%s248 + $0x4a] sm:$0xff]
        %v3572 = vld [vmem:[%s248 + $0x52] sm:$0xff]
        %v3573 = vld [vmem:[%s248 + $0x5a] sm:$0xff]
        %v3574 = vld [vmem:[%s248 + $0x62] sm:$0xff]
        %v3575 = vld [vmem:[%s248 + $0x6a] sm:$0xff]
        %v3576 = vld [vmem:[%s248 + $0x72] sm:$0xff]
        %v3577 = vld [vmem:[%s248 + $0x7a] sm:$0xff]
        %v3578 = vld [vmem:[%s248 + $0x82] sm:$0xff]
        %v3579 = vld [vmem:[%s248 + $0x8a] sm:$0xff]
        %v3580 = vld [vmem:[%s248 + $0x92] sm:$0xff]
        %v3581 = vld [vmem:[%s248 + $0x9a] sm:$0xff]
        %v3582 = vld [vmem:[%s248 + $0xa2] sm:$0xff]
        %v3583 = vld [vmem:[%s248 + $0xaa] sm:$0xff]
        %v3584 = vld [vmem:[%s248 + $0xb2] sm:$0xff]
        %v3585 = vld [vmem:[%s248 + $0xba] sm:$0xff]
        %v3586 = vld [vmem:[%s248 + $0xc2] sm:$0xff]
        %v3587 = vld [vmem:[%s248 + $0xca] sm:$0xff]
        %v3588 = vld [vmem:[%s248 + $0xd2] sm:$0xff]
        %v3589 = vld [vmem:[%s248 + $0xda] sm:$0xff]
        %v3590 = vld [vmem:[%s248 + $0xe2] sm:$0xff]
        %v3591 = vld [vmem:[%s248 + $0xea] sm:$0xff]
        %v3592 = vld [vmem:[%s248 + $0xf2] sm:$0xff]
        %v3593 = vld [vmem:[%s248 + $0xfa] sm:$0xff]
        %v3594 = vld [vmem:[%s248 + $0x102] sm:$0xff]
        %v3595 = vld [vmem:[%s248 + $0x10a] sm:$0xff]
        %s3596 = scalar_lea.vmem %s1, 1280
        %v3597 = vld [vmem:[%s3596] sm:$0xff]
        %v3598 = vld [vmem:[%s3596 + $0x8] sm:$0xff]
        %v3599 = vld [vmem:[%s3596 + $0x10] sm:$0xff]
        %v3600 = vld [vmem:[%s3596 + $0x18] sm:$0xff]
        %v3601 = vld [vmem:[%s3596 + $0x20] sm:$0xff]
        %v3602 = vld [vmem:[%s3596 + $0x28] sm:$0xff]
        %v3603 = vld [vmem:[%s3596 + $0x30] sm:$0xff]
        %v3604 = vld [vmem:[%s3596 + $0x38] sm:$0xff]
        %v3605 = vld [vmem:[%s3596 + $0x40] sm:$0xff]
        %v3606 = vld [vmem:[%s3596 + $0x48] sm:$0xff]
        %v3607 = vld [vmem:[%s3596 + $0x50] sm:$0xff]
        %v3608 = vld [vmem:[%s3596 + $0x58] sm:$0xff]
        %v3609 = vld [vmem:[%s3596 + $0x60] sm:$0xff]
        %v3610 = vld [vmem:[%s3596 + $0x68] sm:$0xff]
        %v3611 = vld [vmem:[%s3596 + $0x70] sm:$0xff]
        %v3612 = vld [vmem:[%s3596 + $0x78] sm:$0xff]
        %v3613 = vld [vmem:[%s3596 + $0x80] sm:$0xff]
        %v3614 = vld [vmem:[%s3596 + $0x88] sm:$0xff]
        %v3615 = vld [vmem:[%s3596 + $0x90] sm:$0xff]
        %v3616 = vld [vmem:[%s3596 + $0x98] sm:$0xff]
        %v3617 = vld [vmem:[%s3596 + $0xa0] sm:$0xff]
        %v3618 = vld [vmem:[%s3596 + $0xa8] sm:$0xff]
        %v3619 = vld [vmem:[%s3596 + $0xb0] sm:$0xff]
        %v3620 = vld [vmem:[%s3596 + $0xb8] sm:$0xff]
        %v3621 = vld [vmem:[%s3596 + $0xc0] sm:$0xff]
        %v3622 = vld [vmem:[%s3596 + $0xc8] sm:$0xff]
        %v3623 = vld [vmem:[%s3596 + $0xd0] sm:$0xff]
        %v3624 = vld [vmem:[%s3596 + $0xd8] sm:$0xff]
        %v3625 = vld [vmem:[%s3596 + $0xe0] sm:$0xff]
        %v3626 = vld [vmem:[%s3596 + $0xe8] sm:$0xff]
        %v3627 = vld [vmem:[%s3596 + $0xf0] sm:$0xff]
        %v3628 = vld [vmem:[%s3596 + $0xf8] sm:$0xff]
        %3630 = vset.pattern.permute.xlu0 0
        %3631 = vperm.xlu0 %3630, %v3597
        %v3632 = vpop.permute.xlu0 %3631
        %3635 = vset.pattern.permute.xlu0 0
        %3636 = vperm.xlu0 %3635, %v3598
        %v3637 = vpop.permute.xlu0 %3636
        %3640 = vset.pattern.permute.xlu0 0
        %3641 = vperm.xlu0 %3640, %v3599
        %v3642 = vpop.permute.xlu0 %3641
        %3645 = vset.pattern.permute.xlu0 0
        %3646 = vperm.xlu0 %3645, %v3600
        %v3647 = vpop.permute.xlu0 %3646
        %3650 = vset.pattern.permute.xlu0 0
        %3651 = vperm.xlu0 %3650, %v3601
        %v3652 = vpop.permute.xlu0 %3651
        %3655 = vset.pattern.permute.xlu0 0
        %3656 = vperm.xlu0 %3655, %v3602
        %v3657 = vpop.permute.xlu0 %3656
        %3660 = vset.pattern.permute.xlu0 0
        %3661 = vperm.xlu0 %3660, %v3603
        %v3662 = vpop.permute.xlu0 %3661
        %3665 = vset.pattern.permute.xlu0 0
        %3666 = vperm.xlu0 %3665, %v3604
        %v3667 = vpop.permute.xlu0 %3666
        %3670 = vset.pattern.permute.xlu0 0
        %3671 = vperm.xlu0 %3670, %v3605
        %v3672 = vpop.permute.xlu0 %3671
        %3675 = vset.pattern.permute.xlu0 0
        %3676 = vperm.xlu0 %3675, %v3606
        %v3677 = vpop.permute.xlu0 %3676
        %3680 = vset.pattern.permute.xlu0 0
        %3681 = vperm.xlu0 %3680, %v3607
        %v3682 = vpop.permute.xlu0 %3681
        %3685 = vset.pattern.permute.xlu0 0
        %3686 = vperm.xlu0 %3685, %v3608
        %v3687 = vpop.permute.xlu0 %3686
        %3690 = vset.pattern.permute.xlu0 0
        %3691 = vperm.xlu0 %3690, %v3609
        %v3692 = vpop.permute.xlu0 %3691
        %3695 = vset.pattern.permute.xlu0 0
        %3696 = vperm.xlu0 %3695, %v3610
        %v3697 = vpop.permute.xlu0 %3696
        %3700 = vset.pattern.permute.xlu0 0
        %3701 = vperm.xlu0 %3700, %v3611
        %v3702 = vpop.permute.xlu0 %3701
        %3705 = vset.pattern.permute.xlu0 0
        %3706 = vperm.xlu0 %3705, %v3612
        %v3707 = vpop.permute.xlu0 %3706
        %3710 = vset.pattern.permute.xlu0 0
        %3711 = vperm.xlu0 %3710, %v3613
        %v3712 = vpop.permute.xlu0 %3711
        %3715 = vset.pattern.permute.xlu0 0
        %3716 = vperm.xlu0 %3715, %v3614
        %v3717 = vpop.permute.xlu0 %3716
        %3720 = vset.pattern.permute.xlu0 0
        %3721 = vperm.xlu0 %3720, %v3615
        %v3722 = vpop.permute.xlu0 %3721
        %3725 = vset.pattern.permute.xlu0 0
        %3726 = vperm.xlu0 %3725, %v3616
        %v3727 = vpop.permute.xlu0 %3726
        %3730 = vset.pattern.permute.xlu0 0
        %3731 = vperm.xlu0 %3730, %v3617
        %v3732 = vpop.permute.xlu0 %3731
        %3735 = vset.pattern.permute.xlu0 0
        %3736 = vperm.xlu0 %3735, %v3618
        %v3737 = vpop.permute.xlu0 %3736
        %3740 = vset.pattern.permute.xlu0 0
        %3741 = vperm.xlu0 %3740, %v3619
        %v3742 = vpop.permute.xlu0 %3741
        %3745 = vset.pattern.permute.xlu0 0
        %3746 = vperm.xlu0 %3745, %v3620
        %v3747 = vpop.permute.xlu0 %3746
        %3750 = vset.pattern.permute.xlu0 0
        %3751 = vperm.xlu0 %3750, %v3621
        %v3752 = vpop.permute.xlu0 %3751
        %3755 = vset.pattern.permute.xlu0 0
        %3756 = vperm.xlu0 %3755, %v3622
        %v3757 = vpop.permute.xlu0 %3756
        %3760 = vset.pattern.permute.xlu0 0
        %3761 = vperm.xlu0 %3760, %v3623
        %v3762 = vpop.permute.xlu0 %3761
        %3765 = vset.pattern.permute.xlu0 0
        %3766 = vperm.xlu0 %3765, %v3624
        %v3767 = vpop.permute.xlu0 %3766
        %3770 = vset.pattern.permute.xlu0 0
        %3771 = vperm.xlu0 %3770, %v3625
        %v3772 = vpop.permute.xlu0 %3771
        %3775 = vset.pattern.permute.xlu0 0
        %3776 = vperm.xlu0 %3775, %v3626
        %v3777 = vpop.permute.xlu0 %3776
        %3780 = vset.pattern.permute.xlu0 0
        %3781 = vperm.xlu0 %3780, %v3627
        %v3782 = vpop.permute.xlu0 %3781
        %3785 = vset.pattern.permute.xlu0 0
        %3786 = vperm.xlu0 %3785, %v3628
        %v3787 = vpop.permute.xlu0 %3786
        %v3789 = vmul.f32 %v3564, %v3632
        %v3790 = vmul.f32 %v3565, %v3637
        %v3791 = vmul.f32 %v3566, %v3642
        %v3792 = vmul.f32 %v3567, %v3647
        %v3793 = vmul.f32 %v3568, %v3652
        %v3794 = vmul.f32 %v3569, %v3657
        %v3795 = vmul.f32 %v3570, %v3662
        %v3796 = vmul.f32 %v3571, %v3667
        %v3797 = vmul.f32 %v3572, %v3672
        %v3798 = vmul.f32 %v3573, %v3677
        %v3799 = vmul.f32 %v3574, %v3682
        %v3800 = vmul.f32 %v3575, %v3687
        %v3801 = vmul.f32 %v3576, %v3692
        %v3802 = vmul.f32 %v3577, %v3697
        %v3803 = vmul.f32 %v3578, %v3702
        %v3804 = vmul.f32 %v3579, %v3707
        %v3805 = vmul.f32 %v3580, %v3712
        %v3806 = vmul.f32 %v3581, %v3717
        %v3807 = vmul.f32 %v3582, %v3722
        %v3808 = vmul.f32 %v3583, %v3727
        %v3809 = vmul.f32 %v3584, %v3732
        %v3810 = vmul.f32 %v3585, %v3737
        %v3811 = vmul.f32 %v3586, %v3742
        %v3812 = vmul.f32 %v3587, %v3747
        %v3813 = vmul.f32 %v3588, %v3752
        %v3814 = vmul.f32 %v3589, %v3757
        %v3815 = vmul.f32 %v3590, %v3762
        %v3816 = vmul.f32 %v3591, %v3767
        %v3817 = vmul.f32 %v3592, %v3772
        %v3818 = vmul.f32 %v3593, %v3777
        %v3819 = vmul.f32 %v3594, %v3782
        %v3820 = vmul.f32 %v3595, %v3787
        %s3821 = scalar_lea.vmem %s2, 40
        %v3822 = vld [vmem:[%s3821] sm:$0xff]
        %v3824 = vsel %vm506, %v3789, 0
        %v3827 = vsel %vm506, %v3790, 0
        %v3830 = vsel %vm506, %v3791, 0
        %v3833 = vsel %vm506, %v3792, 0
        %v3836 = vsel %vm506, %v3793, 0
        %v3839 = vsel %vm506, %v3794, 0
        %v3842 = vsel %vm506, %v3795, 0
        %v3845 = vsel %vm506, %v3796, 0
        %v3848 = vsel %vm506, %v3797, 0
        %v3851 = vsel %vm506, %v3798, 0
        %v3854 = vsel %vm506, %v3799, 0
        %v3857 = vsel %vm506, %v3800, 0
        %v3860 = vsel %vm506, %v3801, 0
        %v3863 = vsel %vm506, %v3802, 0
        %v3866 = vsel %vm506, %v3803, 0
        %v3869 = vsel %vm506, %v3804, 0
        %v3872 = vsel %vm506, %v3805, 0
        %v3875 = vsel %vm506, %v3806, 0
        %v3878 = vsel %vm506, %v3807, 0
        %v3881 = vsel %vm506, %v3808, 0
        %v3884 = vsel %vm506, %v3809, 0
        %v3887 = vsel %vm506, %v3810, 0
        %v3890 = vsel %vm506, %v3811, 0
        %v3893 = vsel %vm506, %v3812, 0
        %v3896 = vsel %vm506, %v3813, 0
        %v3899 = vsel %vm506, %v3814, 0
        %v3902 = vsel %vm506, %v3815, 0
        %v3905 = vsel %vm506, %v3816, 0
        %v3908 = vsel %vm506, %v3817, 0
        %v3911 = vsel %vm506, %v3818, 0
        %v3914 = vsel %vm506, %v3819, 0
        %v3917 = vsel %vm506, %v3820, 0
        %3919 = vmatprep.subr.mxu0 0.0
        %3920 = vmatpush1.msra.mxu0 %v3822
        %3921 = vmatprep.subr.mxu0 0.0
        %3922 = vmatpush1.msra.mxu0 0.0
        %3923 = vmatprep.subr.mxu0 0.0
        %3924 = vmatpush1.msra.mxu0 0.0
        %3925 = vmatprep.subr.mxu0 0.0
        %3926 = vmatpush1.msra.mxu0 0.0
        %3927 = vmatprep.subr.mxu0 0.0
        %3928 = vmatpush1.msra.mxu0 0.0
        %3929 = vmatprep.subr.mxu0 0.0
        %3930 = vmatpush1.msra.mxu0 0.0
        %3931 = vmatprep.subr.mxu0 0.0
        %3932 = vmatpush1.msra.mxu0 0.0
        %3933 = vmatprep.subr.mxu0 0.0
        %3934 = vmatpush1.msra.mxu0 0.0
        %3935 = vmatprep.subr.mxu0 0.0
        %3936 = vmatpush1.msra.mxu0 0.0
        %3937 = vmatprep.subr.mxu0 0.0
        %3938 = vmatpush1.msra.mxu0 0.0
        %3939 = vmatprep.subr.mxu0 0.0
        %3940 = vmatpush1.msra.mxu0 0.0
        %3941 = vmatprep.subr.mxu0 0.0
        %3942 = vmatpush1.msra.mxu0 0.0
        %3943 = vmatprep.subr.mxu0 0.0
        %3944 = vmatpush1.msra.mxu0 0.0
        %3945 = vmatprep.subr.mxu0 0.0
        %3946 = vmatpush1.msra.mxu0 0.0
        %3947 = vmatprep.subr.mxu0 0.0
        %3948 = vmatpush1.msra.mxu0 0.0
        %3949 = vmatprep.subr.mxu0 0.0
        %3950 = vmatpush1.msra.mxu0 0.0
        %3951 = vmatprep.subr.mxu0 0.0
        %3952 = vmatpush1.msra.mxu0 0.0
        %3953 = vmatprep.subr.mxu0 0.0
        %3954 = vmatpush1.msra.mxu0 0.0
        %3955 = vmatprep.subr.mxu0 0.0
        %3956 = vmatpush1.msra.mxu0 0.0
        %3957 = vmatprep.subr.mxu0 0.0
        %3958 = vmatpush1.msra.mxu0 0.0
        %3959 = vmatprep.subr.mxu0 0.0
        %3960 = vmatpush1.msra.mxu0 0.0
        %3961 = vmatprep.subr.mxu0 0.0
        %3962 = vmatpush1.msra.mxu0 0.0
        %3963 = vmatprep.subr.mxu0 0.0
        %3964 = vmatpush1.msra.mxu0 0.0
        %3965 = vmatprep.subr.mxu0 0.0
        %3966 = vmatpush1.msra.mxu0 0.0
        %3967 = vmatprep.subr.mxu0 0.0
        %3968 = vmatpush1.msra.mxu0 0.0
        %3969 = vmatprep.subr.mxu0 0.0
        %3970 = vmatpush1.msra.mxu0 0.0
        %3971 = vmatprep.subr.mxu0 0.0
        %3972 = vmatpush1.msra.mxu0 0.0
        %3973 = vmatprep.subr.mxu0 0.0
        %3974 = vmatpush1.msra.mxu0 0.0
        %3975 = vmatprep.subr.mxu0 0.0
        %3976 = vmatpush1.msra.mxu0 0.0
        %3977 = vmatprep.subr.mxu0 0.0
        %3978 = vmatpush1.msra.mxu0 0.0
        %3979 = vmatprep.subr.mxu0 0.0
        %3980 = vmatpush1.msra.mxu0 0.0
        %3981 = vmatprep.subr.mxu0 0.0
        %3982 = vmatpush1.msra.mxu0 0.0
        %3983 = vmatprep.mubr.f32.mxu0 0.0
        %3984 = vmatmul.mubr.f32.gmra.mrb[0].mxu0 %v3824
        %v3985 = vpop.f32.mrb[0].mxu0
        %v3986 = vadd.f32 0.0, %v3985
        %v3987 = vpop.f32.mrb[0].mxu0
        %3988 = vmatprep.mubr.f32.mxu0 0.0
        %3989 = vmatmul.mubr.f32.gmra.mrb[0].mxu0 %v3827
        %v3990 = vpop.f32.mrb[0].mxu0
        %v3991 = vadd.f32 0.0, %v3990
        %v3992 = vpop.f32.mrb[0].mxu0
        %3993 = vmatprep.mubr.f32.mxu0 0.0
        %3994 = vmatmul.mubr.f32.gmra.mrb[0].mxu0 %v3830
        %v3995 = vpop.f32.mrb[0].mxu0
        %v3996 = vadd.f32 0.0, %v3995
        %v3997 = vpop.f32.mrb[0].mxu0
        %3998 = vmatprep.mubr.f32.mxu0 0.0
        %3999 = vmatmul.mubr.f32.gmra.mrb[0].mxu0 %v3833
        %v4000 = vpop.f32.mrb[0].mxu0
        %v4001 = vadd.f32 0.0, %v4000
        %v4002 = vpop.f32.mrb[0].mxu0
        %4003 = vmatprep.mubr.f32.mxu0 0.0
        %4004 = vmatmul.mubr.f32.gmra.mrb[0].mxu0 %v3836
        %v4005 = vpop.f32.mrb[0].mxu0
        %v4006 = vadd.f32 0.0, %v4005
        %v4007 = vpop.f32.mrb[0].mxu0
        %4008 = vmatprep.mubr.f32.mxu0 0.0
        %4009 = vmatmul.mubr.f32.gmra.mrb[0].mxu0 %v3839
        %v4010 = vpop.f32.mrb[0].mxu0
        %v4011 = vadd.f32 0.0, %v4010
        %v4012 = vpop.f32.mrb[0].mxu0
        %4013 = vmatprep.mubr.f32.mxu0 0.0
        %4014 = vmatmul.mubr.f32.gmra.mrb[0].mxu0 %v3842
        %v4015 = vpop.f32.mrb[0].mxu0
        %v4016 = vadd.f32 0.0, %v4015
        %v4017 = vpop.f32.mrb[0].mxu0
        %4018 = vmatprep.mubr.f32.mxu0 0.0
        %4019 = vmatmul.mubr.f32.gmra.mrb[0].mxu0 %v3845
        %v4020 = vpop.f32.mrb[0].mxu0
        %v4021 = vadd.f32 0.0, %v4020
        %v4022 = vpop.f32.mrb[0].mxu0
        %4023 = vmatprep.mubr.f32.mxu0 0.0
        %4024 = vmatmul.mubr.f32.gmra.mrb[0].mxu0 %v3848
        %v4025 = vpop.f32.mrb[0].mxu0
        %v4026 = vadd.f32 0.0, %v4025
        %v4027 = vpop.f32.mrb[0].mxu0
        %4028 = vmatprep.mubr.f32.mxu0 0.0
        %4029 = vmatmul.mubr.f32.gmra.mrb[0].mxu0 %v3851
        %v4030 = vpop.f32.mrb[0].mxu0
        %v4031 = vadd.f32 0.0, %v4030
        %v4032 = vpop.f32.mrb[0].mxu0
        %4033 = vmatprep.mubr.f32.mxu0 0.0
        %4034 = vmatmul.mubr.f32.gmra.mrb[0].mxu0 %v3854
        %v4035 = vpop.f32.mrb[0].mxu0
        %v4036 = vadd.f32 0.0, %v4035
        %v4037 = vpop.f32.mrb[0].mxu0
        %4038 = vmatprep.mubr.f32.mxu0 0.0
        %4039 = vmatmul.mubr.f32.gmra.mrb[0].mxu0 %v3857
        %v4040 = vpop.f32.mrb[0].mxu0
        %v4041 = vadd.f32 0.0, %v4040
        %v4042 = vpop.f32.mrb[0].mxu0
        %4043 = vmatprep.mubr.f32.mxu0 0.0
        %4044 = vmatmul.mubr.f32.gmra.mrb[0].mxu0 %v3860
        %v4045 = vpop.f32.mrb[0].mxu0
        %v4046 = vadd.f32 0.0, %v4045
        %v4047 = vpop.f32.mrb[0].mxu0
        %4048 = vmatprep.mubr.f32.mxu0 0.0
        %4049 = vmatmul.mubr.f32.gmra.mrb[0].mxu0 %v3863
        %v4050 = vpop.f32.mrb[0].mxu0
        %v4051 = vadd.f32 0.0, %v4050
        %v4052 = vpop.f32.mrb[0].mxu0
        %4053 = vmatprep.mubr.f32.mxu0 0.0
        %4054 = vmatmul.mubr.f32.gmra.mrb[0].mxu0 %v3866
        %v4055 = vpop.f32.mrb[0].mxu0
        %v4056 = vadd.f32 0.0, %v4055
        %v4057 = vpop.f32.mrb[0].mxu0
        %4058 = vmatprep.mubr.f32.mxu0 0.0
        %4059 = vmatmul.mubr.f32.gmra.mrb[0].mxu0 %v3869
        %v4060 = vpop.f32.mrb[0].mxu0
        %v4061 = vadd.f32 0.0, %v4060
        %v4062 = vpop.f32.mrb[0].mxu0
        %4063 = vmatprep.mubr.f32.mxu0 0.0
        %4064 = vmatmul.mubr.f32.gmra.mrb[0].mxu0 %v3872
        %v4065 = vpop.f32.mrb[0].mxu0
        %v4066 = vadd.f32 0.0, %v4065
        %v4067 = vpop.f32.mrb[0].mxu0
        %4068 = vmatprep.mubr.f32.mxu0 0.0
        %4069 = vmatmul.mubr.f32.gmra.mrb[0].mxu0 %v3875
        %v4070 = vpop.f32.mrb[0].mxu0
        %v4071 = vadd.f32 0.0, %v4070
        %v4072 = vpop.f32.mrb[0].mxu0
        %4073 = vmatprep.mubr.f32.mxu0 0.0
        %4074 = vmatmul.mubr.f32.gmra.mrb[0].mxu0 %v3878
        %v4075 = vpop.f32.mrb[0].mxu0
        %v4076 = vadd.f32 0.0, %v4075
        %v4077 = vpop.f32.mrb[0].mxu0
        %4078 = vmatprep.mubr.f32.mxu0 0.0
        %4079 = vmatmul.mubr.f32.gmra.mrb[0].mxu0 %v3881
        %v4080 = vpop.f32.mrb[0].mxu0
        %v4081 = vadd.f32 0.0, %v4080
        %v4082 = vpop.f32.mrb[0].mxu0
        %4083 = vmatprep.mubr.f32.mxu0 0.0
        %4084 = vmatmul.mubr.f32.gmra.mrb[0].mxu0 %v3884
        %v4085 = vpop.f32.mrb[0].mxu0
        %v4086 = vadd.f32 0.0, %v4085
        %v4087 = vpop.f32.mrb[0].mxu0
        %4088 = vmatprep.mubr.f32.mxu0 0.0
        %4089 = vmatmul.mubr.f32.gmra.mrb[0].mxu0 %v3887
        %v4090 = vpop.f32.mrb[0].mxu0
        %v4091 = vadd.f32 0.0, %v4090
        %v4092 = vpop.f32.mrb[0].mxu0
        %4093 = vmatprep.mubr.f32.mxu0 0.0
        %4094 = vmatmul.mubr.f32.gmra.mrb[0].mxu0 %v3890
        %v4095 = vpop.f32.mrb[0].mxu0
        %v4096 = vadd.f32 0.0, %v4095
        %v4097 = vpop.f32.mrb[0].mxu0
        %4098 = vmatprep.mubr.f32.mxu0 0.0
        %4099 = vmatmul.mubr.f32.gmra.mrb[0].mxu0 %v3893
        %v4100 = vpop.f32.mrb[0].mxu0
        %v4101 = vadd.f32 0.0, %v4100
        %v4102 = vpop.f32.mrb[0].mxu0
        %4103 = vmatprep.mubr.f32.mxu0 0.0
        %4104 = vmatmul.mubr.f32.gmra.mrb[0].mxu0 %v3896
        %v4105 = vpop.f32.mrb[0].mxu0
        %v4106 = vadd.f32 0.0, %v4105
        %v4107 = vpop.f32.mrb[0].mxu0
        %4108 = vmatprep.mubr.f32.mxu0 0.0
        %4109 = vmatmul.mubr.f32.gmra.mrb[0].mxu0 %v3899
        %v4110 = vpop.f32.mrb[0].mxu0
        %v4111 = vadd.f32 0.0, %v4110
        %v4112 = vpop.f32.mrb[0].mxu0
        %4113 = vmatprep.mubr.f32.mxu0 0.0
        %4114 = vmatmul.mubr.f32.gmra.mrb[0].mxu0 %v3902
        %v4115 = vpop.f32.mrb[0].mxu0
        %v4116 = vadd.f32 0.0, %v4115
        %v4117 = vpop.f32.mrb[0].mxu0
        %4118 = vmatprep.mubr.f32.mxu0 0.0
        %4119 = vmatmul.mubr.f32.gmra.mrb[0].mxu0 %v3905
        %v4120 = vpop.f32.mrb[0].mxu0
        %v4121 = vadd.f32 0.0, %v4120
        %v4122 = vpop.f32.mrb[0].mxu0
        %4123 = vmatprep.mubr.f32.mxu0 0.0
        %4124 = vmatmul.mubr.f32.gmra.mrb[0].mxu0 %v3908
        %v4125 = vpop.f32.mrb[0].mxu0
        %v4126 = vadd.f32 0.0, %v4125
        %v4127 = vpop.f32.mrb[0].mxu0
        %4128 = vmatprep.mubr.f32.mxu0 0.0
        %4129 = vmatmul.mubr.f32.gmra.mrb[0].mxu0 %v3911
        %v4130 = vpop.f32.mrb[0].mxu0
        %v4131 = vadd.f32 0.0, %v4130
        %v4132 = vpop.f32.mrb[0].mxu0
        %4133 = vmatprep.mubr.f32.mxu0 0.0
        %4134 = vmatmul.mubr.f32.gmra.mrb[0].mxu0 %v3914
        %v4135 = vpop.f32.mrb[0].mxu0
        %v4136 = vadd.f32 0.0, %v4135
        %v4137 = vpop.f32.mrb[0].mxu0
        %4138 = vmatprep.mubr.f32.mxu0 0.0
        %4139 = vmatmul.mubr.f32.gmra.mrb[0].mxu0 %v3917
        %v4140 = vpop.f32.mrb[0].mxu0
        %v4141 = vadd.f32 0.0, %v4140
        %v4142 = vpop.f32.mrb[0].mxu0
        %4143 = vdwg.mxu0
        %v4144 = vld [vmem:[#allocation2] sm:$0xff]
        %v4145 = vld [vmem:[#allocation2 + $0x8] sm:$0xff]
        %v4146 = vld [vmem:[#allocation2 + $0x10] sm:$0xff]
        %v4147 = vld [vmem:[#allocation2 + $0x18] sm:$0xff]
        %v4148 = vld [vmem:[#allocation2 + $0x20] sm:$0xff]
        %v4149 = vld [vmem:[#allocation2 + $0x28] sm:$0xff]
        %v4150 = vld [vmem:[#allocation2 + $0x30] sm:$0xff]
        %v4151 = vld [vmem:[#allocation2 + $0x38] sm:$0xff]
        %v4152 = vld [vmem:[#allocation2 + $0x40] sm:$0xff]
        %v4153 = vld [vmem:[#allocation2 + $0x48] sm:$0xff]
        %v4154 = vld [vmem:[#allocation2 + $0x50] sm:$0xff]
        %v4155 = vld [vmem:[#allocation2 + $0x58] sm:$0xff]
        %v4156 = vld [vmem:[#allocation2 + $0x60] sm:$0xff]
        %v4157 = vld [vmem:[#allocation2 + $0x68] sm:$0xff]
        %v4158 = vld [vmem:[#allocation2 + $0x70] sm:$0xff]
        %v4159 = vld [vmem:[#allocation2 + $0x78] sm:$0xff]
        %v4160 = vld [vmem:[#allocation2 + $0x80] sm:$0xff]
        %v4161 = vld [vmem:[#allocation2 + $0x88] sm:$0xff]
        %v4162 = vld [vmem:[#allocation2 + $0x90] sm:$0xff]
        %v4163 = vld [vmem:[#allocation2 + $0x98] sm:$0xff]
        %v4164 = vld [vmem:[#allocation2 + $0xa0] sm:$0xff]
        %v4165 = vld [vmem:[#allocation2 + $0xa8] sm:$0xff]
        %v4166 = vld [vmem:[#allocation2 + $0xb0] sm:$0xff]
        %v4167 = vld [vmem:[#allocation2 + $0xb8] sm:$0xff]
        %v4168 = vld [vmem:[#allocation2 + $0xc0] sm:$0xff]
        %v4169 = vld [vmem:[#allocation2 + $0xc8] sm:$0xff]
        %v4170 = vld [vmem:[#allocation2 + $0xd0] sm:$0xff]
        %v4171 = vld [vmem:[#allocation2 + $0xd8] sm:$0xff]
        %v4172 = vld [vmem:[#allocation2 + $0xe0] sm:$0xff]
        %v4173 = vld [vmem:[#allocation2 + $0xe8] sm:$0xff]
        %v4174 = vld [vmem:[#allocation2 + $0xf0] sm:$0xff]
        %v4175 = vld [vmem:[#allocation2 + $0xf8] sm:$0xff]
        %v4176 = vadd.f32 %v4144, %v3986
        %v4177 = vadd.f32 %v4145, %v3991
        %v4178 = vadd.f32 %v4146, %v3996
        %v4179 = vadd.f32 %v4147, %v4001
        %v4180 = vadd.f32 %v4148, %v4006
        %v4181 = vadd.f32 %v4149, %v4011
        %v4182 = vadd.f32 %v4150, %v4016
        %v4183 = vadd.f32 %v4151, %v4021
        %v4184 = vadd.f32 %v4152, %v4026
        %v4185 = vadd.f32 %v4153, %v4031
        %v4186 = vadd.f32 %v4154, %v4036
        %v4187 = vadd.f32 %v4155, %v4041
        %v4188 = vadd.f32 %v4156, %v4046
        %v4189 = vadd.f32 %v4157, %v4051
        %v4190 = vadd.f32 %v4158, %v4056
        %v4191 = vadd.f32 %v4159, %v4061
        %v4192 = vadd.f32 %v4160, %v4066
        %v4193 = vadd.f32 %v4161, %v4071
        %v4194 = vadd.f32 %v4162, %v4076
        %v4195 = vadd.f32 %v4163, %v4081
        %v4196 = vadd.f32 %v4164, %v4086
        %v4197 = vadd.f32 %v4165, %v4091
        %v4198 = vadd.f32 %v4166, %v4096
        %v4199 = vadd.f32 %v4167, %v4101
        %v4200 = vadd.f32 %v4168, %v4106
        %v4201 = vadd.f32 %v4169, %v4111
        %v4202 = vadd.f32 %v4170, %v4116
        %v4203 = vadd.f32 %v4171, %v4121
        %v4204 = vadd.f32 %v4172, %v4126
        %v4205 = vadd.f32 %v4173, %v4131
        %v4206 = vadd.f32 %v4174, %v4136
        %v4207 = vadd.f32 %v4175, %v4141
        %4208 = vst [vmem:[#allocation2] sm:$0xff] %v4176
        %4209 = vst [vmem:[#allocation2 + $0x8] sm:$0xff] %v4177
        %4210 = vst [vmem:[#allocation2 + $0x10] sm:$0xff] %v4178
        %4211 = vst [vmem:[#allocation2 + $0x18] sm:$0xff] %v4179
        %4212 = vst [vmem:[#allocation2 + $0x20] sm:$0xff] %v4180
        %4213 = vst [vmem:[#allocation2 + $0x28] sm:$0xff] %v4181
        %4214 = vst [vmem:[#allocation2 + $0x30] sm:$0xff] %v4182
        %4215 = vst [vmem:[#allocation2 + $0x38] sm:$0xff] %v4183
        %4216 = vst [vmem:[#allocation2 + $0x40] sm:$0xff] %v4184
        %4217 = vst [vmem:[#allocation2 + $0x48] sm:$0xff] %v4185
        %4218 = vst [vmem:[#allocation2 + $0x50] sm:$0xff] %v4186
        %4219 = vst [vmem:[#allocation2 + $0x58] sm:$0xff] %v4187
        %4220 = vst [vmem:[#allocation2 + $0x60] sm:$0xff] %v4188
        %4221 = vst [vmem:[#allocation2 + $0x68] sm:$0xff] %v4189
        %4222 = vst [vmem:[#allocation2 + $0x70] sm:$0xff] %v4190
        %4223 = vst [vmem:[#allocation2 + $0x78] sm:$0xff] %v4191
        %4224 = vst [vmem:[#allocation2 + $0x80] sm:$0xff] %v4192
        %4225 = vst [vmem:[#allocation2 + $0x88] sm:$0xff] %v4193
        %4226 = vst [vmem:[#allocation2 + $0x90] sm:$0xff] %v4194
        %4227 = vst [vmem:[#allocation2 + $0x98] sm:$0xff] %v4195
        %4228 = vst [vmem:[#allocation2 + $0xa0] sm:$0xff] %v4196
        %4229 = vst [vmem:[#allocation2 + $0xa8] sm:$0xff] %v4197
        %4230 = vst [vmem:[#allocation2 + $0xb0] sm:$0xff] %v4198
        %4231 = vst [vmem:[#allocation2 + $0xb8] sm:$0xff] %v4199
        %4232 = vst [vmem:[#allocation2 + $0xc0] sm:$0xff] %v4200
        %4233 = vst [vmem:[#allocation2 + $0xc8] sm:$0xff] %v4201
        %4234 = vst [vmem:[#allocation2 + $0xd0] sm:$0xff] %v4202
        %4235 = vst [vmem:[#allocation2 + $0xd8] sm:$0xff] %v4203
        %4236 = vst [vmem:[#allocation2 + $0xe0] sm:$0xff] %v4204
        %4237 = vst [vmem:[#allocation2 + $0xe8] sm:$0xff] %v4205
        %4238 = vst [vmem:[#allocation2 + $0xf0] sm:$0xff] %v4206
        %4239 = vst [vmem:[#allocation2 + $0xf8] sm:$0xff] %v4207
        %v4240 = vld [vmem:[%s248 + $0x20] sm:$0xff]
        %v4241 = vld [vmem:[%s248 + $0x28] sm:$0xff]
        %v4242 = vld [vmem:[%s248 + $0x30] sm:$0xff]
        %v4243 = vld [vmem:[%s248 + $0x38] sm:$0xff]
        %v4244 = vld [vmem:[%s248 + $0x40] sm:$0xff]
        %v4245 = vld [vmem:[%s248 + $0x48] sm:$0xff]
        %v4246 = vld [vmem:[%s248 + $0x50] sm:$0xff]
        %v4247 = vld [vmem:[%s248 + $0x58] sm:$0xff]
        %v4248 = vld [vmem:[%s248 + $0x60] sm:$0xff]
        %v4249 = vld [vmem:[%s248 + $0x68] sm:$0xff]
        %v4250 = vld [vmem:[%s248 + $0x70] sm:$0xff]
        %v4251 = vld [vmem:[%s248 + $0x78] sm:$0xff]
        %v4252 = vld [vmem:[%s248 + $0x80] sm:$0xff]
        %v4253 = vld [vmem:[%s248 + $0x88] sm:$0xff]
        %v4254 = vld [vmem:[%s248 + $0x90] sm:$0xff]
        %v4255 = vld [vmem:[%s248 + $0x98] sm:$0xff]
        %v4256 = vld [vmem:[%s248 + $0xa0] sm:$0xff]
        %v4257 = vld [vmem:[%s248 + $0xa8] sm:$0xff]
        %v4258 = vld [vmem:[%s248 + $0xb0] sm:$0xff]
        %v4259 = vld [vmem:[%s248 + $0xb8] sm:$0xff]
        %v4260 = vld [vmem:[%s248 + $0xc0] sm:$0xff]
        %v4261 = vld [vmem:[%s248 + $0xc8] sm:$0xff]
        %v4262 = vld [vmem:[%s248 + $0xd0] sm:$0xff]
        %v4263 = vld [vmem:[%s248 + $0xd8] sm:$0xff]
        %v4264 = vld [vmem:[%s248 + $0xe0] sm:$0xff]
        %v4265 = vld [vmem:[%s248 + $0xe8] sm:$0xff]
        %v4266 = vld [vmem:[%s248 + $0xf0] sm:$0xff]
        %v4267 = vld [vmem:[%s248 + $0xf8] sm:$0xff]
        %v4268 = vld [vmem:[%s248 + $0x100] sm:$0xff]
        %v4269 = vld [vmem:[%s248 + $0x108] sm:$0xff]
        %v4270 = vld [vmem:[%s248 + $0x110] sm:$0xff]
        %v4271 = vld [vmem:[%s248 + $0x118] sm:$0xff]
        %s4272 = scalar_lea.vmem %s1, 1536
        %v4273 = vld [vmem:[%s4272] sm:$0xff]
        %v4274 = vld [vmem:[%s4272 + $0x8] sm:$0xff]
        %v4275 = vld [vmem:[%s4272 + $0x10] sm:$0xff]
        %v4276 = vld [vmem:[%s4272 + $0x18] sm:$0xff]
        %v4277 = vld [vmem:[%s4272 + $0x20] sm:$0xff]
        %v4278 = vld [vmem:[%s4272 + $0x28] sm:$0xff]
        %v4279 = vld [vmem:[%s4272 + $0x30] sm:$0xff]
        %v4280 = vld [vmem:[%s4272 + $0x38] sm:$0xff]
        %v4281 = vld [vmem:[%s4272 + $0x40] sm:$0xff]
        %v4282 = vld [vmem:[%s4272 + $0x48] sm:$0xff]
        %v4283 = vld [vmem:[%s4272 + $0x50] sm:$0xff]
        %v4284 = vld [vmem:[%s4272 + $0x58] sm:$0xff]
        %v4285 = vld [vmem:[%s4272 + $0x60] sm:$0xff]
        %v4286 = vld [vmem:[%s4272 + $0x68] sm:$0xff]
        %v4287 = vld [vmem:[%s4272 + $0x70] sm:$0xff]
        %v4288 = vld [vmem:[%s4272 + $0x78] sm:$0xff]
        %v4289 = vld [vmem:[%s4272 + $0x80] sm:$0xff]
        %v4290 = vld [vmem:[%s4272 + $0x88] sm:$0xff]
        %v4291 = vld [vmem:[%s4272 + $0x90] sm:$0xff]
        %v4292 = vld [vmem:[%s4272 + $0x98] sm:$0xff]
        %v4293 = vld [vmem:[%s4272 + $0xa0] sm:$0xff]
        %v4294 = vld [vmem:[%s4272 + $0xa8] sm:$0xff]
        %v4295 = vld [vmem:[%s4272 + $0xb0] sm:$0xff]
        %v4296 = vld [vmem:[%s4272 + $0xb8] sm:$0xff]
        %v4297 = vld [vmem:[%s4272 + $0xc0] sm:$0xff]
        %v4298 = vld [vmem:[%s4272 + $0xc8] sm:$0xff]
        %v4299 = vld [vmem:[%s4272 + $0xd0] sm:$0xff]
        %v4300 = vld [vmem:[%s4272 + $0xd8] sm:$0xff]
        %v4301 = vld [vmem:[%s4272 + $0xe0] sm:$0xff]
        %v4302 = vld [vmem:[%s4272 + $0xe8] sm:$0xff]
        %v4303 = vld [vmem:[%s4272 + $0xf0] sm:$0xff]
        %v4304 = vld [vmem:[%s4272 + $0xf8] sm:$0xff]
        %4306 = vset.pattern.permute.xlu0 0
        %4307 = vperm.xlu0 %4306, %v4273
        %v4308 = vpop.permute.xlu0 %4307
        %4311 = vset.pattern.permute.xlu0 0
        %4312 = vperm.xlu0 %4311, %v4274
        %v4313 = vpop.permute.xlu0 %4312
        %4316 = vset.pattern.permute.xlu0 0
        %4317 = vperm.xlu0 %4316, %v4275
        %v4318 = vpop.permute.xlu0 %4317
        %4321 = vset.pattern.permute.xlu0 0
        %4322 = vperm.xlu0 %4321, %v4276
        %v4323 = vpop.permute.xlu0 %4322
        %4326 = vset.pattern.permute.xlu0 0
        %4327 = vperm.xlu0 %4326, %v4277
        %v4328 = vpop.permute.xlu0 %4327
        %4331 = vset.pattern.permute.xlu0 0
        %4332 = vperm.xlu0 %4331, %v4278
        %v4333 = vpop.permute.xlu0 %4332
        %4336 = vset.pattern.permute.xlu0 0
        %4337 = vperm.xlu0 %4336, %v4279
        %v4338 = vpop.permute.xlu0 %4337
        %4341 = vset.pattern.permute.xlu0 0
        %4342 = vperm.xlu0 %4341, %v4280
        %v4343 = vpop.permute.xlu0 %4342
        %4346 = vset.pattern.permute.xlu0 0
        %4347 = vperm.xlu0 %4346, %v4281
        %v4348 = vpop.permute.xlu0 %4347
        %4351 = vset.pattern.permute.xlu0 0
        %4352 = vperm.xlu0 %4351, %v4282
        %v4353 = vpop.permute.xlu0 %4352
        %4356 = vset.pattern.permute.xlu0 0
        %4357 = vperm.xlu0 %4356, %v4283
        %v4358 = vpop.permute.xlu0 %4357
        %4361 = vset.pattern.permute.xlu0 0
        %4362 = vperm.xlu0 %4361, %v4284
        %v4363 = vpop.permute.xlu0 %4362
        %4366 = vset.pattern.permute.xlu0 0
        %4367 = vperm.xlu0 %4366, %v4285
        %v4368 = vpop.permute.xlu0 %4367
        %4371 = vset.pattern.permute.xlu0 0
        %4372 = vperm.xlu0 %4371, %v4286
        %v4373 = vpop.permute.xlu0 %4372
        %4376 = vset.pattern.permute.xlu0 0
        %4377 = vperm.xlu0 %4376, %v4287
        %v4378 = vpop.permute.xlu0 %4377
        %4381 = vset.pattern.permute.xlu0 0
        %4382 = vperm.xlu0 %4381, %v4288
        %v4383 = vpop.permute.xlu0 %4382
        %4386 = vset.pattern.permute.xlu0 0
        %4387 = vperm.xlu0 %4386, %v4289
        %v4388 = vpop.permute.xlu0 %4387
        %4391 = vset.pattern.permute.xlu0 0
        %4392 = vperm.xlu0 %4391, %v4290
        %v4393 = vpop.permute.xlu0 %4392
        %4396 = vset.pattern.permute.xlu0 0
        %4397 = vperm.xlu0 %4396, %v4291
        %v4398 = vpop.permute.xlu0 %4397
        %4401 = vset.pattern.permute.xlu0 0
        %4402 = vperm.xlu0 %4401, %v4292
        %v4403 = vpop.permute.xlu0 %4402
        %4406 = vset.pattern.permute.xlu0 0
        %4407 = vperm.xlu0 %4406, %v4293
        %v4408 = vpop.permute.xlu0 %4407
        %4411 = vset.pattern.permute.xlu0 0
        %4412 = vperm.xlu0 %4411, %v4294
        %v4413 = vpop.permute.xlu0 %4412
        %4416 = vset.pattern.permute.xlu0 0
        %4417 = vperm.xlu0 %4416, %v4295
        %v4418 = vpop.permute.xlu0 %4417
        %4421 = vset.pattern.permute.xlu0 0
        %4422 = vperm.xlu0 %4421, %v4296
        %v4423 = vpop.permute.xlu0 %4422
        %4426 = vset.pattern.permute.xlu0 0
        %4427 = vperm.xlu0 %4426, %v4297
        %v4428 = vpop.permute.xlu0 %4427
        %4431 = vset.pattern.permute.xlu0 0
        %4432 = vperm.xlu0 %4431, %v4298
        %v4433 = vpop.permute.xlu0 %4432
        %4436 = vset.pattern.permute.xlu0 0
        %4437 = vperm.xlu0 %4436, %v4299
        %v4438 = vpop.permute.xlu0 %4437
        %4441 = vset.pattern.permute.xlu0 0
        %4442 = vperm.xlu0 %4441, %v4300
        %v4443 = vpop.permute.xlu0 %4442
        %4446 = vset.pattern.permute.xlu0 0
        %4447 = vperm.xlu0 %4446, %v4301
        %v4448 = vpop.permute.xlu0 %4447
        %4451 = vset.pattern.permute.xlu0 0
        %4452 = vperm.xlu0 %4451, %v4302
        %v4453 = vpop.permute.xlu0 %4452
        %4456 = vset.pattern.permute.xlu0 0
        %4457 = vperm.xlu0 %4456, %v4303
        %v4458 = vpop.permute.xlu0 %4457
        %4461 = vset.pattern.permute.xlu0 0
        %4462 = vperm.xlu0 %4461, %v4304
        %v4463 = vpop.permute.xlu0 %4462
        %v4465 = vmul.f32 %v4240, %v4308
        %v4466 = vmul.f32 %v4241, %v4313
        %v4467 = vmul.f32 %v4242, %v4318
        %v4468 = vmul.f32 %v4243, %v4323
        %v4469 = vmul.f32 %v4244, %v4328
        %v4470 = vmul.f32 %v4245, %v4333
        %v4471 = vmul.f32 %v4246, %v4338
        %v4472 = vmul.f32 %v4247, %v4343
        %v4473 = vmul.f32 %v4248, %v4348
        %v4474 = vmul.f32 %v4249, %v4353
        %v4475 = vmul.f32 %v4250, %v4358
        %v4476 = vmul.f32 %v4251, %v4363
        %v4477 = vmul.f32 %v4252, %v4368
        %v4478 = vmul.f32 %v4253, %v4373
        %v4479 = vmul.f32 %v4254, %v4378
        %v4480 = vmul.f32 %v4255, %v4383
        %v4481 = vmul.f32 %v4256, %v4388
        %v4482 = vmul.f32 %v4257, %v4393
        %v4483 = vmul.f32 %v4258, %v4398
        %v4484 = vmul.f32 %v4259, %v4403
        %v4485 = vmul.f32 %v4260, %v4408
        %v4486 = vmul.f32 %v4261, %v4413
        %v4487 = vmul.f32 %v4262, %v4418
        %v4488 = vmul.f32 %v4263, %v4423
        %v4489 = vmul.f32 %v4264, %v4428
        %v4490 = vmul.f32 %v4265, %v4433
        %v4491 = vmul.f32 %v4266, %v4438
        %v4492 = vmul.f32 %v4267, %v4443
        %v4493 = vmul.f32 %v4268, %v4448
        %v4494 = vmul.f32 %v4269, %v4453
        %v4495 = vmul.f32 %v4270, %v4458
        %v4496 = vmul.f32 %v4271, %v4463
        %s4497 = scalar_lea.vmem %s2, 48
        %v4498 = vld [vmem:[%s4497] sm:$0xff]
        %v4500 = vsel %vm506, %v4465, 0
        %v4503 = vsel %vm506, %v4466, 0
        %v4506 = vsel %vm506, %v4467, 0
        %v4509 = vsel %vm506, %v4468, 0
        %v4512 = vsel %vm506, %v4469, 0
        %v4515 = vsel %vm506, %v4470, 0
        %v4518 = vsel %vm506, %v4471, 0
        %v4521 = vsel %vm506, %v4472, 0
        %v4524 = vsel %vm506, %v4473, 0
        %v4527 = vsel %vm506, %v4474, 0
        %v4530 = vsel %vm506, %v4475, 0
        %v4533 = vsel %vm506, %v4476, 0
        %v4536 = vsel %vm506, %v4477, 0
        %v4539 = vsel %vm506, %v4478, 0
        %v4542 = vsel %vm506, %v4479, 0
        %v4545 = vsel %vm506, %v4480, 0
        %v4548 = vsel %vm506, %v4481, 0
        %v4551 = vsel %vm506, %v4482, 0
        %v4554 = vsel %vm506, %v4483, 0
        %v4557 = vsel %vm506, %v4484, 0
        %v4560 = vsel %vm506, %v4485, 0
        %v4563 = vsel %vm506, %v4486, 0
        %v4566 = vsel %vm506, %v4487, 0
        %v4569 = vsel %vm506, %v4488, 0
        %v4572 = vsel %vm506, %v4489, 0
        %v4575 = vsel %vm506, %v4490, 0
        %v4578 = vsel %vm506, %v4491, 0
        %v4581 = vsel %vm506, %v4492, 0
        %v4584 = vsel %vm506, %v4493, 0
        %v4587 = vsel %vm506, %v4494, 0
        %v4590 = vsel %vm506, %v4495, 0
        %v4593 = vsel %vm506, %v4496, 0
        %4595 = vmatprep.subr.mxu0 0.0
        %4596 = vmatpush1.msra.mxu0 %v4498
        %4597 = vmatprep.subr.mxu0 0.0
        %4598 = vmatpush1.msra.mxu0 0.0
        %4599 = vmatprep.subr.mxu0 0.0
        %4600 = vmatpush1.msra.mxu0 0.0
        %4601 = vmatprep.subr.mxu0 0.0
        %4602 = vmatpush1.msra.mxu0 0.0
        %4603 = vmatprep.subr.mxu0 0.0
        %4604 = vmatpush1.msra.mxu0 0.0
        %4605 = vmatprep.subr.mxu0 0.0
        %4606 = vmatpush1.msra.mxu0 0.0
        %4607 = vmatprep.subr.mxu0 0.0
        %4608 = vmatpush1.msra.mxu0 0.0
        %4609 = vmatprep.subr.mxu0 0.0
        %4610 = vmatpush1.msra.mxu0 0.0
        %4611 = vmatprep.subr.mxu0 0.0
        %4612 = vmatpush1.msra.mxu0 0.0
        %4613 = vmatprep.subr.mxu0 0.0
        %4614 = vmatpush1.msra.mxu0 0.0
        %4615 = vmatprep.subr.mxu0 0.0
        %4616 = vmatpush1.msra.mxu0 0.0
        %4617 = vmatprep.subr.mxu0 0.0
        %4618 = vmatpush1.msra.mxu0 0.0
        %4619 = vmatprep.subr.mxu0 0.0
        %4620 = vmatpush1.msra.mxu0 0.0
        %4621 = vmatprep.subr.mxu0 0.0
        %4622 = vmatpush1.msra.mxu0 0.0
        %4623 = vmatprep.subr.mxu0 0.0
        %4624 = vmatpush1.msra.mxu0 0.0
        %4625 = vmatprep.subr.mxu0 0.0
        %4626 = vmatpush1.msra.mxu0 0.0
        %4627 = vmatprep.subr.mxu0 0.0
        %4628 = vmatpush1.msra.mxu0 0.0
        %4629 = vmatprep.subr.mxu0 0.0
        %4630 = vmatpush1.msra.mxu0 0.0
        %4631 = vmatprep.subr.mxu0 0.0
        %4632 = vmatpush1.msra.mxu0 0.0
        %4633 = vmatprep.subr.mxu0 0.0
        %4634 = vmatpush1.msra.mxu0 0.0
        %4635 = vmatprep.subr.mxu0 0.0
        %4636 = vmatpush1.msra.mxu0 0.0
        %4637 = vmatprep.subr.mxu0 0.0
        %4638 = vmatpush1.msra.mxu0 0.0
        %4639 = vmatprep.subr.mxu0 0.0
        %4640 = vmatpush1.msra.mxu0 0.0
        %4641 = vmatprep.subr.mxu0 0.0
        %4642 = vmatpush1.msra.mxu0 0.0
        %4643 = vmatprep.subr.mxu0 0.0
        %4644 = vmatpush1.msra.mxu0 0.0
        %4645 = vmatprep.subr.mxu0 0.0
        %4646 = vmatpush1.msra.mxu0 0.0
        %4647 = vmatprep.subr.mxu0 0.0
        %4648 = vmatpush1.msra.mxu0 0.0
        %4649 = vmatprep.subr.mxu0 0.0
        %4650 = vmatpush1.msra.mxu0 0.0
        %4651 = vmatprep.subr.mxu0 0.0
        %4652 = vmatpush1.msra.mxu0 0.0
        %4653 = vmatprep.subr.mxu0 0.0
        %4654 = vmatpush1.msra.mxu0 0.0
        %4655 = vmatprep.subr.mxu0 0.0
        %4656 = vmatpush1.msra.mxu0 0.0
        %4657 = vmatprep.subr.mxu0 0.0
        %4658 = vmatpush1.msra.mxu0 0.0
        %4659 = vmatprep.mubr.f32.mxu0 0.0
        %4660 = vmatmul.mubr.f32.gmra.mrb[0].mxu0 %v4500
        %v4661 = vpop.f32.mrb[0].mxu0
        %v4662 = vadd.f32 0.0, %v4661
        %v4663 = vpop.f32.mrb[0].mxu0
        %4664 = vmatprep.mubr.f32.mxu0 0.0
        %4665 = vmatmul.mubr.f32.gmra.mrb[0].mxu0 %v4503
        %v4666 = vpop.f32.mrb[0].mxu0
        %v4667 = vadd.f32 0.0, %v4666
        %v4668 = vpop.f32.mrb[0].mxu0
        %4669 = vmatprep.mubr.f32.mxu0 0.0
        %4670 = vmatmul.mubr.f32.gmra.mrb[0].mxu0 %v4506
        %v4671 = vpop.f32.mrb[0].mxu0
        %v4672 = vadd.f32 0.0, %v4671
        %v4673 = vpop.f32.mrb[0].mxu0
        %4674 = vmatprep.mubr.f32.mxu0 0.0
        %4675 = vmatmul.mubr.f32.gmra.mrb[0].mxu0 %v4509
        %v4676 = vpop.f32.mrb[0].mxu0
        %v4677 = vadd.f32 0.0, %v4676
        %v4678 = vpop.f32.mrb[0].mxu0
        %4679 = vmatprep.mubr.f32.mxu0 0.0
        %4680 = vmatmul.mubr.f32.gmra.mrb[0].mxu0 %v4512
        %v4681 = vpop.f32.mrb[0].mxu0
        %v4682 = vadd.f32 0.0, %v4681
        %v4683 = vpop.f32.mrb[0].mxu0
        %4684 = vmatprep.mubr.f32.mxu0 0.0
        %4685 = vmatmul.mubr.f32.gmra.mrb[0].mxu0 %v4515
        %v4686 = vpop.f32.mrb[0].mxu0
        %v4687 = vadd.f32 0.0, %v4686
        %v4688 = vpop.f32.mrb[0].mxu0
        %4689 = vmatprep.mubr.f32.mxu0 0.0
        %4690 = vmatmul.mubr.f32.gmra.mrb[0].mxu0 %v4518
        %v4691 = vpop.f32.mrb[0].mxu0
        %v4692 = vadd.f32 0.0, %v4691
        %v4693 = vpop.f32.mrb[0].mxu0
        %4694 = vmatprep.mubr.f32.mxu0 0.0
        %4695 = vmatmul.mubr.f32.gmra.mrb[0].mxu0 %v4521
        %v4696 = vpop.f32.mrb[0].mxu0
        %v4697 = vadd.f32 0.0, %v4696
        %v4698 = vpop.f32.mrb[0].mxu0
        %4699 = vmatprep.mubr.f32.mxu0 0.0
        %4700 = vmatmul.mubr.f32.gmra.mrb[0].mxu0 %v4524
        %v4701 = vpop.f32.mrb[0].mxu0
        %v4702 = vadd.f32 0.0, %v4701
        %v4703 = vpop.f32.mrb[0].mxu0
        %4704 = vmatprep.mubr.f32.mxu0 0.0
        %4705 = vmatmul.mubr.f32.gmra.mrb[0].mxu0 %v4527
        %v4706 = vpop.f32.mrb[0].mxu0
        %v4707 = vadd.f32 0.0, %v4706
        %v4708 = vpop.f32.mrb[0].mxu0
        %4709 = vmatprep.mubr.f32.mxu0 0.0
        %4710 = vmatmul.mubr.f32.gmra.mrb[0].mxu0 %v4530
        %v4711 = vpop.f32.mrb[0].mxu0
        %v4712 = vadd.f32 0.0, %v4711
        %v4713 = vpop.f32.mrb[0].mxu0
        %4714 = vmatprep.mubr.f32.mxu0 0.0
        %4715 = vmatmul.mubr.f32.gmra.mrb[0].mxu0 %v4533
        %v4716 = vpop.f32.mrb[0].mxu0
        %v4717 = vadd.f32 0.0, %v4716
        %v4718 = vpop.f32.mrb[0].mxu0
        %4719 = vmatprep.mubr.f32.mxu0 0.0
        %4720 = vmatmul.mubr.f32.gmra.mrb[0].mxu0 %v4536
        %v4721 = vpop.f32.mrb[0].mxu0
        %v4722 = vadd.f32 0.0, %v4721
        %v4723 = vpop.f32.mrb[0].mxu0
        %4724 = vmatprep.mubr.f32.mxu0 0.0
        %4725 = vmatmul.mubr.f32.gmra.mrb[0].mxu0 %v4539
        %v4726 = vpop.f32.mrb[0].mxu0
        %v4727 = vadd.f32 0.0, %v4726
        %v4728 = vpop.f32.mrb[0].mxu0
        %4729 = vmatprep.mubr.f32.mxu0 0.0
        %4730 = vmatmul.mubr.f32.gmra.mrb[0].mxu0 %v4542
        %v4731 = vpop.f32.mrb[0].mxu0
        %v4732 = vadd.f32 0.0, %v4731
        %v4733 = vpop.f32.mrb[0].mxu0
        %4734 = vmatprep.mubr.f32.mxu0 0.0
        %4735 = vmatmul.mubr.f32.gmra.mrb[0].mxu0 %v4545
        %v4736 = vpop.f32.mrb[0].mxu0
        %v4737 = vadd.f32 0.0, %v4736
        %v4738 = vpop.f32.mrb[0].mxu0
        %4739 = vmatprep.mubr.f32.mxu0 0.0
        %4740 = vmatmul.mubr.f32.gmra.mrb[0].mxu0 %v4548
        %v4741 = vpop.f32.mrb[0].mxu0
        %v4742 = vadd.f32 0.0, %v4741
        %v4743 = vpop.f32.mrb[0].mxu0
        %4744 = vmatprep.mubr.f32.mxu0 0.0
        %4745 = vmatmul.mubr.f32.gmra.mrb[0].mxu0 %v4551
        %v4746 = vpop.f32.mrb[0].mxu0
        %v4747 = vadd.f32 0.0, %v4746
        %v4748 = vpop.f32.mrb[0].mxu0
        %4749 = vmatprep.mubr.f32.mxu0 0.0
        %4750 = vmatmul.mubr.f32.gmra.mrb[0].mxu0 %v4554
        %v4751 = vpop.f32.mrb[0].mxu0
        %v4752 = vadd.f32 0.0, %v4751
        %v4753 = vpop.f32.mrb[0].mxu0
        %4754 = vmatprep.mubr.f32.mxu0 0.0
        %4755 = vmatmul.mubr.f32.gmra.mrb[0].mxu0 %v4557
        %v4756 = vpop.f32.mrb[0].mxu0
        %v4757 = vadd.f32 0.0, %v4756
        %v4758 = vpop.f32.mrb[0].mxu0
        %4759 = vmatprep.mubr.f32.mxu0 0.0
        %4760 = vmatmul.mubr.f32.gmra.mrb[0].mxu0 %v4560
        %v4761 = vpop.f32.mrb[0].mxu0
        %v4762 = vadd.f32 0.0, %v4761
        %v4763 = vpop.f32.mrb[0].mxu0
        %4764 = vmatprep.mubr.f32.mxu0 0.0
        %4765 = vmatmul.mubr.f32.gmra.mrb[0].mxu0 %v4563
        %v4766 = vpop.f32.mrb[0].mxu0
        %v4767 = vadd.f32 0.0, %v4766
        %v4768 = vpop.f32.mrb[0].mxu0
        %4769 = vmatprep.mubr.f32.mxu0 0.0
        %4770 = vmatmul.mubr.f32.gmra.mrb[0].mxu0 %v4566
        %v4771 = vpop.f32.mrb[0].mxu0
        %v4772 = vadd.f32 0.0, %v4771
        %v4773 = vpop.f32.mrb[0].mxu0
        %4774 = vmatprep.mubr.f32.mxu0 0.0
        %4775 = vmatmul.mubr.f32.gmra.mrb[0].mxu0 %v4569
        %v4776 = vpop.f32.mrb[0].mxu0
        %v4777 = vadd.f32 0.0, %v4776
        %v4778 = vpop.f32.mrb[0].mxu0
        %4779 = vmatprep.mubr.f32.mxu0 0.0
        %4780 = vmatmul.mubr.f32.gmra.mrb[0].mxu0 %v4572
        %v4781 = vpop.f32.mrb[0].mxu0
        %v4782 = vadd.f32 0.0, %v4781
        %v4783 = vpop.f32.mrb[0].mxu0
        %4784 = vmatprep.mubr.f32.mxu0 0.0
        %4785 = vmatmul.mubr.f32.gmra.mrb[0].mxu0 %v4575
        %v4786 = vpop.f32.mrb[0].mxu0
        %v4787 = vadd.f32 0.0, %v4786
        %v4788 = vpop.f32.mrb[0].mxu0
        %4789 = vmatprep.mubr.f32.mxu0 0.0
        %4790 = vmatmul.mubr.f32.gmra.mrb[0].mxu0 %v4578
        %v4791 = vpop.f32.mrb[0].mxu0
        %v4792 = vadd.f32 0.0, %v4791
        %v4793 = vpop.f32.mrb[0].mxu0
        %4794 = vmatprep.mubr.f32.mxu0 0.0
        %4795 = vmatmul.mubr.f32.gmra.mrb[0].mxu0 %v4581
        %v4796 = vpop.f32.mrb[0].mxu0
        %v4797 = vadd.f32 0.0, %v4796
        %v4798 = vpop.f32.mrb[0].mxu0
        %4799 = vmatprep.mubr.f32.mxu0 0.0
        %4800 = vmatmul.mubr.f32.gmra.mrb[0].mxu0 %v4584
        %v4801 = vpop.f32.mrb[0].mxu0
        %v4802 = vadd.f32 0.0, %v4801
        %v4803 = vpop.f32.mrb[0].mxu0
        %4804 = vmatprep.mubr.f32.mxu0 0.0
        %4805 = vmatmul.mubr.f32.gmra.mrb[0].mxu0 %v4587
        %v4806 = vpop.f32.mrb[0].mxu0
        %v4807 = vadd.f32 0.0, %v4806
        %v4808 = vpop.f32.mrb[0].mxu0
        %4809 = vmatprep.mubr.f32.mxu0 0.0
        %4810 = vmatmul.mubr.f32.gmra.mrb[0].mxu0 %v4590
        %v4811 = vpop.f32.mrb[0].mxu0
        %v4812 = vadd.f32 0.0, %v4811
        %v4813 = vpop.f32.mrb[0].mxu0
        %4814 = vmatprep.mubr.f32.mxu0 0.0
        %4815 = vmatmul.mubr.f32.gmra.mrb[0].mxu0 %v4593
        %v4816 = vpop.f32.mrb[0].mxu0
        %v4817 = vadd.f32 0.0, %v4816
        %v4818 = vpop.f32.mrb[0].mxu0
        %4819 = vdwg.mxu0
        %v4820 = vld [vmem:[#allocation2] sm:$0xff]
        %v4821 = vld [vmem:[#allocation2 + $0x8] sm:$0xff]
        %v4822 = vld [vmem:[#allocation2 + $0x10] sm:$0xff]
        %v4823 = vld [vmem:[#allocation2 + $0x18] sm:$0xff]
        %v4824 = vld [vmem:[#allocation2 + $0x20] sm:$0xff]
        %v4825 = vld [vmem:[#allocation2 + $0x28] sm:$0xff]
        %v4826 = vld [vmem:[#allocation2 + $0x30] sm:$0xff]
        %v4827 = vld [vmem:[#allocation2 + $0x38] sm:$0xff]
        %v4828 = vld [vmem:[#allocation2 + $0x40] sm:$0xff]
        %v4829 = vld [vmem:[#allocation2 + $0x48] sm:$0xff]
        %v4830 = vld [vmem:[#allocation2 + $0x50] sm:$0xff]
        %v4831 = vld [vmem:[#allocation2 + $0x58] sm:$0xff]
        %v4832 = vld [vmem:[#allocation2 + $0x60] sm:$0xff]
        %v4833 = vld [vmem:[#allocation2 + $0x68] sm:$0xff]
        %v4834 = vld [vmem:[#allocation2 + $0x70] sm:$0xff]
        %v4835 = vld [vmem:[#allocation2 + $0x78] sm:$0xff]
        %v4836 = vld [vmem:[#allocation2 + $0x80] sm:$0xff]
        %v4837 = vld [vmem:[#allocation2 + $0x88] sm:$0xff]
        %v4838 = vld [vmem:[#allocation2 + $0x90] sm:$0xff]
        %v4839 = vld [vmem:[#allocation2 + $0x98] sm:$0xff]
        %v4840 = vld [vmem:[#allocation2 + $0xa0] sm:$0xff]
        %v4841 = vld [vmem:[#allocation2 + $0xa8] sm:$0xff]
        %v4842 = vld [vmem:[#allocation2 + $0xb0] sm:$0xff]
        %v4843 = vld [vmem:[#allocation2 + $0xb8] sm:$0xff]
        %v4844 = vld [vmem:[#allocation2 + $0xc0] sm:$0xff]
        %v4845 = vld [vmem:[#allocation2 + $0xc8] sm:$0xff]
        %v4846 = vld [vmem:[#allocation2 + $0xd0] sm:$0xff]
        %v4847 = vld [vmem:[#allocation2 + $0xd8] sm:$0xff]
        %v4848 = vld [vmem:[#allocation2 + $0xe0] sm:$0xff]
        %v4849 = vld [vmem:[#allocation2 + $0xe8] sm:$0xff]
        %v4850 = vld [vmem:[#allocation2 + $0xf0] sm:$0xff]
        %v4851 = vld [vmem:[#allocation2 + $0xf8] sm:$0xff]
        %v4852 = vadd.f32 %v4820, %v4662
        %v4853 = vadd.f32 %v4821, %v4667
        %v4854 = vadd.f32 %v4822, %v4672
        %v4855 = vadd.f32 %v4823, %v4677
        %v4856 = vadd.f32 %v4824, %v4682
        %v4857 = vadd.f32 %v4825, %v4687
        %v4858 = vadd.f32 %v4826, %v4692
        %v4859 = vadd.f32 %v4827, %v4697
        %v4860 = vadd.f32 %v4828, %v4702
        %v4861 = vadd.f32 %v4829, %v4707
        %v4862 = vadd.f32 %v4830, %v4712
        %v4863 = vadd.f32 %v4831, %v4717
        %v4864 = vadd.f32 %v4832, %v4722
        %v4865 = vadd.f32 %v4833, %v4727
        %v4866 = vadd.f32 %v4834, %v4732
        %v4867 = vadd.f32 %v4835, %v4737
        %v4868 = vadd.f32 %v4836, %v4742
        %v4869 = vadd.f32 %v4837, %v4747
        %v4870 = vadd.f32 %v4838, %v4752
        %v4871 = vadd.f32 %v4839, %v4757
        %v4872 = vadd.f32 %v4840, %v4762
        %v4873 = vadd.f32 %v4841, %v4767
        %v4874 = vadd.f32 %v4842, %v4772
        %v4875 = vadd.f32 %v4843, %v4777
        %v4876 = vadd.f32 %v4844, %v4782
        %v4877 = vadd.f32 %v4845, %v4787
        %v4878 = vadd.f32 %v4846, %v4792
        %v4879 = vadd.f32 %v4847, %v4797
        %v4880 = vadd.f32 %v4848, %v4802
        %v4881 = vadd.f32 %v4849, %v4807
        %v4882 = vadd.f32 %v4850, %v4812
        %v4883 = vadd.f32 %v4851, %v4817
        %4884 = vst [vmem:[#allocation2] sm:$0xff] %v4852
        %4885 = vst [vmem:[#allocation2 + $0x8] sm:$0xff] %v4853
        %4886 = vst [vmem:[#allocation2 + $0x10] sm:$0xff] %v4854
        %4887 = vst [vmem:[#allocation2 + $0x18] sm:$0xff] %v4855
        %4888 = vst [vmem:[#allocation2 + $0x20] sm:$0xff] %v4856
        %4889 = vst [vmem:[#allocation2 + $0x28] sm:$0xff] %v4857
        %4890 = vst [vmem:[#allocation2 + $0x30] sm:$0xff] %v4858
        %4891 = vst [vmem:[#allocation2 + $0x38] sm:$0xff] %v4859
        %4892 = vst [vmem:[#allocation2 + $0x40] sm:$0xff] %v4860
        %4893 = vst [vmem:[#allocation2 + $0x48] sm:$0xff] %v4861
        %4894 = vst [vmem:[#allocation2 + $0x50] sm:$0xff] %v4862
        %4895 = vst [vmem:[#allocation2 + $0x58] sm:$0xff] %v4863
        %4896 = vst [vmem:[#allocation2 + $0x60] sm:$0xff] %v4864
        %4897 = vst [vmem:[#allocation2 + $0x68] sm:$0xff] %v4865
        %4898 = vst [vmem:[#allocation2 + $0x70] sm:$0xff] %v4866
        %4899 = vst [vmem:[#allocation2 + $0x78] sm:$0xff] %v4867
        %4900 = vst [vmem:[#allocation2 + $0x80] sm:$0xff] %v4868
        %4901 = vst [vmem:[#allocation2 + $0x88] sm:$0xff] %v4869
        %4902 = vst [vmem:[#allocation2 + $0x90] sm:$0xff] %v4870
        %4903 = vst [vmem:[#allocation2 + $0x98] sm:$0xff] %v4871
        %4904 = vst [vmem:[#allocation2 + $0xa0] sm:$0xff] %v4872
        %4905 = vst [vmem:[#allocation2 + $0xa8] sm:$0xff] %v4873
        %4906 = vst [vmem:[#allocation2 + $0xb0] sm:$0xff] %v4874
        %4907 = vst [vmem:[#allocation2 + $0xb8] sm:$0xff] %v4875
        %4908 = vst [vmem:[#allocation2 + $0xc0] sm:$0xff] %v4876
        %4909 = vst [vmem:[#allocation2 + $0xc8] sm:$0xff] %v4877
        %4910 = vst [vmem:[#allocation2 + $0xd0] sm:$0xff] %v4878
        %4911 = vst [vmem:[#allocation2 + $0xd8] sm:$0xff] %v4879
        %4912 = vst [vmem:[#allocation2 + $0xe0] sm:$0xff] %v4880
        %4913 = vst [vmem:[#allocation2 + $0xe8] sm:$0xff] %v4881
        %4914 = vst [vmem:[#allocation2 + $0xf0] sm:$0xff] %v4882
        %4915 = vst [vmem:[#allocation2 + $0xf8] sm:$0xff] %v4883
        %v4916 = vld [vmem:[%s248 + $0x21] sm:$0xff]
        %v4917 = vld [vmem:[%s248 + $0x29] sm:$0xff]
        %v4918 = vld [vmem:[%s248 + $0x31] sm:$0xff]
        %v4919 = vld [vmem:[%s248 + $0x39] sm:$0xff]
        %v4920 = vld [vmem:[%s248 + $0x41] sm:$0xff]
        %v4921 = vld [vmem:[%s248 + $0x49] sm:$0xff]
        %v4922 = vld [vmem:[%s248 + $0x51] sm:$0xff]
        %v4923 = vld [vmem:[%s248 + $0x59] sm:$0xff]
        %v4924 = vld [vmem:[%s248 + $0x61] sm:$0xff]
        %v4925 = vld [vmem:[%s248 + $0x69] sm:$0xff]
        %v4926 = vld [vmem:[%s248 + $0x71] sm:$0xff]
        %v4927 = vld [vmem:[%s248 + $0x79] sm:$0xff]
        %v4928 = vld [vmem:[%s248 + $0x81] sm:$0xff]
        %v4929 = vld [vmem:[%s248 + $0x89] sm:$0xff]
        %v4930 = vld [vmem:[%s248 + $0x91] sm:$0xff]
        %v4931 = vld [vmem:[%s248 + $0x99] sm:$0xff]
        %v4932 = vld [vmem:[%s248 + $0xa1] sm:$0xff]
        %v4933 = vld [vmem:[%s248 + $0xa9] sm:$0xff]
        %v4934 = vld [vmem:[%s248 + $0xb1] sm:$0xff]
        %v4935 = vld [vmem:[%s248 + $0xb9] sm:$0xff]
        %v4936 = vld [vmem:[%s248 + $0xc1] sm:$0xff]
        %v4937 = vld [vmem:[%s248 + $0xc9] sm:$0xff]
        %v4938 = vld [vmem:[%s248 + $0xd1] sm:$0xff]
        %v4939 = vld [vmem:[%s248 + $0xd9] sm:$0xff]
        %v4940 = vld [vmem:[%s248 + $0xe1] sm:$0xff]
        %v4941 = vld [vmem:[%s248 + $0xe9] sm:$0xff]
        %v4942 = vld [vmem:[%s248 + $0xf1] sm:$0xff]
        %v4943 = vld [vmem:[%s248 + $0xf9] sm:$0xff]
        %v4944 = vld [vmem:[%s248 + $0x101] sm:$0xff]
        %v4945 = vld [vmem:[%s248 + $0x109] sm:$0xff]
        %v4946 = vld [vmem:[%s248 + $0x111] sm:$0xff]
        %v4947 = vld [vmem:[%s248 + $0x119] sm:$0xff]
        %s4948 = scalar_lea.vmem %s1, 1792
        %v4949 = vld [vmem:[%s4948] sm:$0xff]
        %v4950 = vld [vmem:[%s4948 + $0x8] sm:$0xff]
        %v4951 = vld [vmem:[%s4948 + $0x10] sm:$0xff]
        %v4952 = vld [vmem:[%s4948 + $0x18] sm:$0xff]
        %v4953 = vld [vmem:[%s4948 + $0x20] sm:$0xff]
        %v4954 = vld [vmem:[%s4948 + $0x28] sm:$0xff]
        %v4955 = vld [vmem:[%s4948 + $0x30] sm:$0xff]
        %v4956 = vld [vmem:[%s4948 + $0x38] sm:$0xff]
        %v4957 = vld [vmem:[%s4948 + $0x40] sm:$0xff]
        %v4958 = vld [vmem:[%s4948 + $0x48] sm:$0xff]
        %v4959 = vld [vmem:[%s4948 + $0x50] sm:$0xff]
        %v4960 = vld [vmem:[%s4948 + $0x58] sm:$0xff]
        %v4961 = vld [vmem:[%s4948 + $0x60] sm:$0xff]
        %v4962 = vld [vmem:[%s4948 + $0x68] sm:$0xff]
        %v4963 = vld [vmem:[%s4948 + $0x70] sm:$0xff]
        %v4964 = vld [vmem:[%s4948 + $0x78] sm:$0xff]
        %v4965 = vld [vmem:[%s4948 + $0x80] sm:$0xff]
        %v4966 = vld [vmem:[%s4948 + $0x88] sm:$0xff]
        %v4967 = vld [vmem:[%s4948 + $0x90] sm:$0xff]
        %v4968 = vld [vmem:[%s4948 + $0x98] sm:$0xff]
        %v4969 = vld [vmem:[%s4948 + $0xa0] sm:$0xff]
        %v4970 = vld [vmem:[%s4948 + $0xa8] sm:$0xff]
        %v4971 = vld [vmem:[%s4948 + $0xb0] sm:$0xff]
        %v4972 = vld [vmem:[%s4948 + $0xb8] sm:$0xff]
        %v4973 = vld [vmem:[%s4948 + $0xc0] sm:$0xff]
        %v4974 = vld [vmem:[%s4948 + $0xc8] sm:$0xff]
        %v4975 = vld [vmem:[%s4948 + $0xd0] sm:$0xff]
        %v4976 = vld [vmem:[%s4948 + $0xd8] sm:$0xff]
        %v4977 = vld [vmem:[%s4948 + $0xe0] sm:$0xff]
        %v4978 = vld [vmem:[%s4948 + $0xe8] sm:$0xff]
        %v4979 = vld [vmem:[%s4948 + $0xf0] sm:$0xff]
        %v4980 = vld [vmem:[%s4948 + $0xf8] sm:$0xff]
        %4982 = vset.pattern.permute.xlu0 0
        %4983 = vperm.xlu0 %4982, %v4949
        %v4984 = vpop.permute.xlu0 %4983
        %4987 = vset.pattern.permute.xlu0 0
        %4988 = vperm.xlu0 %4987, %v4950
        %v4989 = vpop.permute.xlu0 %4988
        %4992 = vset.pattern.permute.xlu0 0
        %4993 = vperm.xlu0 %4992, %v4951
        %v4994 = vpop.permute.xlu0 %4993
        %4997 = vset.pattern.permute.xlu0 0
        %4998 = vperm.xlu0 %4997, %v4952
        %v4999 = vpop.permute.xlu0 %4998
        %5002 = vset.pattern.permute.xlu0 0
        %5003 = vperm.xlu0 %5002, %v4953
        %v5004 = vpop.permute.xlu0 %5003
        %5007 = vset.pattern.permute.xlu0 0
        %5008 = vperm.xlu0 %5007, %v4954
        %v5009 = vpop.permute.xlu0 %5008
        %5012 = vset.pattern.permute.xlu0 0
        %5013 = vperm.xlu0 %5012, %v4955
        %v5014 = vpop.permute.xlu0 %5013
        %5017 = vset.pattern.permute.xlu0 0
        %5018 = vperm.xlu0 %5017, %v4956
        %v5019 = vpop.permute.xlu0 %5018
        %5022 = vset.pattern.permute.xlu0 0
        %5023 = vperm.xlu0 %5022, %v4957
        %v5024 = vpop.permute.xlu0 %5023
        %5027 = vset.pattern.permute.xlu0 0
        %5028 = vperm.xlu0 %5027, %v4958
        %v5029 = vpop.permute.xlu0 %5028
        %5032 = vset.pattern.permute.xlu0 0
        %5033 = vperm.xlu0 %5032, %v4959
        %v5034 = vpop.permute.xlu0 %5033
        %5037 = vset.pattern.permute.xlu0 0
        %5038 = vperm.xlu0 %5037, %v4960
        %v5039 = vpop.permute.xlu0 %5038
        %5042 = vset.pattern.permute.xlu0 0
        %5043 = vperm.xlu0 %5042, %v4961
        %v5044 = vpop.permute.xlu0 %5043
        %5047 = vset.pattern.permute.xlu0 0
        %5048 = vperm.xlu0 %5047, %v4962
        %v5049 = vpop.permute.xlu0 %5048
        %5052 = vset.pattern.permute.xlu0 0
        %5053 = vperm.xlu0 %5052, %v4963
        %v5054 = vpop.permute.xlu0 %5053
        %5057 = vset.pattern.permute.xlu0 0
        %5058 = vperm.xlu0 %5057, %v4964
        %v5059 = vpop.permute.xlu0 %5058
        %5062 = vset.pattern.permute.xlu0 0
        %5063 = vperm.xlu0 %5062, %v4965
        %v5064 = vpop.permute.xlu0 %5063
        %5067 = vset.pattern.permute.xlu0 0
        %5068 = vperm.xlu0 %5067, %v4966
        %v5069 = vpop.permute.xlu0 %5068
        %5072 = vset.pattern.permute.xlu0 0
        %5073 = vperm.xlu0 %5072, %v4967
        %v5074 = vpop.permute.xlu0 %5073
        %5077 = vset.pattern.permute.xlu0 0
        %5078 = vperm.xlu0 %5077, %v4968
        %v5079 = vpop.permute.xlu0 %5078
        %5082 = vset.pattern.permute.xlu0 0
        %5083 = vperm.xlu0 %5082, %v4969
        %v5084 = vpop.permute.xlu0 %5083
        %5087 = vset.pattern.permute.xlu0 0
        %5088 = vperm.xlu0 %5087, %v4970
        %v5089 = vpop.permute.xlu0 %5088
        %5092 = vset.pattern.permute.xlu0 0
        %5093 = vperm.xlu0 %5092, %v4971
        %v5094 = vpop.permute.xlu0 %5093
        %5097 = vset.pattern.permute.xlu0 0
        %5098 = vperm.xlu0 %5097, %v4972
        %v5099 = vpop.permute.xlu0 %5098
        %5102 = vset.pattern.permute.xlu0 0
        %5103 = vperm.xlu0 %5102, %v4973
        %v5104 = vpop.permute.xlu0 %5103
        %5107 = vset.pattern.permute.xlu0 0
        %5108 = vperm.xlu0 %5107, %v4974
        %v5109 = vpop.permute.xlu0 %5108
        %5112 = vset.pattern.permute.xlu0 0
        %5113 = vperm.xlu0 %5112, %v4975
        %v5114 = vpop.permute.xlu0 %5113
        %5117 = vset.pattern.permute.xlu0 0
        %5118 = vperm.xlu0 %5117, %v4976
        %v5119 = vpop.permute.xlu0 %5118
        %5122 = vset.pattern.permute.xlu0 0
        %5123 = vperm.xlu0 %5122, %v4977
        %v5124 = vpop.permute.xlu0 %5123
        %5127 = vset.pattern.permute.xlu0 0
        %5128 = vperm.xlu0 %5127, %v4978
        %v5129 = vpop.permute.xlu0 %5128
        %5132 = vset.pattern.permute.xlu0 0
        %5133 = vperm.xlu0 %5132, %v4979
        %v5134 = vpop.permute.xlu0 %5133
        %5137 = vset.pattern.permute.xlu0 0
        %5138 = vperm.xlu0 %5137, %v4980
        %v5139 = vpop.permute.xlu0 %5138
        %v5141 = vmul.f32 %v4916, %v4984
        %v5142 = vmul.f32 %v4917, %v4989
        %v5143 = vmul.f32 %v4918, %v4994
        %v5144 = vmul.f32 %v4919, %v4999
        %v5145 = vmul.f32 %v4920, %v5004
        %v5146 = vmul.f32 %v4921, %v5009
        %v5147 = vmul.f32 %v4922, %v5014
        %v5148 = vmul.f32 %v4923, %v5019
        %v5149 = vmul.f32 %v4924, %v5024
        %v5150 = vmul.f32 %v4925, %v5029
        %v5151 = vmul.f32 %v4926, %v5034
        %v5152 = vmul.f32 %v4927, %v5039
        %v5153 = vmul.f32 %v4928, %v5044
        %v5154 = vmul.f32 %v4929, %v5049
        %v5155 = vmul.f32 %v4930, %v5054
        %v5156 = vmul.f32 %v4931, %v5059
        %v5157 = vmul.f32 %v4932, %v5064
        %v5158 = vmul.f32 %v4933, %v5069
        %v5159 = vmul.f32 %v4934, %v5074
        %v5160 = vmul.f32 %v4935, %v5079
        %v5161 = vmul.f32 %v4936, %v5084
        %v5162 = vmul.f32 %v4937, %v5089
        %v5163 = vmul.f32 %v4938, %v5094
        %v5164 = vmul.f32 %v4939, %v5099
        %v5165 = vmul.f32 %v4940, %v5104
        %v5166 = vmul.f32 %v4941, %v5109
        %v5167 = vmul.f32 %v4942, %v5114
        %v5168 = vmul.f32 %v4943, %v5119
        %v5169 = vmul.f32 %v4944, %v5124
        %v5170 = vmul.f32 %v4945, %v5129
        %v5171 = vmul.f32 %v4946, %v5134
        %v5172 = vmul.f32 %v4947, %v5139
        %s5173 = scalar_lea.vmem %s2, 56
        %v5174 = vld [vmem:[%s5173] sm:$0xff]
        %v5176 = vsel %vm506, %v5141, 0
        %v5179 = vsel %vm506, %v5142, 0
        %v5182 = vsel %vm506, %v5143, 0
        %v5185 = vsel %vm506, %v5144, 0
        %v5188 = vsel %vm506, %v5145, 0
        %v5191 = vsel %vm506, %v5146, 0
        %v5194 = vsel %vm506, %v5147, 0
        %v5197 = vsel %vm506, %v5148, 0
        %v5200 = vsel %vm506, %v5149, 0
        %v5203 = vsel %vm506, %v5150, 0
        %v5206 = vsel %vm506, %v5151, 0
        %v5209 = vsel %vm506, %v5152, 0
        %v5212 = vsel %vm506, %v5153, 0
        %v5215 = vsel %vm506, %v5154, 0
        %v5218 = vsel %vm506, %v5155, 0
        %v5221 = vsel %vm506, %v5156, 0
        %v5224 = vsel %vm506, %v5157, 0
        %v5227 = vsel %vm506, %v5158, 0
        %v5230 = vsel %vm506, %v5159, 0
        %v5233 = vsel %vm506, %v5160, 0
        %v5236 = vsel %vm506, %v5161, 0
        %v5239 = vsel %vm506, %v5162, 0
        %v5242 = vsel %vm506, %v5163, 0
        %v5245 = vsel %vm506, %v5164, 0
        %v5248 = vsel %vm506, %v5165, 0
        %v5251 = vsel %vm506, %v5166, 0
        %v5254 = vsel %vm506, %v5167, 0
        %v5257 = vsel %vm506, %v5168, 0
        %v5260 = vsel %vm506, %v5169, 0
        %v5263 = vsel %vm506, %v5170, 0
        %v5266 = vsel %vm506, %v5171, 0
        %v5269 = vsel %vm506, %v5172, 0
        %5271 = vmatprep.subr.mxu0 0.0
        %5272 = vmatpush1.msra.mxu0 %v5174
        %5273 = vmatprep.subr.mxu0 0.0
        %5274 = vmatpush1.msra.mxu0 0.0
        %5275 = vmatprep.subr.mxu0 0.0
        %5276 = vmatpush1.msra.mxu0 0.0
        %5277 = vmatprep.subr.mxu0 0.0
        %5278 = vmatpush1.msra.mxu0 0.0
        %5279 = vmatprep.subr.mxu0 0.0
        %5280 = vmatpush1.msra.mxu0 0.0
        %5281 = vmatprep.subr.mxu0 0.0
        %5282 = vmatpush1.msra.mxu0 0.0
        %5283 = vmatprep.subr.mxu0 0.0
        %5284 = vmatpush1.msra.mxu0 0.0
        %5285 = vmatprep.subr.mxu0 0.0
        %5286 = vmatpush1.msra.mxu0 0.0
        %5287 = vmatprep.subr.mxu0 0.0
        %5288 = vmatpush1.msra.mxu0 0.0
        %5289 = vmatprep.subr.mxu0 0.0
        %5290 = vmatpush1.msra.mxu0 0.0
        %5291 = vmatprep.subr.mxu0 0.0
        %5292 = vmatpush1.msra.mxu0 0.0
        %5293 = vmatprep.subr.mxu0 0.0
        %5294 = vmatpush1.msra.mxu0 0.0
        %5295 = vmatprep.subr.mxu0 0.0
        %5296 = vmatpush1.msra.mxu0 0.0
        %5297 = vmatprep.subr.mxu0 0.0
        %5298 = vmatpush1.msra.mxu0 0.0
        %5299 = vmatprep.subr.mxu0 0.0
        %5300 = vmatpush1.msra.mxu0 0.0
        %5301 = vmatprep.subr.mxu0 0.0
        %5302 = vmatpush1.msra.mxu0 0.0
        %5303 = vmatprep.subr.mxu0 0.0
        %5304 = vmatpush1.msra.mxu0 0.0
        %5305 = vmatprep.subr.mxu0 0.0
        %5306 = vmatpush1.msra.mxu0 0.0
        %5307 = vmatprep.subr.mxu0 0.0
        %5308 = vmatpush1.msra.mxu0 0.0
        %5309 = vmatprep.subr.mxu0 0.0
        %5310 = vmatpush1.msra.mxu0 0.0
        %5311 = vmatprep.subr.mxu0 0.0
        %5312 = vmatpush1.msra.mxu0 0.0
        %5313 = vmatprep.subr.mxu0 0.0
        %5314 = vmatpush1.msra.mxu0 0.0
        %5315 = vmatprep.subr.mxu0 0.0
        %5316 = vmatpush1.msra.mxu0 0.0
        %5317 = vmatprep.subr.mxu0 0.0
        %5318 = vmatpush1.msra.mxu0 0.0
        %5319 = vmatprep.subr.mxu0 0.0
        %5320 = vmatpush1.msra.mxu0 0.0
        %5321 = vmatprep.subr.mxu0 0.0
        %5322 = vmatpush1.msra.mxu0 0.0
        %5323 = vmatprep.subr.mxu0 0.0
        %5324 = vmatpush1.msra.mxu0 0.0
        %5325 = vmatprep.subr.mxu0 0.0
        %5326 = vmatpush1.msra.mxu0 0.0
        %5327 = vmatprep.subr.mxu0 0.0
        %5328 = vmatpush1.msra.mxu0 0.0
        %5329 = vmatprep.subr.mxu0 0.0
        %5330 = vmatpush1.msra.mxu0 0.0
        %5331 = vmatprep.subr.mxu0 0.0
        %5332 = vmatpush1.msra.mxu0 0.0
        %5333 = vmatprep.subr.mxu0 0.0
        %5334 = vmatpush1.msra.mxu0 0.0
        %5335 = vmatprep.mubr.f32.mxu0 0.0
        %5336 = vmatmul.mubr.f32.gmra.mrb[0].mxu0 %v5176
        %v5337 = vpop.f32.mrb[0].mxu0
        %v5338 = vadd.f32 0.0, %v5337
        %v5339 = vpop.f32.mrb[0].mxu0
        %5340 = vmatprep.mubr.f32.mxu0 0.0
        %5341 = vmatmul.mubr.f32.gmra.mrb[0].mxu0 %v5179
        %v5342 = vpop.f32.mrb[0].mxu0
        %v5343 = vadd.f32 0.0, %v5342
        %v5344 = vpop.f32.mrb[0].mxu0
        %5345 = vmatprep.mubr.f32.mxu0 0.0
        %5346 = vmatmul.mubr.f32.gmra.mrb[0].mxu0 %v5182
        %v5347 = vpop.f32.mrb[0].mxu0
        %v5348 = vadd.f32 0.0, %v5347
        %v5349 = vpop.f32.mrb[0].mxu0
        %5350 = vmatprep.mubr.f32.mxu0 0.0
        %5351 = vmatmul.mubr.f32.gmra.mrb[0].mxu0 %v5185
        %v5352 = vpop.f32.mrb[0].mxu0
        %v5353 = vadd.f32 0.0, %v5352
        %v5354 = vpop.f32.mrb[0].mxu0
        %5355 = vmatprep.mubr.f32.mxu0 0.0
        %5356 = vmatmul.mubr.f32.gmra.mrb[0].mxu0 %v5188
        %v5357 = vpop.f32.mrb[0].mxu0
        %v5358 = vadd.f32 0.0, %v5357
        %v5359 = vpop.f32.mrb[0].mxu0
        %5360 = vmatprep.mubr.f32.mxu0 0.0
        %5361 = vmatmul.mubr.f32.gmra.mrb[0].mxu0 %v5191
        %v5362 = vpop.f32.mrb[0].mxu0
        %v5363 = vadd.f32 0.0, %v5362
        %v5364 = vpop.f32.mrb[0].mxu0
        %5365 = vmatprep.mubr.f32.mxu0 0.0
        %5366 = vmatmul.mubr.f32.gmra.mrb[0].mxu0 %v5194
        %v5367 = vpop.f32.mrb[0].mxu0
        %v5368 = vadd.f32 0.0, %v5367
        %v5369 = vpop.f32.mrb[0].mxu0
        %5370 = vmatprep.mubr.f32.mxu0 0.0
        %5371 = vmatmul.mubr.f32.gmra.mrb[0].mxu0 %v5197
        %v5372 = vpop.f32.mrb[0].mxu0
        %v5373 = vadd.f32 0.0, %v5372
        %v5374 = vpop.f32.mrb[0].mxu0
        %5375 = vmatprep.mubr.f32.mxu0 0.0
        %5376 = vmatmul.mubr.f32.gmra.mrb[0].mxu0 %v5200
        %v5377 = vpop.f32.mrb[0].mxu0
        %v5378 = vadd.f32 0.0, %v5377
        %v5379 = vpop.f32.mrb[0].mxu0
        %5380 = vmatprep.mubr.f32.mxu0 0.0
        %5381 = vmatmul.mubr.f32.gmra.mrb[0].mxu0 %v5203
        %v5382 = vpop.f32.mrb[0].mxu0
        %v5383 = vadd.f32 0.0, %v5382
        %v5384 = vpop.f32.mrb[0].mxu0
        %5385 = vmatprep.mubr.f32.mxu0 0.0
        %5386 = vmatmul.mubr.f32.gmra.mrb[0].mxu0 %v5206
        %v5387 = vpop.f32.mrb[0].mxu0
        %v5388 = vadd.f32 0.0, %v5387
        %v5389 = vpop.f32.mrb[0].mxu0
        %5390 = vmatprep.mubr.f32.mxu0 0.0
        %5391 = vmatmul.mubr.f32.gmra.mrb[0].mxu0 %v5209
        %v5392 = vpop.f32.mrb[0].mxu0
        %v5393 = vadd.f32 0.0, %v5392
        %v5394 = vpop.f32.mrb[0].mxu0
        %5395 = vmatprep.mubr.f32.mxu0 0.0
        %5396 = vmatmul.mubr.f32.gmra.mrb[0].mxu0 %v5212
        %v5397 = vpop.f32.mrb[0].mxu0
        %v5398 = vadd.f32 0.0, %v5397
        %v5399 = vpop.f32.mrb[0].mxu0
        %5400 = vmatprep.mubr.f32.mxu0 0.0
        %5401 = vmatmul.mubr.f32.gmra.mrb[0].mxu0 %v5215
        %v5402 = vpop.f32.mrb[0].mxu0
        %v5403 = vadd.f32 0.0, %v5402
        %v5404 = vpop.f32.mrb[0].mxu0
        %5405 = vmatprep.mubr.f32.mxu0 0.0
        %5406 = vmatmul.mubr.f32.gmra.mrb[0].mxu0 %v5218
        %v5407 = vpop.f32.mrb[0].mxu0
        %v5408 = vadd.f32 0.0, %v5407
        %v5409 = vpop.f32.mrb[0].mxu0
        %5410 = vmatprep.mubr.f32.mxu0 0.0
        %5411 = vmatmul.mubr.f32.gmra.mrb[0].mxu0 %v5221
        %v5412 = vpop.f32.mrb[0].mxu0
        %v5413 = vadd.f32 0.0, %v5412
        %v5414 = vpop.f32.mrb[0].mxu0
        %5415 = vmatprep.mubr.f32.mxu0 0.0
        %5416 = vmatmul.mubr.f32.gmra.mrb[0].mxu0 %v5224
        %v5417 = vpop.f32.mrb[0].mxu0
        %v5418 = vadd.f32 0.0, %v5417
        %v5419 = vpop.f32.mrb[0].mxu0
        %5420 = vmatprep.mubr.f32.mxu0 0.0
        %5421 = vmatmul.mubr.f32.gmra.mrb[0].mxu0 %v5227
        %v5422 = vpop.f32.mrb[0].mxu0
        %v5423 = vadd.f32 0.0, %v5422
        %v5424 = vpop.f32.mrb[0].mxu0
        %5425 = vmatprep.mubr.f32.mxu0 0.0
        %5426 = vmatmul.mubr.f32.gmra.mrb[0].mxu0 %v5230
        %v5427 = vpop.f32.mrb[0].mxu0
        %v5428 = vadd.f32 0.0, %v5427
        %v5429 = vpop.f32.mrb[0].mxu0
        %5430 = vmatprep.mubr.f32.mxu0 0.0
        %5431 = vmatmul.mubr.f32.gmra.mrb[0].mxu0 %v5233
        %v5432 = vpop.f32.mrb[0].mxu0
        %v5433 = vadd.f32 0.0, %v5432
        %v5434 = vpop.f32.mrb[0].mxu0
        %5435 = vmatprep.mubr.f32.mxu0 0.0
        %5436 = vmatmul.mubr.f32.gmra.mrb[0].mxu0 %v5236
        %v5437 = vpop.f32.mrb[0].mxu0
        %v5438 = vadd.f32 0.0, %v5437
        %v5439 = vpop.f32.mrb[0].mxu0
        %5440 = vmatprep.mubr.f32.mxu0 0.0
        %5441 = vmatmul.mubr.f32.gmra.mrb[0].mxu0 %v5239
        %v5442 = vpop.f32.mrb[0].mxu0
        %v5443 = vadd.f32 0.0, %v5442
        %v5444 = vpop.f32.mrb[0].mxu0
        %5445 = vmatprep.mubr.f32.mxu0 0.0
        %5446 = vmatmul.mubr.f32.gmra.mrb[0].mxu0 %v5242
        %v5447 = vpop.f32.mrb[0].mxu0
        %v5448 = vadd.f32 0.0, %v5447
        %v5449 = vpop.f32.mrb[0].mxu0
        %5450 = vmatprep.mubr.f32.mxu0 0.0
        %5451 = vmatmul.mubr.f32.gmra.mrb[0].mxu0 %v5245
        %v5452 = vpop.f32.mrb[0].mxu0
        %v5453 = vadd.f32 0.0, %v5452
        %v5454 = vpop.f32.mrb[0].mxu0
        %5455 = vmatprep.mubr.f32.mxu0 0.0
        %5456 = vmatmul.mubr.f32.gmra.mrb[0].mxu0 %v5248
        %v5457 = vpop.f32.mrb[0].mxu0
        %v5458 = vadd.f32 0.0, %v5457
        %v5459 = vpop.f32.mrb[0].mxu0
        %5460 = vmatprep.mubr.f32.mxu0 0.0
        %5461 = vmatmul.mubr.f32.gmra.mrb[0].mxu0 %v5251
        %v5462 = vpop.f32.mrb[0].mxu0
        %v5463 = vadd.f32 0.0, %v5462
        %v5464 = vpop.f32.mrb[0].mxu0
        %5465 = vmatprep.mubr.f32.mxu0 0.0
        %5466 = vmatmul.mubr.f32.gmra.mrb[0].mxu0 %v5254
        %v5467 = vpop.f32.mrb[0].mxu0
        %v5468 = vadd.f32 0.0, %v5467
        %v5469 = vpop.f32.mrb[0].mxu0
        %5470 = vmatprep.mubr.f32.mxu0 0.0
        %5471 = vmatmul.mubr.f32.gmra.mrb[0].mxu0 %v5257
        %v5472 = vpop.f32.mrb[0].mxu0
        %v5473 = vadd.f32 0.0, %v5472
        %v5474 = vpop.f32.mrb[0].mxu0
        %5475 = vmatprep.mubr.f32.mxu0 0.0
        %5476 = vmatmul.mubr.f32.gmra.mrb[0].mxu0 %v5260
        %v5477 = vpop.f32.mrb[0].mxu0
        %v5478 = vadd.f32 0.0, %v5477
        %v5479 = vpop.f32.mrb[0].mxu0
        %5480 = vmatprep.mubr.f32.mxu0 0.0
        %5481 = vmatmul.mubr.f32.gmra.mrb[0].mxu0 %v5263
        %v5482 = vpop.f32.mrb[0].mxu0
        %v5483 = vadd.f32 0.0, %v5482
        %v5484 = vpop.f32.mrb[0].mxu0
        %5485 = vmatprep.mubr.f32.mxu0 0.0
        %5486 = vmatmul.mubr.f32.gmra.mrb[0].mxu0 %v5266
        %v5487 = vpop.f32.mrb[0].mxu0
        %v5488 = vadd.f32 0.0, %v5487
        %v5489 = vpop.f32.mrb[0].mxu0
        %5490 = vmatprep.mubr.f32.mxu0 0.0
        %5491 = vmatmul.mubr.f32.gmra.mrb[0].mxu0 %v5269
        %v5492 = vpop.f32.mrb[0].mxu0
        %v5493 = vadd.f32 0.0, %v5492
        %v5494 = vpop.f32.mrb[0].mxu0
        %5495 = vdwg.mxu0
        %v5496 = vld [vmem:[#allocation2] sm:$0xff]
        %v5497 = vld [vmem:[#allocation2 + $0x8] sm:$0xff]
        %v5498 = vld [vmem:[#allocation2 + $0x10] sm:$0xff]
        %v5499 = vld [vmem:[#allocation2 + $0x18] sm:$0xff]
        %v5500 = vld [vmem:[#allocation2 + $0x20] sm:$0xff]
        %v5501 = vld [vmem:[#allocation2 + $0x28] sm:$0xff]
        %v5502 = vld [vmem:[#allocation2 + $0x30] sm:$0xff]
        %v5503 = vld [vmem:[#allocation2 + $0x38] sm:$0xff]
        %v5504 = vld [vmem:[#allocation2 + $0x40] sm:$0xff]
        %v5505 = vld [vmem:[#allocation2 + $0x48] sm:$0xff]
        %v5506 = vld [vmem:[#allocation2 + $0x50] sm:$0xff]
        %v5507 = vld [vmem:[#allocation2 + $0x58] sm:$0xff]
        %v5508 = vld [vmem:[#allocation2 + $0x60] sm:$0xff]
        %v5509 = vld [vmem:[#allocation2 + $0x68] sm:$0xff]
        %v5510 = vld [vmem:[#allocation2 + $0x70] sm:$0xff]
        %v5511 = vld [vmem:[#allocation2 + $0x78] sm:$0xff]
        %v5512 = vld [vmem:[#allocation2 + $0x80] sm:$0xff]
        %v5513 = vld [vmem:[#allocation2 + $0x88] sm:$0xff]
        %v5514 = vld [vmem:[#allocation2 + $0x90] sm:$0xff]
        %v5515 = vld [vmem:[#allocation2 + $0x98] sm:$0xff]
        %v5516 = vld [vmem:[#allocation2 + $0xa0] sm:$0xff]
        %v5517 = vld [vmem:[#allocation2 + $0xa8] sm:$0xff]
        %v5518 = vld [vmem:[#allocation2 + $0xb0] sm:$0xff]
        %v5519 = vld [vmem:[#allocation2 + $0xb8] sm:$0xff]
        %v5520 = vld [vmem:[#allocation2 + $0xc0] sm:$0xff]
        %v5521 = vld [vmem:[#allocation2 + $0xc8] sm:$0xff]
        %v5522 = vld [vmem:[#allocation2 + $0xd0] sm:$0xff]
        %v5523 = vld [vmem:[#allocation2 + $0xd8] sm:$0xff]
        %v5524 = vld [vmem:[#allocation2 + $0xe0] sm:$0xff]
        %v5525 = vld [vmem:[#allocation2 + $0xe8] sm:$0xff]
        %v5526 = vld [vmem:[#allocation2 + $0xf0] sm:$0xff]
        %v5527 = vld [vmem:[#allocation2 + $0xf8] sm:$0xff]
        %v5528 = vadd.f32 %v5496, %v5338
        %v5529 = vadd.f32 %v5497, %v5343
        %v5530 = vadd.f32 %v5498, %v5348
        %v5531 = vadd.f32 %v5499, %v5353
        %v5532 = vadd.f32 %v5500, %v5358
        %v5533 = vadd.f32 %v5501, %v5363
        %v5534 = vadd.f32 %v5502, %v5368
        %v5535 = vadd.f32 %v5503, %v5373
        %v5536 = vadd.f32 %v5504, %v5378
        %v5537 = vadd.f32 %v5505, %v5383
        %v5538 = vadd.f32 %v5506, %v5388
        %v5539 = vadd.f32 %v5507, %v5393
        %v5540 = vadd.f32 %v5508, %v5398
        %v5541 = vadd.f32 %v5509, %v5403
        %v5542 = vadd.f32 %v5510, %v5408
        %v5543 = vadd.f32 %v5511, %v5413
        %v5544 = vadd.f32 %v5512, %v5418
        %v5545 = vadd.f32 %v5513, %v5423
        %v5546 = vadd.f32 %v5514, %v5428
        %v5547 = vadd.f32 %v5515, %v5433
        %v5548 = vadd.f32 %v5516, %v5438
        %v5549 = vadd.f32 %v5517, %v5443
        %v5550 = vadd.f32 %v5518, %v5448
        %v5551 = vadd.f32 %v5519, %v5453
        %v5552 = vadd.f32 %v5520, %v5458
        %v5553 = vadd.f32 %v5521, %v5463
        %v5554 = vadd.f32 %v5522, %v5468
        %v5555 = vadd.f32 %v5523, %v5473
        %v5556 = vadd.f32 %v5524, %v5478
        %v5557 = vadd.f32 %v5525, %v5483
        %v5558 = vadd.f32 %v5526, %v5488
        %v5559 = vadd.f32 %v5527, %v5493
        %5560 = vst [vmem:[#allocation2] sm:$0xff] %v5528
        %5561 = vst [vmem:[#allocation2 + $0x8] sm:$0xff] %v5529
        %5562 = vst [vmem:[#allocation2 + $0x10] sm:$0xff] %v5530
        %5563 = vst [vmem:[#allocation2 + $0x18] sm:$0xff] %v5531
        %5564 = vst [vmem:[#allocation2 + $0x20] sm:$0xff] %v5532
        %5565 = vst [vmem:[#allocation2 + $0x28] sm:$0xff] %v5533
        %5566 = vst [vmem:[#allocation2 + $0x30] sm:$0xff] %v5534
        %5567 = vst [vmem:[#allocation2 + $0x38] sm:$0xff] %v5535
        %5568 = vst [vmem:[#allocation2 + $0x40] sm:$0xff] %v5536
        %5569 = vst [vmem:[#allocation2 + $0x48] sm:$0xff] %v5537
        %5570 = vst [vmem:[#allocation2 + $0x50] sm:$0xff] %v5538
        %5571 = vst [vmem:[#allocation2 + $0x58] sm:$0xff] %v5539
        %5572 = vst [vmem:[#allocation2 + $0x60] sm:$0xff] %v5540
        %5573 = vst [vmem:[#allocation2 + $0x68] sm:$0xff] %v5541
        %5574 = vst [vmem:[#allocation2 + $0x70] sm:$0xff] %v5542
        %5575 = vst [vmem:[#allocation2 + $0x78] sm:$0xff] %v5543
        %5576 = vst [vmem:[#allocation2 + $0x80] sm:$0xff] %v5544
        %5577 = vst [vmem:[#allocation2 + $0x88] sm:$0xff] %v5545
        %5578 = vst [vmem:[#allocation2 + $0x90] sm:$0xff] %v5546
        %5579 = vst [vmem:[#allocation2 + $0x98] sm:$0xff] %v5547
        %5580 = vst [vmem:[#allocation2 + $0xa0] sm:$0xff] %v5548
        %5581 = vst [vmem:[#allocation2 + $0xa8] sm:$0xff] %v5549
        %5582 = vst [vmem:[#allocation2 + $0xb0] sm:$0xff] %v5550
        %5583 = vst [vmem:[#allocation2 + $0xb8] sm:$0xff] %v5551
        %5584 = vst [vmem:[#allocation2 + $0xc0] sm:$0xff] %v5552
        %5585 = vst [vmem:[#allocation2 + $0xc8] sm:$0xff] %v5553
        %5586 = vst [vmem:[#allocation2 + $0xd0] sm:$0xff] %v5554
        %5587 = vst [vmem:[#allocation2 + $0xd8] sm:$0xff] %v5555
        %5588 = vst [vmem:[#allocation2 + $0xe0] sm:$0xff] %v5556
        %5589 = vst [vmem:[#allocation2 + $0xe8] sm:$0xff] %v5557
        %5590 = vst [vmem:[#allocation2 + $0xf0] sm:$0xff] %v5558
        %5591 = vst [vmem:[#allocation2 + $0xf8] sm:$0xff] %v5559
        %v5592 = vld [vmem:[%s248 + $0x22] sm:$0xff]
        %v5593 = vld [vmem:[%s248 + $0x2a] sm:$0xff]
        %v5594 = vld [vmem:[%s248 + $0x32] sm:$0xff]
        %v5595 = vld [vmem:[%s248 + $0x3a] sm:$0xff]
        %v5596 = vld [vmem:[%s248 + $0x42] sm:$0xff]
        %v5597 = vld [vmem:[%s248 + $0x4a] sm:$0xff]
        %v5598 = vld [vmem:[%s248 + $0x52] sm:$0xff]
        %v5599 = vld [vmem:[%s248 + $0x5a] sm:$0xff]
        %v5600 = vld [vmem:[%s248 + $0x62] sm:$0xff]
        %v5601 = vld [vmem:[%s248 + $0x6a] sm:$0xff]
        %v5602 = vld [vmem:[%s248 + $0x72] sm:$0xff]
        %v5603 = vld [vmem:[%s248 + $0x7a] sm:$0xff]
        %v5604 = vld [vmem:[%s248 + $0x82] sm:$0xff]
        %v5605 = vld [vmem:[%s248 + $0x8a] sm:$0xff]
        %v5606 = vld [vmem:[%s248 + $0x92] sm:$0xff]
        %v5607 = vld [vmem:[%s248 + $0x9a] sm:$0xff]
        %v5608 = vld [vmem:[%s248 + $0xa2] sm:$0xff]
        %v5609 = vld [vmem:[%s248 + $0xaa] sm:$0xff]
        %v5610 = vld [vmem:[%s248 + $0xb2] sm:$0xff]
        %v5611 = vld [vmem:[%s248 + $0xba] sm:$0xff]
        %v5612 = vld [vmem:[%s248 + $0xc2] sm:$0xff]
        %v5613 = vld [vmem:[%s248 + $0xca] sm:$0xff]
        %v5614 = vld [vmem:[%s248 + $0xd2] sm:$0xff]
        %v5615 = vld [vmem:[%s248 + $0xda] sm:$0xff]
        %v5616 = vld [vmem:[%s248 + $0xe2] sm:$0xff]
        %v5617 = vld [vmem:[%s248 + $0xea] sm:$0xff]
        %v5618 = vld [vmem:[%s248 + $0xf2] sm:$0xff]
        %v5619 = vld [vmem:[%s248 + $0xfa] sm:$0xff]
        %v5620 = vld [vmem:[%s248 + $0x102] sm:$0xff]
        %v5621 = vld [vmem:[%s248 + $0x10a] sm:$0xff]
        %v5622 = vld [vmem:[%s248 + $0x112] sm:$0xff]
        %v5623 = vld [vmem:[%s248 + $0x11a] sm:$0xff]
        %s5624 = scalar_lea.vmem %s1, 2048
        %v5625 = vld [vmem:[%s5624] sm:$0xff]
        %v5626 = vld [vmem:[%s5624 + $0x8] sm:$0xff]
        %v5627 = vld [vmem:[%s5624 + $0x10] sm:$0xff]
        %v5628 = vld [vmem:[%s5624 + $0x18] sm:$0xff]
        %v5629 = vld [vmem:[%s5624 + $0x20] sm:$0xff]
        %v5630 = vld [vmem:[%s5624 + $0x28] sm:$0xff]
        %v5631 = vld [vmem:[%s5624 + $0x30] sm:$0xff]
        %v5632 = vld [vmem:[%s5624 + $0x38] sm:$0xff]
        %v5633 = vld [vmem:[%s5624 + $0x40] sm:$0xff]
        %v5634 = vld [vmem:[%s5624 + $0x48] sm:$0xff]
        %v5635 = vld [vmem:[%s5624 + $0x50] sm:$0xff]
        %v5636 = vld [vmem:[%s5624 + $0x58] sm:$0xff]
        %v5637 = vld [vmem:[%s5624 + $0x60] sm:$0xff]
        %v5638 = vld [vmem:[%s5624 + $0x68] sm:$0xff]
        %v5639 = vld [vmem:[%s5624 + $0x70] sm:$0xff]
        %v5640 = vld [vmem:[%s5624 + $0x78] sm:$0xff]
        %v5641 = vld [vmem:[%s5624 + $0x80] sm:$0xff]
        %v5642 = vld [vmem:[%s5624 + $0x88] sm:$0xff]
        %v5643 = vld [vmem:[%s5624 + $0x90] sm:$0xff]
        %v5644 = vld [vmem:[%s5624 + $0x98] sm:$0xff]
        %v5645 = vld [vmem:[%s5624 + $0xa0] sm:$0xff]
        %v5646 = vld [vmem:[%s5624 + $0xa8] sm:$0xff]
        %v5647 = vld [vmem:[%s5624 + $0xb0] sm:$0xff]
        %v5648 = vld [vmem:[%s5624 + $0xb8] sm:$0xff]
        %v5649 = vld [vmem:[%s5624 + $0xc0] sm:$0xff]
        %v5650 = vld [vmem:[%s5624 + $0xc8] sm:$0xff]
        %v5651 = vld [vmem:[%s5624 + $0xd0] sm:$0xff]
        %v5652 = vld [vmem:[%s5624 + $0xd8] sm:$0xff]
        %v5653 = vld [vmem:[%s5624 + $0xe0] sm:$0xff]
        %v5654 = vld [vmem:[%s5624 + $0xe8] sm:$0xff]
        %v5655 = vld [vmem:[%s5624 + $0xf0] sm:$0xff]
        %v5656 = vld [vmem:[%s5624 + $0xf8] sm:$0xff]
        %5658 = vset.pattern.permute.xlu0 0
        %5659 = vperm.xlu0 %5658, %v5625
        %v5660 = vpop.permute.xlu0 %5659
        %5663 = vset.pattern.permute.xlu0 0
        %5664 = vperm.xlu0 %5663, %v5626
        %v5665 = vpop.permute.xlu0 %5664
        %5668 = vset.pattern.permute.xlu0 0
        %5669 = vperm.xlu0 %5668, %v5627
        %v5670 = vpop.permute.xlu0 %5669
        %5673 = vset.pattern.permute.xlu0 0
        %5674 = vperm.xlu0 %5673, %v5628
        %v5675 = vpop.permute.xlu0 %5674
        %5678 = vset.pattern.permute.xlu0 0
        %5679 = vperm.xlu0 %5678, %v5629
        %v5680 = vpop.permute.xlu0 %5679
        %5683 = vset.pattern.permute.xlu0 0
        %5684 = vperm.xlu0 %5683, %v5630
        %v5685 = vpop.permute.xlu0 %5684
        %5688 = vset.pattern.permute.xlu0 0
        %5689 = vperm.xlu0 %5688, %v5631
        %v5690 = vpop.permute.xlu0 %5689
        %5693 = vset.pattern.permute.xlu0 0
        %5694 = vperm.xlu0 %5693, %v5632
        %v5695 = vpop.permute.xlu0 %5694
        %5698 = vset.pattern.permute.xlu0 0
        %5699 = vperm.xlu0 %5698, %v5633
        %v5700 = vpop.permute.xlu0 %5699
        %5703 = vset.pattern.permute.xlu0 0
        %5704 = vperm.xlu0 %5703, %v5634
        %v5705 = vpop.permute.xlu0 %5704
        %5708 = vset.pattern.permute.xlu0 0
        %5709 = vperm.xlu0 %5708, %v5635
        %v5710 = vpop.permute.xlu0 %5709
        %5713 = vset.pattern.permute.xlu0 0
        %5714 = vperm.xlu0 %5713, %v5636
        %v5715 = vpop.permute.xlu0 %5714
        %5718 = vset.pattern.permute.xlu0 0
        %5719 = vperm.xlu0 %5718, %v5637
        %v5720 = vpop.permute.xlu0 %5719
        %5723 = vset.pattern.permute.xlu0 0
        %5724 = vperm.xlu0 %5723, %v5638
        %v5725 = vpop.permute.xlu0 %5724
        %5728 = vset.pattern.permute.xlu0 0
        %5729 = vperm.xlu0 %5728, %v5639
        %v5730 = vpop.permute.xlu0 %5729
        %5733 = vset.pattern.permute.xlu0 0
        %5734 = vperm.xlu0 %5733, %v5640
        %v5735 = vpop.permute.xlu0 %5734
        %5738 = vset.pattern.permute.xlu0 0
        %5739 = vperm.xlu0 %5738, %v5641
        %v5740 = vpop.permute.xlu0 %5739
        %5743 = vset.pattern.permute.xlu0 0
        %5744 = vperm.xlu0 %5743, %v5642
        %v5745 = vpop.permute.xlu0 %5744
        %5748 = vset.pattern.permute.xlu0 0
        %5749 = vperm.xlu0 %5748, %v5643
        %v5750 = vpop.permute.xlu0 %5749
        %5753 = vset.pattern.permute.xlu0 0
        %5754 = vperm.xlu0 %5753, %v5644
        %v5755 = vpop.permute.xlu0 %5754
        %5758 = vset.pattern.permute.xlu0 0
        %5759 = vperm.xlu0 %5758, %v5645
        %v5760 = vpop.permute.xlu0 %5759
        %5763 = vset.pattern.permute.xlu0 0
        %5764 = vperm.xlu0 %5763, %v5646
        %v5765 = vpop.permute.xlu0 %5764
        %5768 = vset.pattern.permute.xlu0 0
        %5769 = vperm.xlu0 %5768, %v5647
        %v5770 = vpop.permute.xlu0 %5769
        %5773 = vset.pattern.permute.xlu0 0
        %5774 = vperm.xlu0 %5773, %v5648
        %v5775 = vpop.permute.xlu0 %5774
        %5778 = vset.pattern.permute.xlu0 0
        %5779 = vperm.xlu0 %5778, %v5649
        %v5780 = vpop.permute.xlu0 %5779
        %5783 = vset.pattern.permute.xlu0 0
        %5784 = vperm.xlu0 %5783, %v5650
        %v5785 = vpop.permute.xlu0 %5784
        %5788 = vset.pattern.permute.xlu0 0
        %5789 = vperm.xlu0 %5788, %v5651
        %v5790 = vpop.permute.xlu0 %5789
        %5793 = vset.pattern.permute.xlu0 0
        %5794 = vperm.xlu0 %5793, %v5652
        %v5795 = vpop.permute.xlu0 %5794
        %5798 = vset.pattern.permute.xlu0 0
        %5799 = vperm.xlu0 %5798, %v5653
        %v5800 = vpop.permute.xlu0 %5799
        %5803 = vset.pattern.permute.xlu0 0
        %5804 = vperm.xlu0 %5803, %v5654
        %v5805 = vpop.permute.xlu0 %5804
        %5808 = vset.pattern.permute.xlu0 0
        %5809 = vperm.xlu0 %5808, %v5655
        %v5810 = vpop.permute.xlu0 %5809
        %5813 = vset.pattern.permute.xlu0 0
        %5814 = vperm.xlu0 %5813, %v5656
        %v5815 = vpop.permute.xlu0 %5814
        %v5817 = vmul.f32 %v5592, %v5660
        %v5818 = vmul.f32 %v5593, %v5665
        %v5819 = vmul.f32 %v5594, %v5670
        %v5820 = vmul.f32 %v5595, %v5675
        %v5821 = vmul.f32 %v5596, %v5680
        %v5822 = vmul.f32 %v5597, %v5685
        %v5823 = vmul.f32 %v5598, %v5690
        %v5824 = vmul.f32 %v5599, %v5695
        %v5825 = vmul.f32 %v5600, %v5700
        %v5826 = vmul.f32 %v5601, %v5705
        %v5827 = vmul.f32 %v5602, %v5710
        %v5828 = vmul.f32 %v5603, %v5715
        %v5829 = vmul.f32 %v5604, %v5720
        %v5830 = vmul.f32 %v5605, %v5725
        %v5831 = vmul.f32 %v5606, %v5730
        %v5832 = vmul.f32 %v5607, %v5735
        %v5833 = vmul.f32 %v5608, %v5740
        %v5834 = vmul.f32 %v5609, %v5745
        %v5835 = vmul.f32 %v5610, %v5750
        %v5836 = vmul.f32 %v5611, %v5755
        %v5837 = vmul.f32 %v5612, %v5760
        %v5838 = vmul.f32 %v5613, %v5765
        %v5839 = vmul.f32 %v5614, %v5770
        %v5840 = vmul.f32 %v5615, %v5775
        %v5841 = vmul.f32 %v5616, %v5780
        %v5842 = vmul.f32 %v5617, %v5785
        %v5843 = vmul.f32 %v5618, %v5790
        %v5844 = vmul.f32 %v5619, %v5795
        %v5845 = vmul.f32 %v5620, %v5800
        %v5846 = vmul.f32 %v5621, %v5805
        %v5847 = vmul.f32 %v5622, %v5810
        %v5848 = vmul.f32 %v5623, %v5815
        %s5849 = scalar_lea.vmem %s2, 64
        %v5850 = vld [vmem:[%s5849] sm:$0xff]
        %v5852 = vsel %vm506, %v5817, 0
        %v5855 = vsel %vm506, %v5818, 0
        %v5858 = vsel %vm506, %v5819, 0
        %v5861 = vsel %vm506, %v5820, 0
        %v5864 = vsel %vm506, %v5821, 0
        %v5867 = vsel %vm506, %v5822, 0
        %v5870 = vsel %vm506, %v5823, 0
        %v5873 = vsel %vm506, %v5824, 0
        %v5876 = vsel %vm506, %v5825, 0
        %v5879 = vsel %vm506, %v5826, 0
        %v5882 = vsel %vm506, %v5827, 0
        %v5885 = vsel %vm506, %v5828, 0
        %v5888 = vsel %vm506, %v5829, 0
        %v5891 = vsel %vm506, %v5830, 0
        %v5894 = vsel %vm506, %v5831, 0
        %v5897 = vsel %vm506, %v5832, 0
        %v5900 = vsel %vm506, %v5833, 0
        %v5903 = vsel %vm506, %v5834, 0
        %v5906 = vsel %vm506, %v5835, 0
        %v5909 = vsel %vm506, %v5836, 0
        %v5912 = vsel %vm506, %v5837, 0
        %v5915 = vsel %vm506, %v5838, 0
        %v5918 = vsel %vm506, %v5839, 0
        %v5921 = vsel %vm506, %v5840, 0
        %v5924 = vsel %vm506, %v5841, 0
        %v5927 = vsel %vm506, %v5842, 0
        %v5930 = vsel %vm506, %v5843, 0
        %v5933 = vsel %vm506, %v5844, 0
        %v5936 = vsel %vm506, %v5845, 0
        %v5939 = vsel %vm506, %v5846, 0
        %v5942 = vsel %vm506, %v5847, 0
        %v5945 = vsel %vm506, %v5848, 0
        %5947 = vmatprep.subr.mxu0 0.0
        %5948 = vmatpush1.msra.mxu0 %v5850
        %5949 = vmatprep.subr.mxu0 0.0
        %5950 = vmatpush1.msra.mxu0 0.0
        %5951 = vmatprep.subr.mxu0 0.0
        %5952 = vmatpush1.msra.mxu0 0.0
        %5953 = vmatprep.subr.mxu0 0.0
        %5954 = vmatpush1.msra.mxu0 0.0
        %5955 = vmatprep.subr.mxu0 0.0
        %5956 = vmatpush1.msra.mxu0 0.0
        %5957 = vmatprep.subr.mxu0 0.0
        %5958 = vmatpush1.msra.mxu0 0.0
        %5959 = vmatprep.subr.mxu0 0.0
        %5960 = vmatpush1.msra.mxu0 0.0
        %5961 = vmatprep.subr.mxu0 0.0
        %5962 = vmatpush1.msra.mxu0 0.0
        %5963 = vmatprep.subr.mxu0 0.0
        %5964 = vmatpush1.msra.mxu0 0.0
        %5965 = vmatprep.subr.mxu0 0.0
        %5966 = vmatpush1.msra.mxu0 0.0
        %5967 = vmatprep.subr.mxu0 0.0
        %5968 = vmatpush1.msra.mxu0 0.0
        %5969 = vmatprep.subr.mxu0 0.0
        %5970 = vmatpush1.msra.mxu0 0.0
        %5971 = vmatprep.subr.mxu0 0.0
        %5972 = vmatpush1.msra.mxu0 0.0
        %5973 = vmatprep.subr.mxu0 0.0
        %5974 = vmatpush1.msra.mxu0 0.0
        %5975 = vmatprep.subr.mxu0 0.0
        %5976 = vmatpush1.msra.mxu0 0.0
        %5977 = vmatprep.subr.mxu0 0.0
        %5978 = vmatpush1.msra.mxu0 0.0
        %5979 = vmatprep.subr.mxu0 0.0
        %5980 = vmatpush1.msra.mxu0 0.0
        %5981 = vmatprep.subr.mxu0 0.0
        %5982 = vmatpush1.msra.mxu0 0.0
        %5983 = vmatprep.subr.mxu0 0.0
        %5984 = vmatpush1.msra.mxu0 0.0
        %5985 = vmatprep.subr.mxu0 0.0
        %5986 = vmatpush1.msra.mxu0 0.0
        %5987 = vmatprep.subr.mxu0 0.0
        %5988 = vmatpush1.msra.mxu0 0.0
        %5989 = vmatprep.subr.mxu0 0.0
        %5990 = vmatpush1.msra.mxu0 0.0
        %5991 = vmatprep.subr.mxu0 0.0
        %5992 = vmatpush1.msra.mxu0 0.0
        %5993 = vmatprep.subr.mxu0 0.0
        %5994 = vmatpush1.msra.mxu0 0.0
        %5995 = vmatprep.subr.mxu0 0.0
        %5996 = vmatpush1.msra.mxu0 0.0
        %5997 = vmatprep.subr.mxu0 0.0
        %5998 = vmatpush1.msra.mxu0 0.0
        %5999 = vmatprep.subr.mxu0 0.0
        %6000 = vmatpush1.msra.mxu0 0.0
        %6001 = vmatprep.subr.mxu0 0.0
        %6002 = vmatpush1.msra.mxu0 0.0
        %6003 = vmatprep.subr.mxu0 0.0
        %6004 = vmatpush1.msra.mxu0 0.0
        %6005 = vmatprep.subr.mxu0 0.0
        %6006 = vmatpush1.msra.mxu0 0.0
        %6007 = vmatprep.subr.mxu0 0.0
        %6008 = vmatpush1.msra.mxu0 0.0
        %6009 = vmatprep.subr.mxu0 0.0
        %6010 = vmatpush1.msra.mxu0 0.0
        %6011 = vmatprep.mubr.f32.mxu0 0.0
        %6012 = vmatmul.mubr.f32.gmra.mrb[0].mxu0 %v5852
        %v6013 = vpop.f32.mrb[0].mxu0
        %v6014 = vadd.f32 0.0, %v6013
        %v6015 = vpop.f32.mrb[0].mxu0
        %6016 = vmatprep.mubr.f32.mxu0 0.0
        %6017 = vmatmul.mubr.f32.gmra.mrb[0].mxu0 %v5855
        %v6018 = vpop.f32.mrb[0].mxu0
        %v6019 = vadd.f32 0.0, %v6018
        %v6020 = vpop.f32.mrb[0].mxu0
        %6021 = vmatprep.mubr.f32.mxu0 0.0
        %6022 = vmatmul.mubr.f32.gmra.mrb[0].mxu0 %v5858
        %v6023 = vpop.f32.mrb[0].mxu0
        %v6024 = vadd.f32 0.0, %v6023
        %v6025 = vpop.f32.mrb[0].mxu0
        %6026 = vmatprep.mubr.f32.mxu0 0.0
        %6027 = vmatmul.mubr.f32.gmra.mrb[0].mxu0 %v5861
        %v6028 = vpop.f32.mrb[0].mxu0
        %v6029 = vadd.f32 0.0, %v6028
        %v6030 = vpop.f32.mrb[0].mxu0
        %6031 = vmatprep.mubr.f32.mxu0 0.0
        %6032 = vmatmul.mubr.f32.gmra.mrb[0].mxu0 %v5864
        %v6033 = vpop.f32.mrb[0].mxu0
        %v6034 = vadd.f32 0.0, %v6033
        %v6035 = vpop.f32.mrb[0].mxu0
        %6036 = vmatprep.mubr.f32.mxu0 0.0
        %6037 = vmatmul.mubr.f32.gmra.mrb[0].mxu0 %v5867
        %v6038 = vpop.f32.mrb[0].mxu0
        %v6039 = vadd.f32 0.0, %v6038
        %v6040 = vpop.f32.mrb[0].mxu0
        %6041 = vmatprep.mubr.f32.mxu0 0.0
        %6042 = vmatmul.mubr.f32.gmra.mrb[0].mxu0 %v5870
        %v6043 = vpop.f32.mrb[0].mxu0
        %v6044 = vadd.f32 0.0, %v6043
        %v6045 = vpop.f32.mrb[0].mxu0
        %6046 = vmatprep.mubr.f32.mxu0 0.0
        %6047 = vmatmul.mubr.f32.gmra.mrb[0].mxu0 %v5873
        %v6048 = vpop.f32.mrb[0].mxu0
        %v6049 = vadd.f32 0.0, %v6048
        %v6050 = vpop.f32.mrb[0].mxu0
        %6051 = vmatprep.mubr.f32.mxu0 0.0
        %6052 = vmatmul.mubr.f32.gmra.mrb[0].mxu0 %v5876
        %v6053 = vpop.f32.mrb[0].mxu0
        %v6054 = vadd.f32 0.0, %v6053
        %v6055 = vpop.f32.mrb[0].mxu0
        %6056 = vmatprep.mubr.f32.mxu0 0.0
        %6057 = vmatmul.mubr.f32.gmra.mrb[0].mxu0 %v5879
        %v6058 = vpop.f32.mrb[0].mxu0
        %v6059 = vadd.f32 0.0, %v6058
        %v6060 = vpop.f32.mrb[0].mxu0
        %6061 = vmatprep.mubr.f32.mxu0 0.0
        %6062 = vmatmul.mubr.f32.gmra.mrb[0].mxu0 %v5882
        %v6063 = vpop.f32.mrb[0].mxu0
        %v6064 = vadd.f32 0.0, %v6063
        %v6065 = vpop.f32.mrb[0].mxu0
        %6066 = vmatprep.mubr.f32.mxu0 0.0
        %6067 = vmatmul.mubr.f32.gmra.mrb[0].mxu0 %v5885
        %v6068 = vpop.f32.mrb[0].mxu0
        %v6069 = vadd.f32 0.0, %v6068
        %v6070 = vpop.f32.mrb[0].mxu0
        %6071 = vmatprep.mubr.f32.mxu0 0.0
        %6072 = vmatmul.mubr.f32.gmra.mrb[0].mxu0 %v5888
        %v6073 = vpop.f32.mrb[0].mxu0
        %v6074 = vadd.f32 0.0, %v6073
        %v6075 = vpop.f32.mrb[0].mxu0
        %6076 = vmatprep.mubr.f32.mxu0 0.0
        %6077 = vmatmul.mubr.f32.gmra.mrb[0].mxu0 %v5891
        %v6078 = vpop.f32.mrb[0].mxu0
        %v6079 = vadd.f32 0.0, %v6078
        %v6080 = vpop.f32.mrb[0].mxu0
        %6081 = vmatprep.mubr.f32.mxu0 0.0
        %6082 = vmatmul.mubr.f32.gmra.mrb[0].mxu0 %v5894
        %v6083 = vpop.f32.mrb[0].mxu0
        %v6084 = vadd.f32 0.0, %v6083
        %v6085 = vpop.f32.mrb[0].mxu0
        %6086 = vmatprep.mubr.f32.mxu0 0.0
        %6087 = vmatmul.mubr.f32.gmra.mrb[0].mxu0 %v5897
        %v6088 = vpop.f32.mrb[0].mxu0
        %v6089 = vadd.f32 0.0, %v6088
        %v6090 = vpop.f32.mrb[0].mxu0
        %6091 = vmatprep.mubr.f32.mxu0 0.0
        %6092 = vmatmul.mubr.f32.gmra.mrb[0].mxu0 %v5900
        %v6093 = vpop.f32.mrb[0].mxu0
        %v6094 = vadd.f32 0.0, %v6093
        %v6095 = vpop.f32.mrb[0].mxu0
        %6096 = vmatprep.mubr.f32.mxu0 0.0
        %6097 = vmatmul.mubr.f32.gmra.mrb[0].mxu0 %v5903
        %v6098 = vpop.f32.mrb[0].mxu0
        %v6099 = vadd.f32 0.0, %v6098
        %v6100 = vpop.f32.mrb[0].mxu0
        %6101 = vmatprep.mubr.f32.mxu0 0.0
        %6102 = vmatmul.mubr.f32.gmra.mrb[0].mxu0 %v5906
        %v6103 = vpop.f32.mrb[0].mxu0
        %v6104 = vadd.f32 0.0, %v6103
        %v6105 = vpop.f32.mrb[0].mxu0
        %6106 = vmatprep.mubr.f32.mxu0 0.0
        %6107 = vmatmul.mubr.f32.gmra.mrb[0].mxu0 %v5909
        %v6108 = vpop.f32.mrb[0].mxu0
        %v6109 = vadd.f32 0.0, %v6108
        %v6110 = vpop.f32.mrb[0].mxu0
        %6111 = vmatprep.mubr.f32.mxu0 0.0
        %6112 = vmatmul.mubr.f32.gmra.mrb[0].mxu0 %v5912
        %v6113 = vpop.f32.mrb[0].mxu0
        %v6114 = vadd.f32 0.0, %v6113
        %v6115 = vpop.f32.mrb[0].mxu0
        %6116 = vmatprep.mubr.f32.mxu0 0.0
        %6117 = vmatmul.mubr.f32.gmra.mrb[0].mxu0 %v5915
        %v6118 = vpop.f32.mrb[0].mxu0
        %v6119 = vadd.f32 0.0, %v6118
        %v6120 = vpop.f32.mrb[0].mxu0
        %6121 = vmatprep.mubr.f32.mxu0 0.0
        %6122 = vmatmul.mubr.f32.gmra.mrb[0].mxu0 %v5918
        %v6123 = vpop.f32.mrb[0].mxu0
        %v6124 = vadd.f32 0.0, %v6123
        %v6125 = vpop.f32.mrb[0].mxu0
        %6126 = vmatprep.mubr.f32.mxu0 0.0
        %6127 = vmatmul.mubr.f32.gmra.mrb[0].mxu0 %v5921
        %v6128 = vpop.f32.mrb[0].mxu0
        %v6129 = vadd.f32 0.0, %v6128
        %v6130 = vpop.f32.mrb[0].mxu0
        %6131 = vmatprep.mubr.f32.mxu0 0.0
        %6132 = vmatmul.mubr.f32.gmra.mrb[0].mxu0 %v5924
        %v6133 = vpop.f32.mrb[0].mxu0
        %v6134 = vadd.f32 0.0, %v6133
        %v6135 = vpop.f32.mrb[0].mxu0
        %6136 = vmatprep.mubr.f32.mxu0 0.0
        %6137 = vmatmul.mubr.f32.gmra.mrb[0].mxu0 %v5927
        %v6138 = vpop.f32.mrb[0].mxu0
        %v6139 = vadd.f32 0.0, %v6138
        %v6140 = vpop.f32.mrb[0].mxu0
        %6141 = vmatprep.mubr.f32.mxu0 0.0
        %6142 = vmatmul.mubr.f32.gmra.mrb[0].mxu0 %v5930
        %v6143 = vpop.f32.mrb[0].mxu0
        %v6144 = vadd.f32 0.0, %v6143
        %v6145 = vpop.f32.mrb[0].mxu0
        %6146 = vmatprep.mubr.f32.mxu0 0.0
        %6147 = vmatmul.mubr.f32.gmra.mrb[0].mxu0 %v5933
        %v6148 = vpop.f32.mrb[0].mxu0
        %v6149 = vadd.f32 0.0, %v6148
        %v6150 = vpop.f32.mrb[0].mxu0
        %6151 = vmatprep.mubr.f32.mxu0 0.0
        %6152 = vmatmul.mubr.f32.gmra.mrb[0].mxu0 %v5936
        %v6153 = vpop.f32.mrb[0].mxu0
        %v6154 = vadd.f32 0.0, %v6153
        %v6155 = vpop.f32.mrb[0].mxu0
        %6156 = vmatprep.mubr.f32.mxu0 0.0
        %6157 = vmatmul.mubr.f32.gmra.mrb[0].mxu0 %v5939
        %v6158 = vpop.f32.mrb[0].mxu0
        %v6159 = vadd.f32 0.0, %v6158
        %v6160 = vpop.f32.mrb[0].mxu0
        %6161 = vmatprep.mubr.f32.mxu0 0.0
        %6162 = vmatmul.mubr.f32.gmra.mrb[0].mxu0 %v5942
        %v6163 = vpop.f32.mrb[0].mxu0
        %v6164 = vadd.f32 0.0, %v6163
        %v6165 = vpop.f32.mrb[0].mxu0
        %6166 = vmatprep.mubr.f32.mxu0 0.0
        %6167 = vmatmul.mubr.f32.gmra.mrb[0].mxu0 %v5945
        %v6168 = vpop.f32.mrb[0].mxu0
        %v6169 = vadd.f32 0.0, %v6168
        %v6170 = vpop.f32.mrb[0].mxu0
        %6171 = vdwg.mxu0
        %v6172 = vld [vmem:[#allocation2] sm:$0xff]
        %v6173 = vld [vmem:[#allocation2 + $0x8] sm:$0xff]
        %v6174 = vld [vmem:[#allocation2 + $0x10] sm:$0xff]
        %v6175 = vld [vmem:[#allocation2 + $0x18] sm:$0xff]
        %v6176 = vld [vmem:[#allocation2 + $0x20] sm:$0xff]
        %v6177 = vld [vmem:[#allocation2 + $0x28] sm:$0xff]
        %v6178 = vld [vmem:[#allocation2 + $0x30] sm:$0xff]
        %v6179 = vld [vmem:[#allocation2 + $0x38] sm:$0xff]
        %v6180 = vld [vmem:[#allocation2 + $0x40] sm:$0xff]
        %v6181 = vld [vmem:[#allocation2 + $0x48] sm:$0xff]
        %v6182 = vld [vmem:[#allocation2 + $0x50] sm:$0xff]
        %v6183 = vld [vmem:[#allocation2 + $0x58] sm:$0xff]
        %v6184 = vld [vmem:[#allocation2 + $0x60] sm:$0xff]
        %v6185 = vld [vmem:[#allocation2 + $0x68] sm:$0xff]
        %v6186 = vld [vmem:[#allocation2 + $0x70] sm:$0xff]
        %v6187 = vld [vmem:[#allocation2 + $0x78] sm:$0xff]
        %v6188 = vld [vmem:[#allocation2 + $0x80] sm:$0xff]
        %v6189 = vld [vmem:[#allocation2 + $0x88] sm:$0xff]
        %v6190 = vld [vmem:[#allocation2 + $0x90] sm:$0xff]
        %v6191 = vld [vmem:[#allocation2 + $0x98] sm:$0xff]
        %v6192 = vld [vmem:[#allocation2 + $0xa0] sm:$0xff]
        %v6193 = vld [vmem:[#allocation2 + $0xa8] sm:$0xff]
        %v6194 = vld [vmem:[#allocation2 + $0xb0] sm:$0xff]
        %v6195 = vld [vmem:[#allocation2 + $0xb8] sm:$0xff]
        %v6196 = vld [vmem:[#allocation2 + $0xc0] sm:$0xff]
        %v6197 = vld [vmem:[#allocation2 + $0xc8] sm:$0xff]
        %v6198 = vld [vmem:[#allocation2 + $0xd0] sm:$0xff]
        %v6199 = vld [vmem:[#allocation2 + $0xd8] sm:$0xff]
        %v6200 = vld [vmem:[#allocation2 + $0xe0] sm:$0xff]
        %v6201 = vld [vmem:[#allocation2 + $0xe8] sm:$0xff]
        %v6202 = vld [vmem:[#allocation2 + $0xf0] sm:$0xff]
        %v6203 = vld [vmem:[#allocation2 + $0xf8] sm:$0xff]
        %v6204 = vadd.f32 %v6172, %v6014
        %v6205 = vadd.f32 %v6173, %v6019
        %v6206 = vadd.f32 %v6174, %v6024
        %v6207 = vadd.f32 %v6175, %v6029
        %v6208 = vadd.f32 %v6176, %v6034
        %v6209 = vadd.f32 %v6177, %v6039
        %v6210 = vadd.f32 %v6178, %v6044
        %v6211 = vadd.f32 %v6179, %v6049
        %v6212 = vadd.f32 %v6180, %v6054
        %v6213 = vadd.f32 %v6181, %v6059
        %v6214 = vadd.f32 %v6182, %v6064
        %v6215 = vadd.f32 %v6183, %v6069
        %v6216 = vadd.f32 %v6184, %v6074
        %v6217 = vadd.f32 %v6185, %v6079
        %v6218 = vadd.f32 %v6186, %v6084
        %v6219 = vadd.f32 %v6187, %v6089
        %v6220 = vadd.f32 %v6188, %v6094
        %v6221 = vadd.f32 %v6189, %v6099
        %v6222 = vadd.f32 %v6190, %v6104
        %v6223 = vadd.f32 %v6191, %v6109
        %v6224 = vadd.f32 %v6192, %v6114
        %v6225 = vadd.f32 %v6193, %v6119
        %v6226 = vadd.f32 %v6194, %v6124
        %v6227 = vadd.f32 %v6195, %v6129
        %v6228 = vadd.f32 %v6196, %v6134
        %v6229 = vadd.f32 %v6197, %v6139
        %v6230 = vadd.f32 %v6198, %v6144
        %v6231 = vadd.f32 %v6199, %v6149
        %v6232 = vadd.f32 %v6200, %v6154
        %v6233 = vadd.f32 %v6201, %v6159
        %v6234 = vadd.f32 %v6202, %v6164
        %v6235 = vadd.f32 %v6203, %v6169
        %6236 = vst [vmem:[#allocation2] sm:$0xff] %v6204
        %6237 = vst [vmem:[#allocation2 + $0x8] sm:$0xff] %v6205
        %6238 = vst [vmem:[#allocation2 + $0x10] sm:$0xff] %v6206
        %6239 = vst [vmem:[#allocation2 + $0x18] sm:$0xff] %v6207
        %6240 = vst [vmem:[#allocation2 + $0x20] sm:$0xff] %v6208
        %6241 = vst [vmem:[#allocation2 + $0x28] sm:$0xff] %v6209
        %6242 = vst [vmem:[#allocation2 + $0x30] sm:$0xff] %v6210
        %6243 = vst [vmem:[#allocation2 + $0x38] sm:$0xff] %v6211
        %6244 = vst [vmem:[#allocation2 + $0x40] sm:$0xff] %v6212
        %6245 = vst [vmem:[#allocation2 + $0x48] sm:$0xff] %v6213
        %6246 = vst [vmem:[#allocation2 + $0x50] sm:$0xff] %v6214
        %6247 = vst [vmem:[#allocation2 + $0x58] sm:$0xff] %v6215
        %6248 = vst [vmem:[#allocation2 + $0x60] sm:$0xff] %v6216
        %6249 = vst [vmem:[#allocation2 + $0x68] sm:$0xff] %v6217
        %6250 = vst [vmem:[#allocation2 + $0x70] sm:$0xff] %v6218
        %6251 = vst [vmem:[#allocation2 + $0x78] sm:$0xff] %v6219
        %6252 = vst [vmem:[#allocation2 + $0x80] sm:$0xff] %v6220
        %6253 = vst [vmem:[#allocation2 + $0x88] sm:$0xff] %v6221
        %6254 = vst [vmem:[#allocation2 + $0x90] sm:$0xff] %v6222
        %6255 = vst [vmem:[#allocation2 + $0x98] sm:$0xff] %v6223
        %6256 = vst [vmem:[#allocation2 + $0xa0] sm:$0xff] %v6224
        %6257 = vst [vmem:[#allocation2 + $0xa8] sm:$0xff] %v6225
        %6258 = vst [vmem:[#allocation2 + $0xb0] sm:$0xff] %v6226
        %6259 = vst [vmem:[#allocation2 + $0xb8] sm:$0xff] %v6227
        %6260 = vst [vmem:[#allocation2 + $0xc0] sm:$0xff] %v6228
        %6261 = vst [vmem:[#allocation2 + $0xc8] sm:$0xff] %v6229
        %6262 = vst [vmem:[#allocation2 + $0xd0] sm:$0xff] %v6230
        %6263 = vst [vmem:[#allocation2 + $0xd8] sm:$0xff] %v6231
        %6264 = vst [vmem:[#allocation2 + $0xe0] sm:$0xff] %v6232
        %6265 = vst [vmem:[#allocation2 + $0xe8] sm:$0xff] %v6233
        %6266 = vst [vmem:[#allocation2 + $0xf0] sm:$0xff] %v6234
        %6267 = vst [vmem:[#allocation2 + $0xf8] sm:$0xff] %v6235
        %v6268 = vld [vmem:[#allocation2] sm:$0xff]
        %v6269 = vld [vmem:[#allocation2 + $0x8] sm:$0xff]
        %v6270 = vld [vmem:[#allocation2 + $0x10] sm:$0xff]
        %v6271 = vld [vmem:[#allocation2 + $0x18] sm:$0xff]
        %v6272 = vld [vmem:[#allocation2 + $0x20] sm:$0xff]
        %v6273 = vld [vmem:[#allocation2 + $0x28] sm:$0xff]
        %v6274 = vld [vmem:[#allocation2 + $0x30] sm:$0xff]
        %v6275 = vld [vmem:[#allocation2 + $0x38] sm:$0xff]
        %v6276 = vld [vmem:[#allocation2 + $0x40] sm:$0xff]
        %v6277 = vld [vmem:[#allocation2 + $0x48] sm:$0xff]
        %v6278 = vld [vmem:[#allocation2 + $0x50] sm:$0xff]
        %v6279 = vld [vmem:[#allocation2 + $0x58] sm:$0xff]
        %v6280 = vld [vmem:[#allocation2 + $0x60] sm:$0xff]
        %v6281 = vld [vmem:[#allocation2 + $0x68] sm:$0xff]
        %v6282 = vld [vmem:[#allocation2 + $0x70] sm:$0xff]
        %v6283 = vld [vmem:[#allocation2 + $0x78] sm:$0xff]
        %v6284 = vld [vmem:[#allocation2 + $0x80] sm:$0xff]
        %v6285 = vld [vmem:[#allocation2 + $0x88] sm:$0xff]
        %v6286 = vld [vmem:[#allocation2 + $0x90] sm:$0xff]
        %v6287 = vld [vmem:[#allocation2 + $0x98] sm:$0xff]
        %v6288 = vld [vmem:[#allocation2 + $0xa0] sm:$0xff]
        %v6289 = vld [vmem:[#allocation2 + $0xa8] sm:$0xff]
        %v6290 = vld [vmem:[#allocation2 + $0xb0] sm:$0xff]
        %v6291 = vld [vmem:[#allocation2 + $0xb8] sm:$0xff]
        %v6292 = vld [vmem:[#allocation2 + $0xc0] sm:$0xff]
        %v6293 = vld [vmem:[#allocation2 + $0xc8] sm:$0xff]
        %v6294 = vld [vmem:[#allocation2 + $0xd0] sm:$0xff]
        %v6295 = vld [vmem:[#allocation2 + $0xd8] sm:$0xff]
        %v6296 = vld [vmem:[#allocation2 + $0xe0] sm:$0xff]
        %v6297 = vld [vmem:[#allocation2 + $0xe8] sm:$0xff]
        %v6298 = vld [vmem:[#allocation2 + $0xf0] sm:$0xff]
        %v6299 = vld [vmem:[#allocation2 + $0xf8] sm:$0xff]
        %v6300 = vld [vmem:[%s3] sm:$0x1]
        %v6302 = vlaneseq
        %v6303 = vshrl.u32 %v6302, 7
        %v6304 = vsub.s32 0, %v6303
        %v6305 = vrot.slane %v6300, %v6304
        %v6307 = vadd.f32 %v6268, %v6305
        %v6308 = vadd.f32 %v6269, %v6305
        %v6309 = vadd.f32 %v6270, %v6305
        %v6310 = vadd.f32 %v6271, %v6305
        %v6311 = vadd.f32 %v6272, %v6305
        %v6312 = vadd.f32 %v6273, %v6305
        %v6313 = vadd.f32 %v6274, %v6305
        %v6314 = vadd.f32 %v6275, %v6305
        %v6315 = vadd.f32 %v6276, %v6305
        %v6316 = vadd.f32 %v6277, %v6305
        %v6317 = vadd.f32 %v6278, %v6305
        %v6318 = vadd.f32 %v6279, %v6305
        %v6319 = vadd.f32 %v6280, %v6305
        %v6320 = vadd.f32 %v6281, %v6305
        %v6321 = vadd.f32 %v6282, %v6305
        %v6322 = vadd.f32 %v6283, %v6305
        %v6323 = vadd.f32 %v6284, %v6305
        %v6324 = vadd.f32 %v6285, %v6305
        %v6325 = vadd.f32 %v6286, %v6305
        %v6326 = vadd.f32 %v6287, %v6305
        %v6327 = vadd.f32 %v6288, %v6305
        %v6328 = vadd.f32 %v6289, %v6305
        %v6329 = vadd.f32 %v6290, %v6305
        %v6330 = vadd.f32 %v6291, %v6305
        %v6331 = vadd.f32 %v6292, %v6305
        %v6332 = vadd.f32 %v6293, %v6305
        %v6333 = vadd.f32 %v6294, %v6305
        %v6334 = vadd.f32 %v6295, %v6305
        %v6335 = vadd.f32 %v6296, %v6305
        %v6336 = vadd.f32 %v6297, %v6305
        %v6337 = vadd.f32 %v6298, %v6305
        %v6338 = vadd.f32 %v6299, %v6305
        %v6339 = vmax.f32 %v6307, 0.0
        %v6340 = vmax.f32 %v6308, 0.0
        %v6341 = vmax.f32 %v6309, 0.0
        %v6342 = vmax.f32 %v6310, 0.0
        %v6343 = vmax.f32 %v6311, 0.0
        %v6344 = vmax.f32 %v6312, 0.0
        %v6345 = vmax.f32 %v6313, 0.0
        %v6346 = vmax.f32 %v6314, 0.0
        %v6347 = vmax.f32 %v6315, 0.0
        %v6348 = vmax.f32 %v6316, 0.0
        %v6349 = vmax.f32 %v6317, 0.0
        %v6350 = vmax.f32 %v6318, 0.0
        %v6351 = vmax.f32 %v6319, 0.0
        %v6352 = vmax.f32 %v6320, 0.0
        %v6353 = vmax.f32 %v6321, 0.0
        %v6354 = vmax.f32 %v6322, 0.0
        %v6355 = vmax.f32 %v6323, 0.0
        %v6356 = vmax.f32 %v6324, 0.0
        %v6357 = vmax.f32 %v6325, 0.0
        %v6358 = vmax.f32 %v6326, 0.0
        %v6359 = vmax.f32 %v6327, 0.0
        %v6360 = vmax.f32 %v6328, 0.0
        %v6361 = vmax.f32 %v6329, 0.0
        %v6362 = vmax.f32 %v6330, 0.0
        %v6363 = vmax.f32 %v6331, 0.0
        %v6364 = vmax.f32 %v6332, 0.0
        %v6365 = vmax.f32 %v6333, 0.0
        %v6366 = vmax.f32 %v6334, 0.0
        %v6367 = vmax.f32 %v6335, 0.0
        %v6368 = vmax.f32 %v6336, 0.0
        %v6369 = vmax.f32 %v6337, 0.0
        %v6370 = vmax.f32 %v6338, 0.0
        %v6371 = vadd.f32 %v6339, %v6340
        %v6372 = vadd.f32 %v6371, %v6341
        %v6373 = vadd.f32 %v6372, %v6342
        %v6374 = vadd.f32 %v6373, %v6343
        %v6375 = vadd.f32 %v6374, %v6344
        %v6376 = vadd.f32 %v6375, %v6345
        %v6377 = vadd.f32 %v6376, %v6346
        %v6378 = vadd.f32 %v6377, %v6347
        %v6379 = vadd.f32 %v6378, %v6348
        %v6380 = vadd.f32 %v6379, %v6349
        %v6381 = vadd.f32 %v6380, %v6350
        %v6382 = vadd.f32 %v6381, %v6351
        %v6383 = vadd.f32 %v6382, %v6352
        %v6384 = vadd.f32 %v6383, %v6353
        %v6385 = vadd.f32 %v6384, %v6354
        %v6386 = vadd.f32 %v6385, %v6355
        %v6387 = vadd.f32 %v6386, %v6356
        %v6388 = vadd.f32 %v6387, %v6357
        %v6389 = vadd.f32 %v6388, %v6358
        %v6390 = vadd.f32 %v6389, %v6359
        %v6391 = vadd.f32 %v6390, %v6360
        %v6392 = vadd.f32 %v6391, %v6361
        %v6393 = vadd.f32 %v6392, %v6362
        %v6394 = vadd.f32 %v6393, %v6363
        %v6395 = vadd.f32 %v6394, %v6364
        %v6396 = vadd.f32 %v6395, %v6365
        %v6397 = vadd.f32 %v6396, %v6366
        %v6398 = vadd.f32 %v6397, %v6367
        %v6399 = vadd.f32 %v6398, %v6368
        %v6400 = vadd.f32 %v6399, %v6369
        %v6401 = vadd.f32 %v6400, %v6370
        %v6402 = vrot.slane %v6401, 4
        %v6403 = vadd.f32 %v6401, %v6402
        %v6404 = vrot.slane %v6403, 2
        %v6405 = vadd.f32 %v6403, %v6404
        %v6406 = vrot.slane %v6405, 1
        %v6407 = vadd.f32 %v6405, %v6406
        %v6408 = vmul.f32 %v6407, 0.00390625
        %v6409 = vld [vmem:[%s4] sm:$0xff]
        %v6410 = vld [vmem:[%s4 + $0x8] sm:$0xff]
        %v6411 = vld [vmem:[%s4 + $0x10] sm:$0xff]
        %v6412 = vld [vmem:[%s4 + $0x18] sm:$0xff]
        %v6413 = vld [vmem:[%s4 + $0x20] sm:$0xff]
        %v6414 = vld [vmem:[%s4 + $0x28] sm:$0xff]
        %v6415 = vld [vmem:[%s4 + $0x30] sm:$0xff]
        %v6416 = vld [vmem:[%s4 + $0x38] sm:$0xff]
        %v6417 = vld [vmem:[%s4 + $0x40] sm:$0xff]
        %v6418 = vld [vmem:[%s4 + $0x48] sm:$0xff]
        %v6419 = vld [vmem:[%s4 + $0x50] sm:$0xff]
        %v6420 = vld [vmem:[%s4 + $0x58] sm:$0xff]
        %v6421 = vld [vmem:[%s4 + $0x60] sm:$0xff]
        %v6422 = vld [vmem:[%s4 + $0x68] sm:$0xff]
        %v6423 = vld [vmem:[%s4 + $0x70] sm:$0xff]
        %v6424 = vld [vmem:[%s4 + $0x78] sm:$0xff]
        %v6425 = vld [vmem:[%s5] sm:$0x1]
        %6426 = vmatprep.subr.mxu0 0.0
        %6427 = vmatpush1.msra.mxu0 %v6409
        %6428 = vmatprep.subr.mxu0 0.0
        %6429 = vmatpush1.msra.mxu0 %v6410
        %6430 = vmatprep.subr.mxu0 0.0
        %6431 = vmatpush1.msra.mxu0 %v6411
        %6432 = vmatprep.subr.mxu0 0.0
        %6433 = vmatpush1.msra.mxu0 %v6412
        %6434 = vmatprep.subr.mxu0 0.0
        %6435 = vmatpush1.msra.mxu0 %v6413
        %6436 = vmatprep.subr.mxu0 0.0
        %6437 = vmatpush1.msra.mxu0 %v6414
        %6438 = vmatprep.subr.mxu0 0.0
        %6439 = vmatpush1.msra.mxu0 %v6415
        %6440 = vmatprep.subr.mxu0 0.0
        %6441 = vmatpush1.msra.mxu0 %v6416
        %6442 = vmatprep.subr.mxu0 0.0
        %6443 = vmatpush1.msra.mxu0 %v6417
        %6444 = vmatprep.subr.mxu0 0.0
        %6445 = vmatpush1.msra.mxu0 %v6418
        %6446 = vmatprep.subr.mxu0 0.0
        %6447 = vmatpush1.msra.mxu0 %v6419
        %6448 = vmatprep.subr.mxu0 0.0
        %6449 = vmatpush1.msra.mxu0 %v6420
        %6450 = vmatprep.subr.mxu0 0.0
        %6451 = vmatpush1.msra.mxu0 %v6421
        %6452 = vmatprep.subr.mxu0 0.0
        %6453 = vmatpush1.msra.mxu0 %v6422
        %6454 = vmatprep.subr.mxu0 0.0
        %6455 = vmatpush1.msra.mxu0 %v6423
        %6456 = vmatprep.subr.mxu0 0.0
        %6457 = vmatpush1.msra.mxu0 %v6424
        %6458 = vmatprep.subr.mxu0 0.0
        %6459 = vmatpush1.msra.mxu0 0.0
        %6460 = vmatprep.subr.mxu0 0.0
        %6461 = vmatpush1.msra.mxu0 0.0
        %6462 = vmatprep.subr.mxu0 0.0
        %6463 = vmatpush1.msra.mxu0 0.0
        %6464 = vmatprep.subr.mxu0 0.0
        %6465 = vmatpush1.msra.mxu0 0.0
        %6466 = vmatprep.subr.mxu0 0.0
        %6467 = vmatpush1.msra.mxu0 0.0
        %6468 = vmatprep.subr.mxu0 0.0
        %6469 = vmatpush1.msra.mxu0 0.0
        %6470 = vmatprep.subr.mxu0 0.0
        %6471 = vmatpush1.msra.mxu0 0.0
        %6472 = vmatprep.subr.mxu0 0.0
        %6473 = vmatpush1.msra.mxu0 0.0
        %6474 = vmatprep.subr.mxu0 0.0
        %6475 = vmatpush1.msra.mxu0 0.0
        %6476 = vmatprep.subr.mxu0 0.0
        %6477 = vmatpush1.msra.mxu0 0.0
        %6478 = vmatprep.subr.mxu0 0.0
        %6479 = vmatpush1.msra.mxu0 0.0
        %6480 = vmatprep.subr.mxu0 0.0
        %6481 = vmatpush1.msra.mxu0 0.0
        %6482 = vmatprep.subr.mxu0 0.0
        %6483 = vmatpush1.msra.mxu0 0.0
        %6484 = vmatprep.subr.mxu0 0.0
        %6485 = vmatpush1.msra.mxu0 0.0
        %6486 = vmatprep.subr.mxu0 0.0
        %6487 = vmatpush1.msra.mxu0 0.0
        %6488 = vmatprep.subr.mxu0 0.0
        %6489 = vmatpush1.msra.mxu0 0.0
        %6490 = vmatprep.mubr.f32.mxu0 0.0
        %6491 = vmatmul.mubr.f32.gmra.mrb[0].mxu0 %v6408
        %v6492 = vpop.f32.mrb[0].mxu0
        %v6493 = vadd.f32 %v6425, %v6492
        %v6494 = vpop.f32.mrb[0].mxu0
        %6495 = vdwg.mxu0
        %6496 = vst [vmem:[%s243] sm:$0x1] %v6493
        %s6497 = sand.u32 %s159, 1
        %s6498 = scalar_lea.sflag [#allocation4], %s6497
        %s6499 = sand.u32 %s159, 1
        %s6500 = scalar_lea.vmem [#allocation3], %s6499
        // Predicated region
        $region45: #{tpu_custom_call.1} parent=43 // pred_check
          %p6501 = pneg %p169
        $region46: #{tpu_custom_call.1} parent=43 // pred_check_branch
          %6503 = sbr.rel (%p6501) target = $region48
        $region47: #{tpu_custom_call.1} parent=43 // pred_region
          %s6505 = ssub.s32 16, 16
          %6506 = vsyncadd %s6498, %s6505
          %s6507 = smul.addr %s20, 16
          %s6508 = scalar_lea.hbm %s6, %s6507
          %s6510 = sshll.u32 %s6500, 4
          %s6511 = int_to_ptr.vmem [resolvable:$true] %s6510
          %6513 = dma.vmem_to_hbm [thread:$0]  %s6511, 16, %s6508, %s6498
        $region48: #{tpu_custom_call.1} parent=43 // pred_fallthru
          _
      $region44: #{tpu_custom_call.1} parent=5 // pred_fallthru
        _
      %p6514 = scmp.le.s32.totalorder 2, %s15
      // Predicated region
      $region49: #{tpu_custom_call.1} parent=5 // pred_check
        %p6515 = pneg %p6514
      $region50: #{tpu_custom_call.1} parent=5 // pred_check_branch
        %6517 = sbr.rel (%p6515) target = $region52
      $region51: #{tpu_custom_call.1} parent=5 // pred_region
        %s6518 = ssub.s32 %s15, 2
        // Predicated region
        $region53: #{tpu_custom_call.1} parent=51 // pred_check
          %p6519 = pneg %p175
        $region54: #{tpu_custom_call.1} parent=51 // pred_check_branch
          %6521 = sbr.rel (%p6519) target = $region56
        $region55: #{tpu_custom_call.1} parent=51 // pred_region
          %s6522 = sand.u32 %s160, 1
          %s6523 = scalar_lea.sflag [#allocation4], %s6522
          %s6524 = sand.u32 %s160, 1
          %s6525 = scalar_lea.vmem [#allocation3], %s6524
          %6526 = dma.done %s6523, 16
        $region56: #{tpu_custom_call.1} parent=51 // pred_fallthru
          _
      $region52: #{tpu_custom_call.1} parent=5 // pred_fallthru
        _
    $region6: #{tpu_custom_call.1} parent=1 // loop_footer
      %s19 = sadd.s32 1, %s15
    $region7: #{tpu_custom_call.1} parent=1 // loop_footer_branch
      %14 = sbr.rel target = $region3
    $region8: #{tpu_custom_call.1} parent=1 // loop_exit
      _
    %6527 = vsyncpa [#allocation4], 1
    %s6528 = scalar_lea.sflag [#allocation4], 1
    %6529 = vsyncpa %s6528, 1

</llo_original>
